<compile_context>
chip_gen: v7x
topology: tpu7x:2x2x1
jax: 0.10.0
libtpu: 0.0.40
codegen_flags: <defaults>
</compile_context>

<pallas_src>
import functools

import jax
import jax.numpy as jnp
from jax.experimental import pallas as pl
from jax.experimental.pallas import tpu as pltpu


def _geom(H, W):
    """Flat padded-image geometry shared by wrapper and kernel."""
    Wp, Hp = W + 2, H + 2
    L_img = Hp * Wp                # padded image, flattened onto lanes
    margin = Wp + 1                # >= largest |tap offset| = Wp + 1
    L_pad = L_img + 2 * margin     # scratch length incl. slicing margins
    return Wp, Hp, L_img, margin, L_pad


# ------------------------------ fused kernel -------------------------------

def _att_spatial_kernel(alpha_ref, x_ref, wmain_ref, bmain_ref, wsp_ref,
                        mask_ref, o_ref, apad_ref, *, H, W, n_blocks):
    """Full att_spatial network for one batch element (channel-major layout).

      alpha_ref: (n_blocks + 2,)        SMEM  PReLU slopes [a0, a_1..a_nb, a_sp]
      x_ref    : (1, Cmid, L_pad)       input, padded-flat spatial + margins
      wmain_ref: (1+2*nb, Cmid, 9*Cmid) im2col weights (layer0 + resblock convs)
      bmain_ref: (1+2*nb, Cmid, 1)      conv biases (row 0 = 0 for bias=False)
      wsp_ref  : (Cout, 9*Cmid)         spatial ConvBlock weights
      mask_ref : (1, L_img)             1.0 at interior pixels, 0.0 at pad ring
      o_ref    : (1, Cout, L_img)       sigmoid output in padded-flat coords
      apad_ref : (Cmid, L_pad)          VMEM scratch holding current activation
    """
    Wp, _, L_img, margin, _ = _geom(H, W)
    offs = [(dh - 1) * Wp + (dw - 1) for dh in range(3) for dw in range(3)]

    mask = mask_ref[...]                                   # (1, L_img)

    def conv3x3(w2d):
        # im2col along K: 9 lane-offset slices of the flat zero-margined
        # scratch stacked on sublanes -> ONE MXU matmul (K=9*C, N=L_img).
        col = jnp.concatenate(
            [apad_ref[:, margin + off: margin + off + L_img] for off in offs],
            axis=0)
        return jnp.dot(w2d, col, preferred_element_type=jnp.float32)

    def prelu(v, a):
        return jnp.where(v > 0, v, a * v)

    def put(h):                                            # interior-only write
        apad_ref[:, margin:margin + L_img] = h

    # Full aligned store: the input block already contains its zero margins,
    # so this (re)initialises the halo every batch element for free.
    apad_ref[...] = x_ref[0]

    # block[0]: ConvBlock Cin->Cmid, bias=False, PReLU(a0).
    h = prelu(conv3x3(wmain_ref[0]) + bmain_ref[0], alpha_ref[0]) * mask
    put(h)

    # block[1..6]: ResnetBlocks: conv1 -> PReLU -> conv2 -> PReLU (shared
    # slope), * scale(=1) + residual.  Mask keeps the pad ring exactly zero
    # so the next conv's halo reads stay correct.
    for i in range(n_blocks):
        a = alpha_ref[1 + i]
        t = prelu(conv3x3(wmain_ref[1 + 2 * i]) + bmain_ref[1 + 2 * i], a) * mask
        put(t)
        u = prelu(conv3x3(wmain_ref[2 + 2 * i]) + bmain_ref[2 + 2 * i], a) * mask
        h = u + h                                          # scale = 1
        put(h)

    # spatial ConvBlock Cmid->Cout, bias=False, PReLU(a_sp), then sigmoid.
    s = prelu(conv3x3(wsp_ref[...]), alpha_ref[1 + n_blocks])
    o_ref[0] = jax.nn.sigmoid(s).astype(o_ref.dtype)


# ------------------------------ wrapper -------------------------------------

def pack_params(params):
    """HWIO conv weights + scalars -> matmul-ready lane-dense tables."""
    cin, cmid = params["w0"].shape[2], params["w0"].shape[3]

    def to2d(w_hwio):        # (3,3,Ci,Co) -> (Co, 9*Ci); K index = tap*Ci + ci
        ci, co = w_hwio.shape[2], w_hwio.shape[3]
        return jnp.asarray(w_hwio, jnp.float32).reshape(9 * ci, co).T

    # Pad layer-0 input channels up to Cmid (zero weights / zero channels) so
    # every main layer shares one (Cmid, 9*Cmid) table and 8-aligned im2col.
    w0p = jnp.pad(jnp.asarray(params["w0"], jnp.float32),
                  ((0, 0), (0, 0), (0, cmid - cin), (0, 0)))
    wmain = [to2d(w0p)]
    bmain = [jnp.zeros((cmid,), jnp.float32)]              # bias=False layer
    for blk in params["blocks"]:
        wmain += [to2d(blk["w1"]), to2d(blk["w2"])]
        bmain += [jnp.asarray(blk["b1"], jnp.float32),
                  jnp.asarray(blk["b2"], jnp.float32)]
    alphas = jnp.stack([params["a0"]]
                       + [blk["a"] for blk in params["blocks"]]
                       + [params["a_sp"]]).astype(jnp.float32)
    return {"wmain": jnp.stack(wmain),                     # (13, Cmid, 9*Cmid)
            "bmain": jnp.stack(bmain)[:, :, None],         # (13, Cmid, 1)
            "wsp": to2d(params["w_sp"]),                   # (Cout, 9*Cmid)
            "alphas": alphas}                              # (n_blocks + 2,)


@jax.jit
def att_spatial_forward(x_nchw, packed):
    """x_nchw: (N, Cin, H, W) float32.  Returns (N, Cout, H, W) in (0, 1)."""
    N, Cin, H, W = x_nchw.shape
    n_layers, Cmid, _ = packed["wmain"].shape
    Cout = packed["wsp"].shape[0]
    n_blocks = (n_layers - 1) // 2
    Wp, Hp, L_img, margin, L_pad = _geom(H, W)

    # One-time layout glue (NCHW is already channel-major, so no transpose):
    # zero-pad channels to Cmid, zero-pad the 1-pixel border, flatten the
    # padded spatial extent onto lanes and add the slicing margins.
    xp = jnp.pad(x_nchw.astype(jnp.float32),
                 ((0, 0), (0, Cmid - Cin), (1, 1), (1, 1)))
    xp = xp.reshape(N, Cmid, L_img)
    xp = jnp.pad(xp, ((0, 0), (0, 0), (margin, margin)))   # (N, Cmid, L_pad)

    # 1.0 at interior pixels, 0.0 at the zero-pad ring (flat coords).
    rr = jnp.arange(Hp)[:, None]
    cc = jnp.arange(Wp)[None, :]
    mask = ((rr >= 1) & (rr <= H) & (cc >= 1) & (cc <= W))
    mask = mask.astype(jnp.float32).reshape(1, L_img)

    kernel = functools.partial(_att_spatial_kernel, H=H, W=W,
                               n_blocks=n_blocks)

    y = pl.pallas_call(
        kernel,
        out_shape=jax.ShapeDtypeStruct((N, Cout, L_img), jnp.float32),
        grid=(N,),
        in_specs=[
            pl.BlockSpec(memory_space=pltpu.MemorySpace.SMEM),         # alphas
            pl.BlockSpec((1, Cmid, L_pad), lambda n: (n, 0, 0)),       # x
            pl.BlockSpec((n_layers, Cmid, 9 * Cmid),
                         lambda n: (0, 0, 0)),                         # wmain
            pl.BlockSpec((n_layers, Cmid, 1), lambda n: (0, 0, 0)),    # bmain
            pl.BlockSpec((Cout, 9 * Cmid), lambda n: (0, 0)),          # wsp
            pl.BlockSpec((1, L_img), lambda n: (0, 0)),                # mask
        ],
        out_specs=pl.BlockSpec((1, Cout, L_img), lambda n: (n, 0, 0)),
        scratch_shapes=[pltpu.VMEM((Cmid, L_pad), jnp.float32)],
        compiler_params=pltpu.CompilerParams(
            dimension_semantics=("parallel",)),
    )(packed["alphas"], xp, packed["wmain"], packed["bmain"], packed["wsp"],
      mask)

    # Drop the zero-pad ring: padded-flat -> (N, Cout, H, W).
    y = y.reshape(N, Cout, Hp, Wp)[:, :, 1:H + 1, 1:W + 1]
    return y


# ------------------------------ parameters ----------------------------------

def init_params(key, cin, cmid, cout, n_blocks=6):
    keys = iter(jax.random.split(key, 32))

    def conv_w(shape, k):                                     # HWIO
        fan_in = shape[0] * shape[1] * shape[2]
        return (jax.random.normal(k, shape, jnp.float32)
                / jnp.sqrt(jnp.float32(fan_in)))

    params = {
        "w0": conv_w((3, 3, cin, cmid), next(keys)),
        "a0": jnp.float32(0.5),                               # PReLU(init=0.5)
        "blocks": [],
        "a_sp": jnp.float32(0.5),
    }
    for i in range(n_blocks):
        params["blocks"].append({
            "w1": conv_w((3, 3, cmid, cmid), next(keys)),
            "b1": 0.05 * jax.random.normal(next(keys), (cmid,), jnp.float32),
            "w2": conv_w((3, 3, cmid, cmid), next(keys)),
            "b2": 0.05 * jax.random.normal(next(keys), (cmid,), jnp.float32),
            # distinct slopes per block so an alpha-indexing bug is caught
            "a": jnp.float32(0.35 + 0.05 * i),
        })
    params["w_sp"] = conv_w((3, 3, cmid, cout), next(keys))
    return params


# ------------------------------ pure-JAX reference --------------------------

def _conv_ref(x, w, b=None):
    y = jax.lax.conv_general_dilated(
        x, w, window_strides=(1, 1), padding="SAME",
        dimension_numbers=("NHWC", "HWIO", "NHWC"))
    return y if b is None else y + b


def _prelu_ref(x, a):
    return jnp.where(x > 0, x, a * x)


def att_spatial_ref(x_nchw, params):
    x = jnp.transpose(x_nchw, (0, 2, 3, 1))
    h = _prelu_ref(_conv_ref(x, params["w0"]), params["a0"])
    for blk in params["blocks"]:
        t = _prelu_ref(_conv_ref(h, blk["w1"], blk["b1"]), blk["a"])
        t = _prelu_ref(_conv_ref(t, blk["w2"], blk["b2"]), blk["a"])
        h = t + h                                             # scale = 1
    s = _prelu_ref(_conv_ref(h, params["w_sp"]), params["a_sp"])
    y = jax.nn.sigmoid(s)
    return jnp.transpose(y, (0, 3, 1, 2))


# ------------------------------ main -----------------------------------------

if __name__ == "__main__":
    key = jax.random.PRNGKey(0)
    k_x, k_p = jax.random.split(key)

    N, Cin, Cmid, Cout, H, W = 2, 4, 8, 4, 16, 16
    x = jax.random.normal(k_x, (N, Cin, H, W), jnp.float32)
    params = init_params(k_p, Cin, Cmid, Cout)
    packed = pack_params(params)

    out = jax.block_until_ready(att_spatial_forward(x, packed))
    assert out.shape == (N, Cout, H, W)
    assert bool(jnp.all(jnp.isfinite(out)))
    assert bool(jnp.all((out >= 0.0) & (out <= 1.0)))         # sigmoid range

    ref = jax.block_until_ready(att_spatial_ref(x, params))
    err = float(jnp.max(jnp.abs(out - ref)))
    assert err < 1e-4, f"mismatch vs JAX reference: {err}"

    print("KERNEL_OK")
</pallas_src>

<mosaic_0001>
module attributes {stable_mosaic.version = 11 : i64} {
  func.func @_att_spatial_kernel(%arg0: i32, %arg1: memref<8xf32, #tpu.memory_space<smem>>, %arg2: memref<1x8x362xf32, #tpu.memory_space<vmem>>, %arg3: memref<13x8x72xf32, #tpu.memory_space<vmem>>, %arg4: memref<13x8x1xf32, #tpu.memory_space<vmem>>, %arg5: memref<4x72xf32, #tpu.memory_space<vmem>>, %arg6: memref<1x324xf32, #tpu.memory_space<vmem>>, %arg7: memref<1x4x324xf32, #tpu.memory_space<vmem>>, %arg8: memref<8x362xf32, #tpu.memory_space<vmem>>) attributes {dimension_semantics = [#tpu.dimension_semantics<parallel>], iteration_bounds = array<i64: 2>, scalar_prefetch = 0 : i64, scratch_operands = 1 : i64, tpu.core_type = #tpu.core_type<tc>, window_params = [{transform_indices = @transform_0, window_bounds = array<i64: 8>}, {transform_indices = @transform_1, window_bounds = array<i64: 1, 8, 362>}, {pipeline_mode = #tpu.pipeline_mode<synchronous>, transform_indices = @transform_2, window_bounds = array<i64: 13, 8, 72>}, {pipeline_mode = #tpu.pipeline_mode<synchronous>, transform_indices = @transform_3, window_bounds = array<i64: 13, 8, 1>}, {pipeline_mode = #tpu.pipeline_mode<synchronous>, transform_indices = @transform_4, window_bounds = array<i64: 4, 72>}, {pipeline_mode = #tpu.pipeline_mode<synchronous>, transform_indices = @transform_5, window_bounds = array<i64: 1, 324>}, {transform_indices = @transform_6, window_bounds = array<i64: 1, 4, 324>}]} {
    %c0 = arith.constant 0 : index
    %c0_0 = arith.constant 0 : index
    %0 = vector.load %arg6[%c0, %c0_0] : memref<1x324xf32, #tpu.memory_space<vmem>>, vector<1x324xf32>
    %c0_1 = arith.constant 0 : index
    %c0_2 = arith.constant 0 : index
    %c0_3 = arith.constant 0 : index
    %1 = vector.load %arg2[%c0_1, %c0_2, %c0_3] : memref<1x8x362xf32, #tpu.memory_space<vmem>>, vector<1x8x362xf32>
    %2 = vector.shape_cast %1 : vector<1x8x362xf32> to vector<8x362xf32>
    %c0_4 = arith.constant 0 : index
    %c0_5 = arith.constant 0 : index
    %3 = vector.load %arg8[%c0_4, %c0_5] : memref<8x362xf32, #tpu.memory_space<vmem>>, vector<8x362xf32>
    tpu.vector_store %arg8[%c0_4, %c0_5], %2 {strides = array<i32>} : memref<8x362xf32, #tpu.memory_space<vmem>>, vector<8x362xf32>,
    %c0_6 = arith.constant 0 : index
    %c0_7 = arith.constant 0 : index
    %c0_8 = arith.constant 0 : index
    %4 = vector.load %arg3[%c0_6, %c0_7, %c0_8] : memref<13x8x72xf32, #tpu.memory_space<vmem>>, vector<1x8x72xf32>
    %5 = vector.shape_cast %4 : vector<1x8x72xf32> to vector<8x72xf32>
    %c0_9 = arith.constant 0 : index
    %c0_10 = arith.constant 0 : index
    %6 = vector.load %arg8[%c0_9, %c0_10] : memref<8x362xf32, #tpu.memory_space<vmem>>, vector<8x324xf32>
    %c0_11 = arith.constant 0 : index
    %c1 = arith.constant 1 : index
    %7 = vector.load %arg8[%c0_11, %c1] : memref<8x362xf32, #tpu.memory_space<vmem>>, vector<8x324xf32>
    %c0_12 = arith.constant 0 : index
    %c2 = arith.constant 2 : index
    %8 = vector.load %arg8[%c0_12, %c2] : memref<8x362xf32, #tpu.memory_space<vmem>>, vector<8x324xf32>
    %c0_13 = arith.constant 0 : index
    %c18 = arith.constant 18 : index
    %9 = vector.load %arg8[%c0_13, %c18] : memref<8x362xf32, #tpu.memory_space<vmem>>, vector<8x324xf32>
    %c0_14 = arith.constant 0 : index
    %c19 = arith.constant 19 : index
    %10 = vector.load %arg8[%c0_14, %c19] : memref<8x362xf32, #tpu.memory_space<vmem>>, vector<8x324xf32>
    %c0_15 = arith.constant 0 : index
    %c20 = arith.constant 20 : index
    %11 = vector.load %arg8[%c0_15, %c20] : memref<8x362xf32, #tpu.memory_space<vmem>>, vector<8x324xf32>
    %c0_16 = arith.constant 0 : index
    %c36 = arith.constant 36 : index
    %12 = vector.load %arg8[%c0_16, %c36] : memref<8x362xf32, #tpu.memory_space<vmem>>, vector<8x324xf32>
    %c0_17 = arith.constant 0 : index
    %c37 = arith.constant 37 : index
    %13 = vector.load %arg8[%c0_17, %c37] : memref<8x362xf32, #tpu.memory_space<vmem>>, vector<8x324xf32>
    %c0_18 = arith.constant 0 : index
    %c38 = arith.constant 38 : index
    %14 = vector.load %arg8[%c0_18, %c38] : memref<8x362xf32, #tpu.memory_space<vmem>>, vector<8x324xf32>
    %15 = tpu.concatenate %6, %7, %8, %9, %10, %11, %12, %13, %14 in 0 : vector<8x324xf32>, vector<8x324xf32>, vector<8x324xf32>, vector<8x324xf32>, vector<8x324xf32>, vector<8x324xf32>, vector<8x324xf32>, vector<8x324xf32>, vector<8x324xf32> -> vector<72x324xf32>
    %cst = arith.constant dense<0.000000e+00> : vector<8x324xf32>
    %16 = tpu.matmul %5, %15, %cst {dimension_numbers = #tpu.dot_dimension_numbers<[1], [0], [0], [1], [0, 0, 1, 1], [], []>} : vector<8x72xf32>, vector<72x324xf32>, vector<8x324xf32> -> vector<8x324xf32>
    %c0_19 = arith.constant 0 : index
    %c0_20 = arith.constant 0 : index
    %c0_21 = arith.constant 0 : index
    %17 = vector.load %arg4[%c0_19, %c0_20, %c0_21] : memref<13x8x1xf32, #tpu.memory_space<vmem>>, vector<1x8x1xf32>
    %18 = vector.shape_cast %17 : vector<1x8x1xf32> to vector<8x1xf32>
    %19 = vector.broadcast %18 : vector<8x1xf32> to vector<8x324xf32>
    %20 = arith.addf %16, %19 : vector<8x324xf32>
    %c0_22 = arith.constant 0 : index
    %21 = memref.load %arg1[%c0_22] : memref<8xf32, #tpu.memory_space<smem>>
    %cst_23 = arith.constant 0.000000e+00 : f32
    %22 = vector.broadcast %cst_23 : f32 to vector<8x324xf32>
    %23 = arith.cmpf ogt, %20, %22 : vector<8x324xf32>
    %24 = vector.broadcast %21 : f32 to vector<8x324xf32>
    %25 = arith.mulf %24, %20 : vector<8x324xf32>
    %26 = arith.select %23, %20, %25 : vector<8x324xi1>, vector<8x324xf32>
    %27 = vector.broadcast %0 : vector<1x324xf32> to vector<8x324xf32>
    %28 = arith.mulf %26, %27 : vector<8x324xf32>
    %c0_24 = arith.constant 0 : index
    %c19_25 = arith.constant 19 : index
    %29 = vector.load %arg8[%c0_24, %c19_25] : memref<8x362xf32, #tpu.memory_space<vmem>>, vector<8x324xf32>
    tpu.vector_store %arg8[%c0_24, %c19_25], %28 {strides = array<i32>} : memref<8x362xf32, #tpu.memory_space<vmem>>, vector<8x324xf32>,
    %c1_26 = arith.constant 1 : index
    %30 = memref.load %arg1[%c1_26] : memref<8xf32, #tpu.memory_space<smem>>
    %c1_27 = arith.constant 1 : index
    %c0_28 = arith.constant 0 : index
    %c0_29 = arith.constant 0 : index
    %31 = vector.load %arg3[%c1_27, %c0_28, %c0_29] : memref<13x8x72xf32, #tpu.memory_space<vmem>>, vector<1x8x72xf32>
    %32 = vector.shape_cast %31 : vector<1x8x72xf32> to vector<8x72xf32>
    %c0_30 = arith.constant 0 : index
    %c0_31 = arith.constant 0 : index
    %33 = vector.load %arg8[%c0_30, %c0_31] : memref<8x362xf32, #tpu.memory_space<vmem>>, vector<8x324xf32>
    %c0_32 = arith.constant 0 : index
    %c1_33 = arith.constant 1 : index
    %34 = vector.load %arg8[%c0_32, %c1_33] : memref<8x362xf32, #tpu.memory_space<vmem>>, vector<8x324xf32>
    %c0_34 = arith.constant 0 : index
    %c2_35 = arith.constant 2 : index
    %35 = vector.load %arg8[%c0_34, %c2_35] : memref<8x362xf32, #tpu.memory_space<vmem>>, vector<8x324xf32>
    %c0_36 = arith.constant 0 : index
    %c18_37 = arith.constant 18 : index
    %36 = vector.load %arg8[%c0_36, %c18_37] : memref<8x362xf32, #tpu.memory_space<vmem>>, vector<8x324xf32>
    %c0_38 = arith.constant 0 : index
    %c19_39 = arith.constant 19 : index
    %37 = vector.load %arg8[%c0_38, %c19_39] : memref<8x362xf32, #tpu.memory_space<vmem>>, vector<8x324xf32>
    %c0_40 = arith.constant 0 : index
    %c20_41 = arith.constant 20 : index
    %38 = vector.load %arg8[%c0_40, %c20_41] : memref<8x362xf32, #tpu.memory_space<vmem>>, vector<8x324xf32>
    %c0_42 = arith.constant 0 : index
    %c36_43 = arith.constant 36 : index
    %39 = vector.load %arg8[%c0_42, %c36_43] : memref<8x362xf32, #tpu.memory_space<vmem>>, vector<8x324xf32>
    %c0_44 = arith.constant 0 : index
    %c37_45 = arith.constant 37 : index
    %40 = vector.load %arg8[%c0_44, %c37_45] : memref<8x362xf32, #tpu.memory_space<vmem>>, vector<8x324xf32>
    %c0_46 = arith.constant 0 : index
    %c38_47 = arith.constant 38 : index
    %41 = vector.load %arg8[%c0_46, %c38_47] : memref<8x362xf32, #tpu.memory_space<vmem>>, vector<8x324xf32>
    %42 = tpu.concatenate %33, %34, %35, %36, %37, %38, %39, %40, %41 in 0 : vector<8x324xf32>, vector<8x324xf32>, vector<8x324xf32>, vector<8x324xf32>, vector<8x324xf32>, vector<8x324xf32>, vector<8x324xf32>, vector<8x324xf32>, vector<8x324xf32> -> vector<72x324xf32>
    %cst_48 = arith.constant dense<0.000000e+00> : vector<8x324xf32>
    %43 = tpu.matmul %32, %42, %cst_48 {dimension_numbers = #tpu.dot_dimension_numbers<[1], [0], [0], [1], [0, 0, 1, 1], [], []>} : vector<8x72xf32>, vector<72x324xf32>, vector<8x324xf32> -> vector<8x324xf32>
    %c1_49 = arith.constant 1 : index
    %c0_50 = arith.constant 0 : index
    %c0_51 = arith.constant 0 : index
    %44 = vector.load %arg4[%c1_49, %c0_50, %c0_51] : memref<13x8x1xf32, #tpu.memory_space<vmem>>, vector<1x8x1xf32>
    %45 = vector.shape_cast %44 : vector<1x8x1xf32> to vector<8x1xf32>
    %46 = vector.broadcast %45 : vector<8x1xf32> to vector<8x324xf32>
    %47 = arith.addf %43, %46 : vector<8x324xf32>
    %cst_52 = arith.constant 0.000000e+00 : f32
    %48 = vector.broadcast %cst_52 : f32 to vector<8x324xf32>
    %49 = arith.cmpf ogt, %47, %48 : vector<8x324xf32>
    %50 = vector.broadcast %30 : f32 to vector<8x324xf32>
    %51 = arith.mulf %50, %47 : vector<8x324xf32>
    %52 = arith.select %49, %47, %51 : vector<8x324xi1>, vector<8x324xf32>
    %53 = vector.broadcast %0 : vector<1x324xf32> to vector<8x324xf32>
    %54 = arith.mulf %52, %53 : vector<8x324xf32>
    %c0_53 = arith.constant 0 : index
    %c19_54 = arith.constant 19 : index
    %55 = vector.load %arg8[%c0_53, %c19_54] : memref<8x362xf32, #tpu.memory_space<vmem>>, vector<8x324xf32>
    tpu.vector_store %arg8[%c0_53, %c19_54], %54 {strides = array<i32>} : memref<8x362xf32, #tpu.memory_space<vmem>>, vector<8x324xf32>,
    %c2_55 = arith.constant 2 : index
    %c0_56 = arith.constant 0 : index
    %c0_57 = arith.constant 0 : index
    %56 = vector.load %arg3[%c2_55, %c0_56, %c0_57] : memref<13x8x72xf32, #tpu.memory_space<vmem>>, vector<1x8x72xf32>
    %57 = vector.shape_cast %56 : vector<1x8x72xf32> to vector<8x72xf32>
    %c0_58 = arith.constant 0 : index
    %c0_59 = arith.constant 0 : index
    %58 = vector.load %arg8[%c0_58, %c0_59] : memref<8x362xf32, #tpu.memory_space<vmem>>, vector<8x324xf32>
    %c0_60 = arith.constant 0 : index
    %c1_61 = arith.constant 1 : index
    %59 = vector.load %arg8[%c0_60, %c1_61] : memref<8x362xf32, #tpu.memory_space<vmem>>, vector<8x324xf32>
    %c0_62 = arith.constant 0 : index
    %c2_63 = arith.constant 2 : index
    %60 = vector.load %arg8[%c0_62, %c2_63] : memref<8x362xf32, #tpu.memory_space<vmem>>, vector<8x324xf32>
    %c0_64 = arith.constant 0 : index
    %c18_65 = arith.constant 18 : index
    %61 = vector.load %arg8[%c0_64, %c18_65] : memref<8x362xf32, #tpu.memory_space<vmem>>, vector<8x324xf32>
    %c0_66 = arith.constant 0 : index
    %c19_67 = arith.constant 19 : index
    %62 = vector.load %arg8[%c0_66, %c19_67] : memref<8x362xf32, #tpu.memory_space<vmem>>, vector<8x324xf32>
    %c0_68 = arith.constant 0 : index
    %c20_69 = arith.constant 20 : index
    %63 = vector.load %arg8[%c0_68, %c20_69] : memref<8x362xf32, #tpu.memory_space<vmem>>, vector<8x324xf32>
    %c0_70 = arith.constant 0 : index
    %c36_71 = arith.constant 36 : index
    %64 = vector.load %arg8[%c0_70, %c36_71] : memref<8x362xf32, #tpu.memory_space<vmem>>, vector<8x324xf32>
    %c0_72 = arith.constant 0 : index
    %c37_73 = arith.constant 37 : index
    %65 = vector.load %arg8[%c0_72, %c37_73] : memref<8x362xf32, #tpu.memory_space<vmem>>, vector<8x324xf32>
    %c0_74 = arith.constant 0 : index
    %c38_75 = arith.constant 38 : index
    %66 = vector.load %arg8[%c0_74, %c38_75] : memref<8x362xf32, #tpu.memory_space<vmem>>, vector<8x324xf32>
    %67 = tpu.concatenate %58, %59, %60, %61, %62, %63, %64, %65, %66 in 0 : vector<8x324xf32>, vector<8x324xf32>, vector<8x324xf32>, vector<8x324xf32>, vector<8x324xf32>, vector<8x324xf32>, vector<8x324xf32>, vector<8x324xf32>, vector<8x324xf32> -> vector<72x324xf32>
    %cst_76 = arith.constant dense<0.000000e+00> : vector<8x324xf32>
    %68 = tpu.matmul %57, %67, %cst_76 {dimension_numbers = #tpu.dot_dimension_numbers<[1], [0], [0], [1], [0, 0, 1, 1], [], []>} : vector<8x72xf32>, vector<72x324xf32>, vector<8x324xf32> -> vector<8x324xf32>
    %c2_77 = arith.constant 2 : index
    %c0_78 = arith.constant 0 : index
    %c0_79 = arith.constant 0 : index
    %69 = vector.load %arg4[%c2_77, %c0_78, %c0_79] : memref<13x8x1xf32, #tpu.memory_space<vmem>>, vector<1x8x1xf32>
    %70 = vector.shape_cast %69 : vector<1x8x1xf32> to vector<8x1xf32>
    %71 = vector.broadcast %70 : vector<8x1xf32> to vector<8x324xf32>
    %72 = arith.addf %68, %71 : vector<8x324xf32>
    %cst_80 = arith.constant 0.000000e+00 : f32
    %73 = vector.broadcast %cst_80 : f32 to vector<8x324xf32>
    %74 = arith.cmpf ogt, %72, %73 : vector<8x324xf32>
    %75 = vector.broadcast %30 : f32 to vector<8x324xf32>
    %76 = arith.mulf %75, %72 : vector<8x324xf32>
    %77 = arith.select %74, %72, %76 : vector<8x324xi1>, vector<8x324xf32>
    %78 = vector.broadcast %0 : vector<1x324xf32> to vector<8x324xf32>
    %79 = arith.mulf %77, %78 : vector<8x324xf32>
    %80 = arith.addf %79, %28 : vector<8x324xf32>
    %c0_81 = arith.constant 0 : index
    %c19_82 = arith.constant 19 : index
    %81 = vector.load %arg8[%c0_81, %c19_82] : memref<8x362xf32, #tpu.memory_space<vmem>>, vector<8x324xf32>
    tpu.vector_store %arg8[%c0_81, %c19_82], %80 {strides = array<i32>} : memref<8x362xf32, #tpu.memory_space<vmem>>, vector<8x324xf32>,
    %c2_83 = arith.constant 2 : index
    %82 = memref.load %arg1[%c2_83] : memref<8xf32, #tpu.memory_space<smem>>
    %c3 = arith.constant 3 : index
    %c0_84 = arith.constant 0 : index
    %c0_85 = arith.constant 0 : index
    %83 = vector.load %arg3[%c3, %c0_84, %c0_85] : memref<13x8x72xf32, #tpu.memory_space<vmem>>, vector<1x8x72xf32>
    %84 = vector.shape_cast %83 : vector<1x8x72xf32> to vector<8x72xf32>
    %c0_86 = arith.constant 0 : index
    %c0_87 = arith.constant 0 : index
    %85 = vector.load %arg8[%c0_86, %c0_87] : memref<8x362xf32, #tpu.memory_space<vmem>>, vector<8x324xf32>
    %c0_88 = arith.constant 0 : index
    %c1_89 = arith.constant 1 : index
    %86 = vector.load %arg8[%c0_88, %c1_89] : memref<8x362xf32, #tpu.memory_space<vmem>>, vector<8x324xf32>
    %c0_90 = arith.constant 0 : index
    %c2_91 = arith.constant 2 : index
    %87 = vector.load %arg8[%c0_90, %c2_91] : memref<8x362xf32, #tpu.memory_space<vmem>>, vector<8x324xf32>
    %c0_92 = arith.constant 0 : index
    %c18_93 = arith.constant 18 : index
    %88 = vector.load %arg8[%c0_92, %c18_93] : memref<8x362xf32, #tpu.memory_space<vmem>>, vector<8x324xf32>
    %c0_94 = arith.constant 0 : index
    %c19_95 = arith.constant 19 : index
    %89 = vector.load %arg8[%c0_94, %c19_95] : memref<8x362xf32, #tpu.memory_space<vmem>>, vector<8x324xf32>
    %c0_96 = arith.constant 0 : index
    %c20_97 = arith.constant 20 : index
    %90 = vector.load %arg8[%c0_96, %c20_97] : memref<8x362xf32, #tpu.memory_space<vmem>>, vector<8x324xf32>
    %c0_98 = arith.constant 0 : index
    %c36_99 = arith.constant 36 : index
    %91 = vector.load %arg8[%c0_98, %c36_99] : memref<8x362xf32, #tpu.memory_space<vmem>>, vector<8x324xf32>
    %c0_100 = arith.constant 0 : index
    %c37_101 = arith.constant 37 : index
    %92 = vector.load %arg8[%c0_100, %c37_101] : memref<8x362xf32, #tpu.memory_space<vmem>>, vector<8x324xf32>
    %c0_102 = arith.constant 0 : index
    %c38_103 = arith.constant 38 : index
    %93 = vector.load %arg8[%c0_102, %c38_103] : memref<8x362xf32, #tpu.memory_space<vmem>>, vector<8x324xf32>
    %94 = tpu.concatenate %85, %86, %87, %88, %89, %90, %91, %92, %93 in 0 : vector<8x324xf32>, vector<8x324xf32>, vector<8x324xf32>, vector<8x324xf32>, vector<8x324xf32>, vector<8x324xf32>, vector<8x324xf32>, vector<8x324xf32>, vector<8x324xf32> -> vector<72x324xf32>
    %cst_104 = arith.constant dense<0.000000e+00> : vector<8x324xf32>
    %95 = tpu.matmul %84, %94, %cst_104 {dimension_numbers = #tpu.dot_dimension_numbers<[1], [0], [0], [1], [0, 0, 1, 1], [], []>} : vector<8x72xf32>, vector<72x324xf32>, vector<8x324xf32> -> vector<8x324xf32>
    %c3_105 = arith.constant 3 : index
    %c0_106 = arith.constant 0 : index
    %c0_107 = arith.constant 0 : index
    %96 = vector.load %arg4[%c3_105, %c0_106, %c0_107] : memref<13x8x1xf32, #tpu.memory_space<vmem>>, vector<1x8x1xf32>
    %97 = vector.shape_cast %96 : vector<1x8x1xf32> to vector<8x1xf32>
    %98 = vector.broadcast %97 : vector<8x1xf32> to vector<8x324xf32>
    %99 = arith.addf %95, %98 : vector<8x324xf32>
    %cst_108 = arith.constant 0.000000e+00 : f32
    %100 = vector.broadcast %cst_108 : f32 to vector<8x324xf32>
    %101 = arith.cmpf ogt, %99, %100 : vector<8x324xf32>
    %102 = vector.broadcast %82 : f32 to vector<8x324xf32>
    %103 = arith.mulf %102, %99 : vector<8x324xf32>
    %104 = arith.select %101, %99, %103 : vector<8x324xi1>, vector<8x324xf32>
    %105 = vector.broadcast %0 : vector<1x324xf32> to vector<8x324xf32>
    %106 = arith.mulf %104, %105 : vector<8x324xf32>
    %c0_109 = arith.constant 0 : index
    %c19_110 = arith.constant 19 : index
    %107 = vector.load %arg8[%c0_109, %c19_110] : memref<8x362xf32, #tpu.memory_space<vmem>>, vector<8x324xf32>
    tpu.vector_store %arg8[%c0_109, %c19_110], %106 {strides = array<i32>} : memref<8x362xf32, #tpu.memory_space<vmem>>, vector<8x324xf32>,
    %c4 = arith.constant 4 : index
    %c0_111 = arith.constant 0 : index
    %c0_112 = arith.constant 0 : index
    %108 = vector.load %arg3[%c4, %c0_111, %c0_112] : memref<13x8x72xf32, #tpu.memory_space<vmem>>, vector<1x8x72xf32>
    %109 = vector.shape_cast %108 : vector<1x8x72xf32> to vector<8x72xf32>
    %c0_113 = arith.constant 0 : index
    %c0_114 = arith.constant 0 : index
    %110 = vector.load %arg8[%c0_113, %c0_114] : memref<8x362xf32, #tpu.memory_space<vmem>>, vector<8x324xf32>
    %c0_115 = arith.constant 0 : index
    %c1_116 = arith.constant 1 : index
    %111 = vector.load %arg8[%c0_115, %c1_116] : memref<8x362xf32, #tpu.memory_space<vmem>>, vector<8x324xf32>
    %c0_117 = arith.constant 0 : index
    %c2_118 = arith.constant 2 : index
    %112 = vector.load %arg8[%c0_117, %c2_118] : memref<8x362xf32, #tpu.memory_space<vmem>>, vector<8x324xf32>
    %c0_119 = arith.constant 0 : index
    %c18_120 = arith.constant 18 : index
    %113 = vector.load %arg8[%c0_119, %c18_120] : memref<8x362xf32, #tpu.memory_space<vmem>>, vector<8x324xf32>
    %c0_121 = arith.constant 0 : index
    %c19_122 = arith.constant 19 : index
    %114 = vector.load %arg8[%c0_121, %c19_122] : memref<8x362xf32, #tpu.memory_space<vmem>>, vector<8x324xf32>
    %c0_123 = arith.constant 0 : index
    %c20_124 = arith.constant 20 : index
    %115 = vector.load %arg8[%c0_123, %c20_124] : memref<8x362xf32, #tpu.memory_space<vmem>>, vector<8x324xf32>
    %c0_125 = arith.constant 0 : index
    %c36_126 = arith.constant 36 : index
    %116 = vector.load %arg8[%c0_125, %c36_126] : memref<8x362xf32, #tpu.memory_space<vmem>>, vector<8x324xf32>
    %c0_127 = arith.constant 0 : index
    %c37_128 = arith.constant 37 : index
    %117 = vector.load %arg8[%c0_127, %c37_128] : memref<8x362xf32, #tpu.memory_space<vmem>>, vector<8x324xf32>
    %c0_129 = arith.constant 0 : index
    %c38_130 = arith.constant 38 : index
    %118 = vector.load %arg8[%c0_129, %c38_130] : memref<8x362xf32, #tpu.memory_space<vmem>>, vector<8x324xf32>
    %119 = tpu.concatenate %110, %111, %112, %113, %114, %115, %116, %117, %118 in 0 : vector<8x324xf32>, vector<8x324xf32>, vector<8x324xf32>, vector<8x324xf32>, vector<8x324xf32>, vector<8x324xf32>, vector<8x324xf32>, vector<8x324xf32>, vector<8x324xf32> -> vector<72x324xf32>
    %cst_131 = arith.constant dense<0.000000e+00> : vector<8x324xf32>
    %120 = tpu.matmul %109, %119, %cst_131 {dimension_numbers = #tpu.dot_dimension_numbers<[1], [0], [0], [1], [0, 0, 1, 1], [], []>} : vector<8x72xf32>, vector<72x324xf32>, vector<8x324xf32> -> vector<8x324xf32>
    %c4_132 = arith.constant 4 : index
    %c0_133 = arith.constant 0 : index
    %c0_134 = arith.constant 0 : index
    %121 = vector.load %arg4[%c4_132, %c0_133, %c0_134] : memref<13x8x1xf32, #tpu.memory_space<vmem>>, vector<1x8x1xf32>
    %122 = vector.shape_cast %121 : vector<1x8x1xf32> to vector<8x1xf32>
    %123 = vector.broadcast %122 : vector<8x1xf32> to vector<8x324xf32>
    %124 = arith.addf %120, %123 : vector<8x324xf32>
    %cst_135 = arith.constant 0.000000e+00 : f32
    %125 = vector.broadcast %cst_135 : f32 to vector<8x324xf32>
    %126 = arith.cmpf ogt, %124, %125 : vector<8x324xf32>
    %127 = vector.broadcast %82 : f32 to vector<8x324xf32>
    %128 = arith.mulf %127, %124 : vector<8x324xf32>
    %129 = arith.select %126, %124, %128 : vector<8x324xi1>, vector<8x324xf32>
    %130 = vector.broadcast %0 : vector<1x324xf32> to vector<8x324xf32>
    %131 = arith.mulf %129, %130 : vector<8x324xf32>
    %132 = arith.addf %131, %80 : vector<8x324xf32>
    %c0_136 = arith.constant 0 : index
    %c19_137 = arith.constant 19 : index
    %133 = vector.load %arg8[%c0_136, %c19_137] : memref<8x362xf32, #tpu.memory_space<vmem>>, vector<8x324xf32>
    tpu.vector_store %arg8[%c0_136, %c19_137], %132 {strides = array<i32>} : memref<8x362xf32, #tpu.memory_space<vmem>>, vector<8x324xf32>,
    %c3_138 = arith.constant 3 : index
    %134 = memref.load %arg1[%c3_138] : memref<8xf32, #tpu.memory_space<smem>>
    %c5 = arith.constant 5 : index
    %c0_139 = arith.constant 0 : index
    %c0_140 = arith.constant 0 : index
    %135 = vector.load %arg3[%c5, %c0_139, %c0_140] : memref<13x8x72xf32, #tpu.memory_space<vmem>>, vector<1x8x72xf32>
    %136 = vector.shape_cast %135 : vector<1x8x72xf32> to vector<8x72xf32>
    %c0_141 = arith.constant 0 : index
    %c0_142 = arith.constant 0 : index
    %137 = vector.load %arg8[%c0_141, %c0_142] : memref<8x362xf32, #tpu.memory_space<vmem>>, vector<8x324xf32>
    %c0_143 = arith.constant 0 : index
    %c1_144 = arith.constant 1 : index
    %138 = vector.load %arg8[%c0_143, %c1_144] : memref<8x362xf32, #tpu.memory_space<vmem>>, vector<8x324xf32>
    %c0_145 = arith.constant 0 : index
    %c2_146 = arith.constant 2 : index
    %139 = vector.load %arg8[%c0_145, %c2_146] : memref<8x362xf32, #tpu.memory_space<vmem>>, vector<8x324xf32>
    %c0_147 = arith.constant 0 : index
    %c18_148 = arith.constant 18 : index
    %140 = vector.load %arg8[%c0_147, %c18_148] : memref<8x362xf32, #tpu.memory_space<vmem>>, vector<8x324xf32>
    %c0_149 = arith.constant 0 : index
    %c19_150 = arith.constant 19 : index
    %141 = vector.load %arg8[%c0_149, %c19_150] : memref<8x362xf32, #tpu.memory_space<vmem>>, vector<8x324xf32>
    %c0_151 = arith.constant 0 : index
    %c20_152 = arith.constant 20 : index
    %142 = vector.load %arg8[%c0_151, %c20_152] : memref<8x362xf32, #tpu.memory_space<vmem>>, vector<8x324xf32>
    %c0_153 = arith.constant 0 : index
    %c36_154 = arith.constant 36 : index
    %143 = vector.load %arg8[%c0_153, %c36_154] : memref<8x362xf32, #tpu.memory_space<vmem>>, vector<8x324xf32>
    %c0_155 = arith.constant 0 : index
    %c37_156 = arith.constant 37 : index
    %144 = vector.load %arg8[%c0_155, %c37_156] : memref<8x362xf32, #tpu.memory_space<vmem>>, vector<8x324xf32>
    %c0_157 = arith.constant 0 : index
    %c38_158 = arith.constant 38 : index
    %145 = vector.load %arg8[%c0_157, %c38_158] : memref<8x362xf32, #tpu.memory_space<vmem>>, vector<8x324xf32>
    %146 = tpu.concatenate %137, %138, %139, %140, %141, %142, %143, %144, %145 in 0 : vector<8x324xf32>, vector<8x324xf32>, vector<8x324xf32>, vector<8x324xf32>, vector<8x324xf32>, vector<8x324xf32>, vector<8x324xf32>, vector<8x324xf32>, vector<8x324xf32> -> vector<72x324xf32>
    %cst_159 = arith.constant dense<0.000000e+00> : vector<8x324xf32>
    %147 = tpu.matmul %136, %146, %cst_159 {dimension_numbers = #tpu.dot_dimension_numbers<[1], [0], [0], [1], [0, 0, 1, 1], [], []>} : vector<8x72xf32>, vector<72x324xf32>, vector<8x324xf32> -> vector<8x324xf32>
    %c5_160 = arith.constant 5 : index
    %c0_161 = arith.constant 0 : index
    %c0_162 = arith.constant 0 : index
    %148 = vector.load %arg4[%c5_160, %c0_161, %c0_162] : memref<13x8x1xf32, #tpu.memory_space<vmem>>, vector<1x8x1xf32>
    %149 = vector.shape_cast %148 : vector<1x8x1xf32> to vector<8x1xf32>
    %150 = vector.broadcast %149 : vector<8x1xf32> to vector<8x324xf32>
    %151 = arith.addf %147, %150 : vector<8x324xf32>
    %cst_163 = arith.constant 0.000000e+00 : f32
    %152 = vector.broadcast %cst_163 : f32 to vector<8x324xf32>
    %153 = arith.cmpf ogt, %151, %152 : vector<8x324xf32>
    %154 = vector.broadcast %134 : f32 to vector<8x324xf32>
    %155 = arith.mulf %154, %151 : vector<8x324xf32>
    %156 = arith.select %153, %151, %155 : vector<8x324xi1>, vector<8x324xf32>
    %157 = vector.broadcast %0 : vector<1x324xf32> to vector<8x324xf32>
    %158 = arith.mulf %156, %157 : vector<8x324xf32>
    %c0_164 = arith.constant 0 : index
    %c19_165 = arith.constant 19 : index
    %159 = vector.load %arg8[%c0_164, %c19_165] : memref<8x362xf32, #tpu.memory_space<vmem>>, vector<8x324xf32>
    tpu.vector_store %arg8[%c0_164, %c19_165], %158 {strides = array<i32>} : memref<8x362xf32, #tpu.memory_space<vmem>>, vector<8x324xf32>,
    %c6 = arith.constant 6 : index
    %c0_166 = arith.constant 0 : index
    %c0_167 = arith.constant 0 : index
    %160 = vector.load %arg3[%c6, %c0_166, %c0_167] : memref<13x8x72xf32, #tpu.memory_space<vmem>>, vector<1x8x72xf32>
    %161 = vector.shape_cast %160 : vector<1x8x72xf32> to vector<8x72xf32>
    %c0_168 = arith.constant 0 : index
    %c0_169 = arith.constant 0 : index
    %162 = vector.load %arg8[%c0_168, %c0_169] : memref<8x362xf32, #tpu.memory_space<vmem>>, vector<8x324xf32>
    %c0_170 = arith.constant 0 : index
    %c1_171 = arith.constant 1 : index
    %163 = vector.load %arg8[%c0_170, %c1_171] : memref<8x362xf32, #tpu.memory_space<vmem>>, vector<8x324xf32>
    %c0_172 = arith.constant 0 : index
    %c2_173 = arith.constant 2 : index
    %164 = vector.load %arg8[%c0_172, %c2_173] : memref<8x362xf32, #tpu.memory_space<vmem>>, vector<8x324xf32>
    %c0_174 = arith.constant 0 : index
    %c18_175 = arith.constant 18 : index
    %165 = vector.load %arg8[%c0_174, %c18_175] : memref<8x362xf32, #tpu.memory_space<vmem>>, vector<8x324xf32>
    %c0_176 = arith.constant 0 : index
    %c19_177 = arith.constant 19 : index
    %166 = vector.load %arg8[%c0_176, %c19_177] : memref<8x362xf32, #tpu.memory_space<vmem>>, vector<8x324xf32>
    %c0_178 = arith.constant 0 : index
    %c20_179 = arith.constant 20 : index
    %167 = vector.load %arg8[%c0_178, %c20_179] : memref<8x362xf32, #tpu.memory_space<vmem>>, vector<8x324xf32>
    %c0_180 = arith.constant 0 : index
    %c36_181 = arith.constant 36 : index
    %168 = vector.load %arg8[%c0_180, %c36_181] : memref<8x362xf32, #tpu.memory_space<vmem>>, vector<8x324xf32>
    %c0_182 = arith.constant 0 : index
    %c37_183 = arith.constant 37 : index
    %169 = vector.load %arg8[%c0_182, %c37_183] : memref<8x362xf32, #tpu.memory_space<vmem>>, vector<8x324xf32>
    %c0_184 = arith.constant 0 : index
    %c38_185 = arith.constant 38 : index
    %170 = vector.load %arg8[%c0_184, %c38_185] : memref<8x362xf32, #tpu.memory_space<vmem>>, vector<8x324xf32>
    %171 = tpu.concatenate %162, %163, %164, %165, %166, %167, %168, %169, %170 in 0 : vector<8x324xf32>, vector<8x324xf32>, vector<8x324xf32>, vector<8x324xf32>, vector<8x324xf32>, vector<8x324xf32>, vector<8x324xf32>, vector<8x324xf32>, vector<8x324xf32> -> vector<72x324xf32>
    %cst_186 = arith.constant dense<0.000000e+00> : vector<8x324xf32>
    %172 = tpu.matmul %161, %171, %cst_186 {dimension_numbers = #tpu.dot_dimension_numbers<[1], [0], [0], [1], [0, 0, 1, 1], [], []>} : vector<8x72xf32>, vector<72x324xf32>, vector<8x324xf32> -> vector<8x324xf32>
    %c6_187 = arith.constant 6 : index
    %c0_188 = arith.constant 0 : index
    %c0_189 = arith.constant 0 : index
    %173 = vector.load %arg4[%c6_187, %c0_188, %c0_189] : memref<13x8x1xf32, #tpu.memory_space<vmem>>, vector<1x8x1xf32>
    %174 = vector.shape_cast %173 : vector<1x8x1xf32> to vector<8x1xf32>
    %175 = vector.broadcast %174 : vector<8x1xf32> to vector<8x324xf32>
    %176 = arith.addf %172, %175 : vector<8x324xf32>
    %cst_190 = arith.constant 0.000000e+00 : f32
    %177 = vector.broadcast %cst_190 : f32 to vector<8x324xf32>
    %178 = arith.cmpf ogt, %176, %177 : vector<8x324xf32>
    %179 = vector.broadcast %134 : f32 to vector<8x324xf32>
    %180 = arith.mulf %179, %176 : vector<8x324xf32>
    %181 = arith.select %178, %176, %180 : vector<8x324xi1>, vector<8x324xf32>
    %182 = vector.broadcast %0 : vector<1x324xf32> to vector<8x324xf32>
    %183 = arith.mulf %181, %182 : vector<8x324xf32>
    %184 = arith.addf %183, %132 : vector<8x324xf32>
    %c0_191 = arith.constant 0 : index
    %c19_192 = arith.constant 19 : index
    %185 = vector.load %arg8[%c0_191, %c19_192] : memref<8x362xf32, #tpu.memory_space<vmem>>, vector<8x324xf32>
    tpu.vector_store %arg8[%c0_191, %c19_192], %184 {strides = array<i32>} : memref<8x362xf32, #tpu.memory_space<vmem>>, vector<8x324xf32>,
    %c4_193 = arith.constant 4 : index
    %186 = memref.load %arg1[%c4_193] : memref<8xf32, #tpu.memory_space<smem>>
    %c7 = arith.constant 7 : index
    %c0_194 = arith.constant 0 : index
    %c0_195 = arith.constant 0 : index
    %187 = vector.load %arg3[%c7, %c0_194, %c0_195] : memref<13x8x72xf32, #tpu.memory_space<vmem>>, vector<1x8x72xf32>
    %188 = vector.shape_cast %187 : vector<1x8x72xf32> to vector<8x72xf32>
    %c0_196 = arith.constant 0 : index
    %c0_197 = arith.constant 0 : index
    %189 = vector.load %arg8[%c0_196, %c0_197] : memref<8x362xf32, #tpu.memory_space<vmem>>, vector<8x324xf32>
    %c0_198 = arith.constant 0 : index
    %c1_199 = arith.constant 1 : index
    %190 = vector.load %arg8[%c0_198, %c1_199] : memref<8x362xf32, #tpu.memory_space<vmem>>, vector<8x324xf32>
    %c0_200 = arith.constant 0 : index
    %c2_201 = arith.constant 2 : index
    %191 = vector.load %arg8[%c0_200, %c2_201] : memref<8x362xf32, #tpu.memory_space<vmem>>, vector<8x324xf32>
    %c0_202 = arith.constant 0 : index
    %c18_203 = arith.constant 18 : index
    %192 = vector.load %arg8[%c0_202, %c18_203] : memref<8x362xf32, #tpu.memory_space<vmem>>, vector<8x324xf32>
    %c0_204 = arith.constant 0 : index
    %c19_205 = arith.constant 19 : index
    %193 = vector.load %arg8[%c0_204, %c19_205] : memref<8x362xf32, #tpu.memory_space<vmem>>, vector<8x324xf32>
    %c0_206 = arith.constant 0 : index
    %c20_207 = arith.constant 20 : index
    %194 = vector.load %arg8[%c0_206, %c20_207] : memref<8x362xf32, #tpu.memory_space<vmem>>, vector<8x324xf32>
    %c0_208 = arith.constant 0 : index
    %c36_209 = arith.constant 36 : index
    %195 = vector.load %arg8[%c0_208, %c36_209] : memref<8x362xf32, #tpu.memory_space<vmem>>, vector<8x324xf32>
    %c0_210 = arith.constant 0 : index
    %c37_211 = arith.constant 37 : index
    %196 = vector.load %arg8[%c0_210, %c37_211] : memref<8x362xf32, #tpu.memory_space<vmem>>, vector<8x324xf32>
    %c0_212 = arith.constant 0 : index
    %c38_213 = arith.constant 38 : index
    %197 = vector.load %arg8[%c0_212, %c38_213] : memref<8x362xf32, #tpu.memory_space<vmem>>, vector<8x324xf32>
    %198 = tpu.concatenate %189, %190, %191, %192, %193, %194, %195, %196, %197 in 0 : vector<8x324xf32>, vector<8x324xf32>, vector<8x324xf32>, vector<8x324xf32>, vector<8x324xf32>, vector<8x324xf32>, vector<8x324xf32>, vector<8x324xf32>, vector<8x324xf32> -> vector<72x324xf32>
    %cst_214 = arith.constant dense<0.000000e+00> : vector<8x324xf32>
    %199 = tpu.matmul %188, %198, %cst_214 {dimension_numbers = #tpu.dot_dimension_numbers<[1], [0], [0], [1], [0, 0, 1, 1], [], []>} : vector<8x72xf32>, vector<72x324xf32>, vector<8x324xf32> -> vector<8x324xf32>
    %c7_215 = arith.constant 7 : index
    %c0_216 = arith.constant 0 : index
    %c0_217 = arith.constant 0 : index
    %200 = vector.load %arg4[%c7_215, %c0_216, %c0_217] : memref<13x8x1xf32, #tpu.memory_space<vmem>>, vector<1x8x1xf32>
    %201 = vector.shape_cast %200 : vector<1x8x1xf32> to vector<8x1xf32>
    %202 = vector.broadcast %201 : vector<8x1xf32> to vector<8x324xf32>
    %203 = arith.addf %199, %202 : vector<8x324xf32>
    %cst_218 = arith.constant 0.000000e+00 : f32
    %204 = vector.broadcast %cst_218 : f32 to vector<8x324xf32>
    %205 = arith.cmpf ogt, %203, %204 : vector<8x324xf32>
    %206 = vector.broadcast %186 : f32 to vector<8x324xf32>
    %207 = arith.mulf %206, %203 : vector<8x324xf32>
    %208 = arith.select %205, %203, %207 : vector<8x324xi1>, vector<8x324xf32>
    %209 = vector.broadcast %0 : vector<1x324xf32> to vector<8x324xf32>
    %210 = arith.mulf %208, %209 : vector<8x324xf32>
    %c0_219 = arith.constant 0 : index
    %c19_220 = arith.constant 19 : index
    %211 = vector.load %arg8[%c0_219, %c19_220] : memref<8x362xf32, #tpu.memory_space<vmem>>, vector<8x324xf32>
    tpu.vector_store %arg8[%c0_219, %c19_220], %210 {strides = array<i32>} : memref<8x362xf32, #tpu.memory_space<vmem>>, vector<8x324xf32>,
    %c8 = arith.constant 8 : index
    %c0_221 = arith.constant 0 : index
    %c0_222 = arith.constant 0 : index
    %212 = vector.load %arg3[%c8, %c0_221, %c0_222] : memref<13x8x72xf32, #tpu.memory_space<vmem>>, vector<1x8x72xf32>
    %213 = vector.shape_cast %212 : vector<1x8x72xf32> to vector<8x72xf32>
    %c0_223 = arith.constant 0 : index
    %c0_224 = arith.constant 0 : index
    %214 = vector.load %arg8[%c0_223, %c0_224] : memref<8x362xf32, #tpu.memory_space<vmem>>, vector<8x324xf32>
    %c0_225 = arith.constant 0 : index
    %c1_226 = arith.constant 1 : index
    %215 = vector.load %arg8[%c0_225, %c1_226] : memref<8x362xf32, #tpu.memory_space<vmem>>, vector<8x324xf32>
    %c0_227 = arith.constant 0 : index
    %c2_228 = arith.constant 2 : index
    %216 = vector.load %arg8[%c0_227, %c2_228] : memref<8x362xf32, #tpu.memory_space<vmem>>, vector<8x324xf32>
    %c0_229 = arith.constant 0 : index
    %c18_230 = arith.constant 18 : index
    %217 = vector.load %arg8[%c0_229, %c18_230] : memref<8x362xf32, #tpu.memory_space<vmem>>, vector<8x324xf32>
    %c0_231 = arith.constant 0 : index
    %c19_232 = arith.constant 19 : index
    %218 = vector.load %arg8[%c0_231, %c19_232] : memref<8x362xf32, #tpu.memory_space<vmem>>, vector<8x324xf32>
    %c0_233 = arith.constant 0 : index
    %c20_234 = arith.constant 20 : index
    %219 = vector.load %arg8[%c0_233, %c20_234] : memref<8x362xf32, #tpu.memory_space<vmem>>, vector<8x324xf32>
    %c0_235 = arith.constant 0 : index
    %c36_236 = arith.constant 36 : index
    %220 = vector.load %arg8[%c0_235, %c36_236] : memref<8x362xf32, #tpu.memory_space<vmem>>, vector<8x324xf32>
    %c0_237 = arith.constant 0 : index
    %c37_238 = arith.constant 37 : index
    %221 = vector.load %arg8[%c0_237, %c37_238] : memref<8x362xf32, #tpu.memory_space<vmem>>, vector<8x324xf32>
    %c0_239 = arith.constant 0 : index
    %c38_240 = arith.constant 38 : index
    %222 = vector.load %arg8[%c0_239, %c38_240] : memref<8x362xf32, #tpu.memory_space<vmem>>, vector<8x324xf32>
    %223 = tpu.concatenate %214, %215, %216, %217, %218, %219, %220, %221, %222 in 0 : vector<8x324xf32>, vector<8x324xf32>, vector<8x324xf32>, vector<8x324xf32>, vector<8x324xf32>, vector<8x324xf32>, vector<8x324xf32>, vector<8x324xf32>, vector<8x324xf32> -> vector<72x324xf32>
    %cst_241 = arith.constant dense<0.000000e+00> : vector<8x324xf32>
    %224 = tpu.matmul %213, %223, %cst_241 {dimension_numbers = #tpu.dot_dimension_numbers<[1], [0], [0], [1], [0, 0, 1, 1], [], []>} : vector<8x72xf32>, vector<72x324xf32>, vector<8x324xf32> -> vector<8x324xf32>
    %c8_242 = arith.constant 8 : index
    %c0_243 = arith.constant 0 : index
    %c0_244 = arith.constant 0 : index
    %225 = vector.load %arg4[%c8_242, %c0_243, %c0_244] : memref<13x8x1xf32, #tpu.memory_space<vmem>>, vector<1x8x1xf32>
    %226 = vector.shape_cast %225 : vector<1x8x1xf32> to vector<8x1xf32>
    %227 = vector.broadcast %226 : vector<8x1xf32> to vector<8x324xf32>
    %228 = arith.addf %224, %227 : vector<8x324xf32>
    %cst_245 = arith.constant 0.000000e+00 : f32
    %229 = vector.broadcast %cst_245 : f32 to vector<8x324xf32>
    %230 = arith.cmpf ogt, %228, %229 : vector<8x324xf32>
    %231 = vector.broadcast %186 : f32 to vector<8x324xf32>
    %232 = arith.mulf %231, %228 : vector<8x324xf32>
    %233 = arith.select %230, %228, %232 : vector<8x324xi1>, vector<8x324xf32>
    %234 = vector.broadcast %0 : vector<1x324xf32> to vector<8x324xf32>
    %235 = arith.mulf %233, %234 : vector<8x324xf32>
    %236 = arith.addf %235, %184 : vector<8x324xf32>
    %c0_246 = arith.constant 0 : index
    %c19_247 = arith.constant 19 : index
    %237 = vector.load %arg8[%c0_246, %c19_247] : memref<8x362xf32, #tpu.memory_space<vmem>>, vector<8x324xf32>
    tpu.vector_store %arg8[%c0_246, %c19_247], %236 {strides = array<i32>} : memref<8x362xf32, #tpu.memory_space<vmem>>, vector<8x324xf32>,
    %c5_248 = arith.constant 5 : index
    %238 = memref.load %arg1[%c5_248] : memref<8xf32, #tpu.memory_space<smem>>
    %c9 = arith.constant 9 : index
    %c0_249 = arith.constant 0 : index
    %c0_250 = arith.constant 0 : index
    %239 = vector.load %arg3[%c9, %c0_249, %c0_250] : memref<13x8x72xf32, #tpu.memory_space<vmem>>, vector<1x8x72xf32>
    %240 = vector.shape_cast %239 : vector<1x8x72xf32> to vector<8x72xf32>
    %c0_251 = arith.constant 0 : index
    %c0_252 = arith.constant 0 : index
    %241 = vector.load %arg8[%c0_251, %c0_252] : memref<8x362xf32, #tpu.memory_space<vmem>>, vector<8x324xf32>
    %c0_253 = arith.constant 0 : index
    %c1_254 = arith.constant 1 : index
    %242 = vector.load %arg8[%c0_253, %c1_254] : memref<8x362xf32, #tpu.memory_space<vmem>>, vector<8x324xf32>
    %c0_255 = arith.constant 0 : index
    %c2_256 = arith.constant 2 : index
    %243 = vector.load %arg8[%c0_255, %c2_256] : memref<8x362xf32, #tpu.memory_space<vmem>>, vector<8x324xf32>
    %c0_257 = arith.constant 0 : index
    %c18_258 = arith.constant 18 : index
    %244 = vector.load %arg8[%c0_257, %c18_258] : memref<8x362xf32, #tpu.memory_space<vmem>>, vector<8x324xf32>
    %c0_259 = arith.constant 0 : index
    %c19_260 = arith.constant 19 : index
    %245 = vector.load %arg8[%c0_259, %c19_260] : memref<8x362xf32, #tpu.memory_space<vmem>>, vector<8x324xf32>
    %c0_261 = arith.constant 0 : index
    %c20_262 = arith.constant 20 : index
    %246 = vector.load %arg8[%c0_261, %c20_262] : memref<8x362xf32, #tpu.memory_space<vmem>>, vector<8x324xf32>
    %c0_263 = arith.constant 0 : index
    %c36_264 = arith.constant 36 : index
    %247 = vector.load %arg8[%c0_263, %c36_264] : memref<8x362xf32, #tpu.memory_space<vmem>>, vector<8x324xf32>
    %c0_265 = arith.constant 0 : index
    %c37_266 = arith.constant 37 : index
    %248 = vector.load %arg8[%c0_265, %c37_266] : memref<8x362xf32, #tpu.memory_space<vmem>>, vector<8x324xf32>
    %c0_267 = arith.constant 0 : index
    %c38_268 = arith.constant 38 : index
    %249 = vector.load %arg8[%c0_267, %c38_268] : memref<8x362xf32, #tpu.memory_space<vmem>>, vector<8x324xf32>
    %250 = tpu.concatenate %241, %242, %243, %244, %245, %246, %247, %248, %249 in 0 : vector<8x324xf32>, vector<8x324xf32>, vector<8x324xf32>, vector<8x324xf32>, vector<8x324xf32>, vector<8x324xf32>, vector<8x324xf32>, vector<8x324xf32>, vector<8x324xf32> -> vector<72x324xf32>
    %cst_269 = arith.constant dense<0.000000e+00> : vector<8x324xf32>
    %251 = tpu.matmul %240, %250, %cst_269 {dimension_numbers = #tpu.dot_dimension_numbers<[1], [0], [0], [1], [0, 0, 1, 1], [], []>} : vector<8x72xf32>, vector<72x324xf32>, vector<8x324xf32> -> vector<8x324xf32>
    %c9_270 = arith.constant 9 : index
    %c0_271 = arith.constant 0 : index
    %c0_272 = arith.constant 0 : index
    %252 = vector.load %arg4[%c9_270, %c0_271, %c0_272] : memref<13x8x1xf32, #tpu.memory_space<vmem>>, vector<1x8x1xf32>
    %253 = vector.shape_cast %252 : vector<1x8x1xf32> to vector<8x1xf32>
    %254 = vector.broadcast %253 : vector<8x1xf32> to vector<8x324xf32>
    %255 = arith.addf %251, %254 : vector<8x324xf32>
    %cst_273 = arith.constant 0.000000e+00 : f32
    %256 = vector.broadcast %cst_273 : f32 to vector<8x324xf32>
    %257 = arith.cmpf ogt, %255, %256 : vector<8x324xf32>
    %258 = vector.broadcast %238 : f32 to vector<8x324xf32>
    %259 = arith.mulf %258, %255 : vector<8x324xf32>
    %260 = arith.select %257, %255, %259 : vector<8x324xi1>, vector<8x324xf32>
    %261 = vector.broadcast %0 : vector<1x324xf32> to vector<8x324xf32>
    %262 = arith.mulf %260, %261 : vector<8x324xf32>
    %c0_274 = arith.constant 0 : index
    %c19_275 = arith.constant 19 : index
    %263 = vector.load %arg8[%c0_274, %c19_275] : memref<8x362xf32, #tpu.memory_space<vmem>>, vector<8x324xf32>
    tpu.vector_store %arg8[%c0_274, %c19_275], %262 {strides = array<i32>} : memref<8x362xf32, #tpu.memory_space<vmem>>, vector<8x324xf32>,
    %c10 = arith.constant 10 : index
    %c0_276 = arith.constant 0 : index
    %c0_277 = arith.constant 0 : index
    %264 = vector.load %arg3[%c10, %c0_276, %c0_277] : memref<13x8x72xf32, #tpu.memory_space<vmem>>, vector<1x8x72xf32>
    %265 = vector.shape_cast %264 : vector<1x8x72xf32> to vector<8x72xf32>
    %c0_278 = arith.constant 0 : index
    %c0_279 = arith.constant 0 : index
    %266 = vector.load %arg8[%c0_278, %c0_279] : memref<8x362xf32, #tpu.memory_space<vmem>>, vector<8x324xf32>
    %c0_280 = arith.constant 0 : index
    %c1_281 = arith.constant 1 : index
    %267 = vector.load %arg8[%c0_280, %c1_281] : memref<8x362xf32, #tpu.memory_space<vmem>>, vector<8x324xf32>
    %c0_282 = arith.constant 0 : index
    %c2_283 = arith.constant 2 : index
    %268 = vector.load %arg8[%c0_282, %c2_283] : memref<8x362xf32, #tpu.memory_space<vmem>>, vector<8x324xf32>
    %c0_284 = arith.constant 0 : index
    %c18_285 = arith.constant 18 : index
    %269 = vector.load %arg8[%c0_284, %c18_285] : memref<8x362xf32, #tpu.memory_space<vmem>>, vector<8x324xf32>
    %c0_286 = arith.constant 0 : index
    %c19_287 = arith.constant 19 : index
    %270 = vector.load %arg8[%c0_286, %c19_287] : memref<8x362xf32, #tpu.memory_space<vmem>>, vector<8x324xf32>
    %c0_288 = arith.constant 0 : index
    %c20_289 = arith.constant 20 : index
    %271 = vector.load %arg8[%c0_288, %c20_289] : memref<8x362xf32, #tpu.memory_space<vmem>>, vector<8x324xf32>
    %c0_290 = arith.constant 0 : index
    %c36_291 = arith.constant 36 : index
    %272 = vector.load %arg8[%c0_290, %c36_291] : memref<8x362xf32, #tpu.memory_space<vmem>>, vector<8x324xf32>
    %c0_292 = arith.constant 0 : index
    %c37_293 = arith.constant 37 : index
    %273 = vector.load %arg8[%c0_292, %c37_293] : memref<8x362xf32, #tpu.memory_space<vmem>>, vector<8x324xf32>
    %c0_294 = arith.constant 0 : index
    %c38_295 = arith.constant 38 : index
    %274 = vector.load %arg8[%c0_294, %c38_295] : memref<8x362xf32, #tpu.memory_space<vmem>>, vector<8x324xf32>
    %275 = tpu.concatenate %266, %267, %268, %269, %270, %271, %272, %273, %274 in 0 : vector<8x324xf32>, vector<8x324xf32>, vector<8x324xf32>, vector<8x324xf32>, vector<8x324xf32>, vector<8x324xf32>, vector<8x324xf32>, vector<8x324xf32>, vector<8x324xf32> -> vector<72x324xf32>
    %cst_296 = arith.constant dense<0.000000e+00> : vector<8x324xf32>
    %276 = tpu.matmul %265, %275, %cst_296 {dimension_numbers = #tpu.dot_dimension_numbers<[1], [0], [0], [1], [0, 0, 1, 1], [], []>} : vector<8x72xf32>, vector<72x324xf32>, vector<8x324xf32> -> vector<8x324xf32>
    %c10_297 = arith.constant 10 : index
    %c0_298 = arith.constant 0 : index
    %c0_299 = arith.constant 0 : index
    %277 = vector.load %arg4[%c10_297, %c0_298, %c0_299] : memref<13x8x1xf32, #tpu.memory_space<vmem>>, vector<1x8x1xf32>
    %278 = vector.shape_cast %277 : vector<1x8x1xf32> to vector<8x1xf32>
    %279 = vector.broadcast %278 : vector<8x1xf32> to vector<8x324xf32>
    %280 = arith.addf %276, %279 : vector<8x324xf32>
    %cst_300 = arith.constant 0.000000e+00 : f32
    %281 = vector.broadcast %cst_300 : f32 to vector<8x324xf32>
    %282 = arith.cmpf ogt, %280, %281 : vector<8x324xf32>
    %283 = vector.broadcast %238 : f32 to vector<8x324xf32>
    %284 = arith.mulf %283, %280 : vector<8x324xf32>
    %285 = arith.select %282, %280, %284 : vector<8x324xi1>, vector<8x324xf32>
    %286 = vector.broadcast %0 : vector<1x324xf32> to vector<8x324xf32>
    %287 = arith.mulf %285, %286 : vector<8x324xf32>
    %288 = arith.addf %287, %236 : vector<8x324xf32>
    %c0_301 = arith.constant 0 : index
    %c19_302 = arith.constant 19 : index
    %289 = vector.load %arg8[%c0_301, %c19_302] : memref<8x362xf32, #tpu.memory_space<vmem>>, vector<8x324xf32>
    tpu.vector_store %arg8[%c0_301, %c19_302], %288 {strides = array<i32>} : memref<8x362xf32, #tpu.memory_space<vmem>>, vector<8x324xf32>,
    %c6_303 = arith.constant 6 : index
    %290 = memref.load %arg1[%c6_303] : memref<8xf32, #tpu.memory_space<smem>>
    %c11 = arith.constant 11 : index
    %c0_304 = arith.constant 0 : index
    %c0_305 = arith.constant 0 : index
    %291 = vector.load %arg3[%c11, %c0_304, %c0_305] : memref<13x8x72xf32, #tpu.memory_space<vmem>>, vector<1x8x72xf32>
    %292 = vector.shape_cast %291 : vector<1x8x72xf32> to vector<8x72xf32>
    %c0_306 = arith.constant 0 : index
    %c0_307 = arith.constant 0 : index
    %293 = vector.load %arg8[%c0_306, %c0_307] : memref<8x362xf32, #tpu.memory_space<vmem>>, vector<8x324xf32>
    %c0_308 = arith.constant 0 : index
    %c1_309 = arith.constant 1 : index
    %294 = vector.load %arg8[%c0_308, %c1_309] : memref<8x362xf32, #tpu.memory_space<vmem>>, vector<8x324xf32>
    %c0_310 = arith.constant 0 : index
    %c2_311 = arith.constant 2 : index
    %295 = vector.load %arg8[%c0_310, %c2_311] : memref<8x362xf32, #tpu.memory_space<vmem>>, vector<8x324xf32>
    %c0_312 = arith.constant 0 : index
    %c18_313 = arith.constant 18 : index
    %296 = vector.load %arg8[%c0_312, %c18_313] : memref<8x362xf32, #tpu.memory_space<vmem>>, vector<8x324xf32>
    %c0_314 = arith.constant 0 : index
    %c19_315 = arith.constant 19 : index
    %297 = vector.load %arg8[%c0_314, %c19_315] : memref<8x362xf32, #tpu.memory_space<vmem>>, vector<8x324xf32>
    %c0_316 = arith.constant 0 : index
    %c20_317 = arith.constant 20 : index
    %298 = vector.load %arg8[%c0_316, %c20_317] : memref<8x362xf32, #tpu.memory_space<vmem>>, vector<8x324xf32>
    %c0_318 = arith.constant 0 : index
    %c36_319 = arith.constant 36 : index
    %299 = vector.load %arg8[%c0_318, %c36_319] : memref<8x362xf32, #tpu.memory_space<vmem>>, vector<8x324xf32>
    %c0_320 = arith.constant 0 : index
    %c37_321 = arith.constant 37 : index
    %300 = vector.load %arg8[%c0_320, %c37_321] : memref<8x362xf32, #tpu.memory_space<vmem>>, vector<8x324xf32>
    %c0_322 = arith.constant 0 : index
    %c38_323 = arith.constant 38 : index
    %301 = vector.load %arg8[%c0_322, %c38_323] : memref<8x362xf32, #tpu.memory_space<vmem>>, vector<8x324xf32>
    %302 = tpu.concatenate %293, %294, %295, %296, %297, %298, %299, %300, %301 in 0 : vector<8x324xf32>, vector<8x324xf32>, vector<8x324xf32>, vector<8x324xf32>, vector<8x324xf32>, vector<8x324xf32>, vector<8x324xf32>, vector<8x324xf32>, vector<8x324xf32> -> vector<72x324xf32>
    %cst_324 = arith.constant dense<0.000000e+00> : vector<8x324xf32>
    %303 = tpu.matmul %292, %302, %cst_324 {dimension_numbers = #tpu.dot_dimension_numbers<[1], [0], [0], [1], [0, 0, 1, 1], [], []>} : vector<8x72xf32>, vector<72x324xf32>, vector<8x324xf32> -> vector<8x324xf32>
    %c11_325 = arith.constant 11 : index
    %c0_326 = arith.constant 0 : index
    %c0_327 = arith.constant 0 : index
    %304 = vector.load %arg4[%c11_325, %c0_326, %c0_327] : memref<13x8x1xf32, #tpu.memory_space<vmem>>, vector<1x8x1xf32>
    %305 = vector.shape_cast %304 : vector<1x8x1xf32> to vector<8x1xf32>
    %306 = vector.broadcast %305 : vector<8x1xf32> to vector<8x324xf32>
    %307 = arith.addf %303, %306 : vector<8x324xf32>
    %cst_328 = arith.constant 0.000000e+00 : f32
    %308 = vector.broadcast %cst_328 : f32 to vector<8x324xf32>
    %309 = arith.cmpf ogt, %307, %308 : vector<8x324xf32>
    %310 = vector.broadcast %290 : f32 to vector<8x324xf32>
    %311 = arith.mulf %310, %307 : vector<8x324xf32>
    %312 = arith.select %309, %307, %311 : vector<8x324xi1>, vector<8x324xf32>
    %313 = vector.broadcast %0 : vector<1x324xf32> to vector<8x324xf32>
    %314 = arith.mulf %312, %313 : vector<8x324xf32>
    %c0_329 = arith.constant 0 : index
    %c19_330 = arith.constant 19 : index
    %315 = vector.load %arg8[%c0_329, %c19_330] : memref<8x362xf32, #tpu.memory_space<vmem>>, vector<8x324xf32>
    tpu.vector_store %arg8[%c0_329, %c19_330], %314 {strides = array<i32>} : memref<8x362xf32, #tpu.memory_space<vmem>>, vector<8x324xf32>,
    %c12 = arith.constant 12 : index
    %c0_331 = arith.constant 0 : index
    %c0_332 = arith.constant 0 : index
    %316 = vector.load %arg3[%c12, %c0_331, %c0_332] : memref<13x8x72xf32, #tpu.memory_space<vmem>>, vector<1x8x72xf32>
    %317 = vector.shape_cast %316 : vector<1x8x72xf32> to vector<8x72xf32>
    %c0_333 = arith.constant 0 : index
    %c0_334 = arith.constant 0 : index
    %318 = vector.load %arg8[%c0_333, %c0_334] : memref<8x362xf32, #tpu.memory_space<vmem>>, vector<8x324xf32>
    %c0_335 = arith.constant 0 : index
    %c1_336 = arith.constant 1 : index
    %319 = vector.load %arg8[%c0_335, %c1_336] : memref<8x362xf32, #tpu.memory_space<vmem>>, vector<8x324xf32>
    %c0_337 = arith.constant 0 : index
    %c2_338 = arith.constant 2 : index
    %320 = vector.load %arg8[%c0_337, %c2_338] : memref<8x362xf32, #tpu.memory_space<vmem>>, vector<8x324xf32>
    %c0_339 = arith.constant 0 : index
    %c18_340 = arith.constant 18 : index
    %321 = vector.load %arg8[%c0_339, %c18_340] : memref<8x362xf32, #tpu.memory_space<vmem>>, vector<8x324xf32>
    %c0_341 = arith.constant 0 : index
    %c19_342 = arith.constant 19 : index
    %322 = vector.load %arg8[%c0_341, %c19_342] : memref<8x362xf32, #tpu.memory_space<vmem>>, vector<8x324xf32>
    %c0_343 = arith.constant 0 : index
    %c20_344 = arith.constant 20 : index
    %323 = vector.load %arg8[%c0_343, %c20_344] : memref<8x362xf32, #tpu.memory_space<vmem>>, vector<8x324xf32>
    %c0_345 = arith.constant 0 : index
    %c36_346 = arith.constant 36 : index
    %324 = vector.load %arg8[%c0_345, %c36_346] : memref<8x362xf32, #tpu.memory_space<vmem>>, vector<8x324xf32>
    %c0_347 = arith.constant 0 : index
    %c37_348 = arith.constant 37 : index
    %325 = vector.load %arg8[%c0_347, %c37_348] : memref<8x362xf32, #tpu.memory_space<vmem>>, vector<8x324xf32>
    %c0_349 = arith.constant 0 : index
    %c38_350 = arith.constant 38 : index
    %326 = vector.load %arg8[%c0_349, %c38_350] : memref<8x362xf32, #tpu.memory_space<vmem>>, vector<8x324xf32>
    %327 = tpu.concatenate %318, %319, %320, %321, %322, %323, %324, %325, %326 in 0 : vector<8x324xf32>, vector<8x324xf32>, vector<8x324xf32>, vector<8x324xf32>, vector<8x324xf32>, vector<8x324xf32>, vector<8x324xf32>, vector<8x324xf32>, vector<8x324xf32> -> vector<72x324xf32>
    %cst_351 = arith.constant dense<0.000000e+00> : vector<8x324xf32>
    %328 = tpu.matmul %317, %327, %cst_351 {dimension_numbers = #tpu.dot_dimension_numbers<[1], [0], [0], [1], [0, 0, 1, 1], [], []>} : vector<8x72xf32>, vector<72x324xf32>, vector<8x324xf32> -> vector<8x324xf32>
    %c12_352 = arith.constant 12 : index
    %c0_353 = arith.constant 0 : index
    %c0_354 = arith.constant 0 : index
    %329 = vector.load %arg4[%c12_352, %c0_353, %c0_354] : memref<13x8x1xf32, #tpu.memory_space<vmem>>, vector<1x8x1xf32>
    %330 = vector.shape_cast %329 : vector<1x8x1xf32> to vector<8x1xf32>
    %331 = vector.broadcast %330 : vector<8x1xf32> to vector<8x324xf32>
    %332 = arith.addf %328, %331 : vector<8x324xf32>
    %cst_355 = arith.constant 0.000000e+00 : f32
    %333 = vector.broadcast %cst_355 : f32 to vector<8x324xf32>
    %334 = arith.cmpf ogt, %332, %333 : vector<8x324xf32>
    %335 = vector.broadcast %290 : f32 to vector<8x324xf32>
    %336 = arith.mulf %335, %332 : vector<8x324xf32>
    %337 = arith.select %334, %332, %336 : vector<8x324xi1>, vector<8x324xf32>
    %338 = vector.broadcast %0 : vector<1x324xf32> to vector<8x324xf32>
    %339 = arith.mulf %337, %338 : vector<8x324xf32>
    %340 = arith.addf %339, %288 : vector<8x324xf32>
    %c0_356 = arith.constant 0 : index
    %c19_357 = arith.constant 19 : index
    %341 = vector.load %arg8[%c0_356, %c19_357] : memref<8x362xf32, #tpu.memory_space<vmem>>, vector<8x324xf32>
    tpu.vector_store %arg8[%c0_356, %c19_357], %340 {strides = array<i32>} : memref<8x362xf32, #tpu.memory_space<vmem>>, vector<8x324xf32>,
    %c0_358 = arith.constant 0 : index
    %c0_359 = arith.constant 0 : index
    %342 = vector.load %arg5[%c0_358, %c0_359] : memref<4x72xf32, #tpu.memory_space<vmem>>, vector<4x72xf32>
    %c0_360 = arith.constant 0 : index
    %c0_361 = arith.constant 0 : index
    %343 = vector.load %arg8[%c0_360, %c0_361] : memref<8x362xf32, #tpu.memory_space<vmem>>, vector<8x324xf32>
    %c0_362 = arith.constant 0 : index
    %c1_363 = arith.constant 1 : index
    %344 = vector.load %arg8[%c0_362, %c1_363] : memref<8x362xf32, #tpu.memory_space<vmem>>, vector<8x324xf32>
    %c0_364 = arith.constant 0 : index
    %c2_365 = arith.constant 2 : index
    %345 = vector.load %arg8[%c0_364, %c2_365] : memref<8x362xf32, #tpu.memory_space<vmem>>, vector<8x324xf32>
    %c0_366 = arith.constant 0 : index
    %c18_367 = arith.constant 18 : index
    %346 = vector.load %arg8[%c0_366, %c18_367] : memref<8x362xf32, #tpu.memory_space<vmem>>, vector<8x324xf32>
    %c0_368 = arith.constant 0 : index
    %c19_369 = arith.constant 19 : index
    %347 = vector.load %arg8[%c0_368, %c19_369] : memref<8x362xf32, #tpu.memory_space<vmem>>, vector<8x324xf32>
    %c0_370 = arith.constant 0 : index
    %c20_371 = arith.constant 20 : index
    %348 = vector.load %arg8[%c0_370, %c20_371] : memref<8x362xf32, #tpu.memory_space<vmem>>, vector<8x324xf32>
    %c0_372 = arith.constant 0 : index
    %c36_373 = arith.constant 36 : index
    %349 = vector.load %arg8[%c0_372, %c36_373] : memref<8x362xf32, #tpu.memory_space<vmem>>, vector<8x324xf32>
    %c0_374 = arith.constant 0 : index
    %c37_375 = arith.constant 37 : index
    %350 = vector.load %arg8[%c0_374, %c37_375] : memref<8x362xf32, #tpu.memory_space<vmem>>, vector<8x324xf32>
    %c0_376 = arith.constant 0 : index
    %c38_377 = arith.constant 38 : index
    %351 = vector.load %arg8[%c0_376, %c38_377] : memref<8x362xf32, #tpu.memory_space<vmem>>, vector<8x324xf32>
    %352 = tpu.concatenate %343, %344, %345, %346, %347, %348, %349, %350, %351 in 0 : vector<8x324xf32>, vector<8x324xf32>, vector<8x324xf32>, vector<8x324xf32>, vector<8x324xf32>, vector<8x324xf32>, vector<8x324xf32>, vector<8x324xf32>, vector<8x324xf32> -> vector<72x324xf32>
    %cst_378 = arith.constant dense<0.000000e+00> : vector<4x324xf32>
    %353 = tpu.matmul %342, %352, %cst_378 {dimension_numbers = #tpu.dot_dimension_numbers<[1], [0], [0], [1], [0, 0, 1, 1], [], []>} : vector<4x72xf32>, vector<72x324xf32>, vector<4x324xf32> -> vector<4x324xf32>
    %c7_379 = arith.constant 7 : index
    %354 = memref.load %arg1[%c7_379] : memref<8xf32, #tpu.memory_space<smem>>
    %cst_380 = arith.constant 0.000000e+00 : f32
    %355 = vector.broadcast %cst_380 : f32 to vector<4x324xf32>
    %356 = arith.cmpf ogt, %353, %355 : vector<4x324xf32>
    %357 = vector.broadcast %354 : f32 to vector<4x324xf32>
    %358 = arith.mulf %357, %353 : vector<4x324xf32>
    %359 = arith.select %356, %353, %358 : vector<4x324xi1>, vector<4x324xf32>
    %360 = arith.negf %359 : vector<4x324xf32>
    %361 = math.exp %360 : vector<4x324xf32>
    %cst_381 = arith.constant 1.000000e+00 : f32
    %362 = vector.broadcast %cst_381 : f32 to vector<4x324xf32>
    %363 = arith.addf %362, %361 : vector<4x324xf32>
    %364 = arith.divf %362, %363 : vector<4x324xf32>
    %c0_382 = arith.constant 0 : index
    %c0_383 = arith.constant 0 : index
    %c0_384 = arith.constant 0 : index
    %365 = vector.load %arg7[%c0_382, %c0_383, %c0_384] : memref<1x4x324xf32, #tpu.memory_space<vmem>>, vector<1x4x324xf32>
    %366 = vector.shape_cast %365 : vector<1x4x324xf32> to vector<4x324xf32>
    %367 = vector.shape_cast %364 : vector<4x324xf32> to vector<1x4x324xf32>
    tpu.vector_store %arg7[%c0_382, %c0_383, %c0_384], %367 {strides = array<i32>} : memref<1x4x324xf32, #tpu.memory_space<vmem>>, vector<1x4x324xf32>,
    return
  }
  func.func @transform_0(%arg0: i32) -> i32 {
    %c0_i32 = arith.constant 0 : i32
    %c0_i32_0 = arith.constant 0 : i32
    return %c0_i32 : i32
  }
  func.func @transform_1(%arg0: i32) -> (i32, i32, i32) {
    %c0_i32 = arith.constant 0 : i32
    %c0_i32_0 = arith.constant 0 : i32
    %c0_i32_1 = arith.constant 0 : i32
    return %arg0, %c0_i32, %c0_i32_0 : i32, i32, i32
  }
  func.func @transform_2(%arg0: i32) -> (i32, i32, i32) {
    %c0_i32 = arith.constant 0 : i32
    %c0_i32_0 = arith.constant 0 : i32
    %c0_i32_1 = arith.constant 0 : i32
    %c0_i32_2 = arith.constant 0 : i32
    return %c0_i32, %c0_i32_0, %c0_i32_1 : i32, i32, i32
  }
  func.func @transform_3(%arg0: i32) -> (i32, i32, i32) {
    %c0_i32 = arith.constant 0 : i32
    %c0_i32_0 = arith.constant 0 : i32
    %c0_i32_1 = arith.constant 0 : i32
    %c0_i32_2 = arith.constant 0 : i32
    return %c0_i32, %c0_i32_0, %c0_i32_1 : i32, i32, i32
  }
  func.func @transform_4(%arg0: i32) -> (i32, i32) {
    %c0_i32 = arith.constant 0 : i32
    %c0_i32_0 = arith.constant 0 : i32
    %c0_i32_1 = arith.constant 0 : i32
    return %c0_i32, %c0_i32_0 : i32, i32
  }
  func.func @transform_5(%arg0: i32) -> (i32, i32) {
    %c0_i32 = arith.constant 0 : i32
    %c0_i32_0 = arith.constant 0 : i32
    %c0_i32_1 = arith.constant 0 : i32
    return %c0_i32, %c0_i32_0 : i32, i32
  }
  func.func @transform_6(%arg0: i32) -> (i32, i32, i32) {
    %c0_i32 = arith.constant 0 : i32
    %c0_i32_0 = arith.constant 0 : i32
    %c0_i32_1 = arith.constant 0 : i32
    return %arg0, %c0_i32, %c0_i32_0 : i32, i32, i32
  }
}

</mosaic_0001>

<llo_original>
// kernel: att_spatial_forward.1
$region0: #{att_spatial_forward.1}
  #allocation0 [shape = 'u32[]', space=smem, size = 0x4, offset = 0x4, fixed_abs, tag = 'smem constant byte address 0x4 - core index']
  #allocation1 [shape = 'u32[144,128]{1,0:T(1,128)}', space=vmem, size = 0x12000, scoped, tag = 'internal scratch']
  #allocation2 [shape = 'f32[8,362]{1,0:T(8,128)}', space=vmem, size = 0x3000, scoped, tag = 'scratch operand']
  %s0 = inlined_call_operand.vmem [shape: f32[8], index: 0, kind: input, shape index: {}]
  %s1 = inlined_call_operand.vmem [shape: f32[2,8,362], index: 1, kind: input, shape index: {}]
  %s2 = inlined_call_operand.vmem [shape: f32[13,8,72], index: 2, kind: input, shape index: {}]
  %s3 = inlined_call_operand.vmem [shape: f32[13,8,1], index: 3, kind: input, shape index: {}]
  %s4 = inlined_call_operand.vmem [shape: f32[4,72], index: 4, kind: input, shape index: {}]
  %s5 = inlined_call_operand.vmem [shape: f32[1,324], index: 5, kind: input, shape index: {}]
  %s6 = inlined_call_operand.vmem [shape: f32[2,4,324], index: 6, kind: output, shape index: {}]
  %s7 = sld [smem:[#allocation0]]
  $region61: #{att_spatial_forward.1} parent=0
    _
  %s9 = ssub.s32 1, %s7
  %s10 = scalar_select 0, %s9, %s7
  $region1: #{att_spatial_forward.1} parent=0
    #allocation3 [shape = 'u8[512]{0}', space=smem, size = 0x200, scoped, tag = 'input window, operand 0, single buffered']
    #allocation4 [shape = 's32[2]{0}', space=sflag, size = 0x8, scoped, tag = 'scoped memory for att_spatial_forward.1']
    %11 = vsyncpa [#allocation4], 0
    loop: start=0, step=1, limit=4
    $region2: #{att_spatial_forward.1} parent=1 // loop_pre_header
      _
    $region3: #{att_spatial_forward.1} parent=1 // loop_header
      %s13 = sphi 0, %s17
      %p14 = scmp.ge.s32.totalorder %s13, 4
      %s21 = sphi 0, %s21
      %s23 = sphi 0, %s21
      %s24 = sphi 0, %s23
      %s38 = sphi 0, %s24
      %s44 = sphi 0, %s46
      %s47 = sphi 0, %s44
      %s48 = sphi 0, %s47
      %s64 = sphi 0, %s48
      %s68 = sphi 0, %s68
      %s70 = sphi 0, %s68
      %s71 = sphi 0, %s70
      %s85 = sphi 0, %s71
      %s89 = sphi 0, %s89
      %s91 = sphi 0, %s89
      %s92 = sphi 0, %s91
      %s106 = sphi 0, %s92
      %s110 = sphi 0, %s110
      %s112 = sphi 0, %s110
      %s113 = sphi 0, %s112
      %s127 = sphi 0, %s113
      %s131 = sphi 0, %s131
      %s133 = sphi 0, %s131
      %s134 = sphi 0, %s133
      %s148 = sphi 0, %s134
      %s154 = sphi 0, %s156
      %s157 = sphi 0, %s154
      %s158 = sphi 0, %s157
      %s174 = sphi 0, %s158
    $region4: #{att_spatial_forward.1} parent=1 // loop_header_branch
      %16 = sbr.rel (%p14) target = $region8
    $region5: #{att_spatial_forward.1} parent=1 // loop_body
      %s18 = ssub.s32 %s13, 1
      %s19 = ssub.s32 %s13, 2
      %s20 = sadd.s32 %s13, 1
      %s22 = sadd.s32 %s21, 1
      %p25 = scmp.eq.s32.totalorder %s13, 1
      %p26 = scmp.ne.s32.totalorder %s21, %s23
      %p27 = scmp.eq.s32.totalorder %s13, 0
      %p28 = por %p26, %p27
      %p29 = scmp.ne.s32.totalorder %s21, %s23
      %p30 = scmp.eq.s32.totalorder %s18, 1
      %p31 = por %p29, %p30
      %p32 = scmp.ne.s32.totalorder %s23, %s24
      %p33 = scmp.eq.s32.totalorder %s18, 0
      %p34 = por %p32, %p33
      %p35 = scmp.ne.s32.totalorder %s23, %s24
      %p36 = scmp.eq.s32.totalorder %s19, 1
      %p37 = por %p35, %p36
      %p39 = scmp.ne.s32.totalorder %s24, %s38
      %p40 = scmp.eq.s32.totalorder %s19, 0
      %p41 = por %p39, %p40
      %s42 = ssub.s32 %s13, %s20
      %p43 = scmp.eq.s32.totalorder %s42, 0
      %s45 = sadd.s32 %s44, 1
      %s46 = scalar_select %p43, %s44, %s45
      %p49 = pneg %p43
      %p50 = scmp.eq.s32.totalorder %s13, 1
      %p51 = por %p49, %p50
      %p52 = scmp.ne.s32.totalorder %s44, %s47
      %p53 = scmp.eq.s32.totalorder %s13, 0
      %p54 = por %p52, %p53
      %p55 = scmp.ne.s32.totalorder %s44, %s47
      %p56 = scmp.eq.s32.totalorder %s18, 1
      %p57 = por %p55, %p56
      %p58 = scmp.ne.s32.totalorder %s47, %s48
      %p59 = scmp.eq.s32.totalorder %s18, 0
      %p60 = por %p58, %p59
      %p61 = scmp.ne.s32.totalorder %s47, %s48
      %p62 = scmp.eq.s32.totalorder %s19, 1
      %p63 = por %p61, %p62
      %p65 = scmp.ne.s32.totalorder %s48, %s64
      %p66 = scmp.eq.s32.totalorder %s19, 0
      %p67 = por %p65, %p66
      %s69 = sadd.s32 %s68, 1
      %p72 = scmp.eq.s32.totalorder %s13, 1
      %p73 = scmp.ne.s32.totalorder %s68, %s70
      %p74 = scmp.eq.s32.totalorder %s13, 0
      %p75 = por %p73, %p74
      %p76 = scmp.ne.s32.totalorder %s68, %s70
      %p77 = scmp.eq.s32.totalorder %s18, 1
      %p78 = por %p76, %p77
      %p79 = scmp.ne.s32.totalorder %s70, %s71
      %p80 = scmp.eq.s32.totalorder %s18, 0
      %p81 = por %p79, %p80
      %p82 = scmp.ne.s32.totalorder %s70, %s71
      %p83 = scmp.eq.s32.totalorder %s19, 1
      %p84 = por %p82, %p83
      %p86 = scmp.ne.s32.totalorder %s71, %s85
      %p87 = scmp.eq.s32.totalorder %s19, 0
      %p88 = por %p86, %p87
      %s90 = sadd.s32 %s89, 1
      %p93 = scmp.eq.s32.totalorder %s13, 1
      %p94 = scmp.ne.s32.totalorder %s89, %s91
      %p95 = scmp.eq.s32.totalorder %s13, 0
      %p96 = por %p94, %p95
      %p97 = scmp.ne.s32.totalorder %s89, %s91
      %p98 = scmp.eq.s32.totalorder %s18, 1
      %p99 = por %p97, %p98
      %p100 = scmp.ne.s32.totalorder %s91, %s92
      %p101 = scmp.eq.s32.totalorder %s18, 0
      %p102 = por %p100, %p101
      %p103 = scmp.ne.s32.totalorder %s91, %s92
      %p104 = scmp.eq.s32.totalorder %s19, 1
      %p105 = por %p103, %p104
      %p107 = scmp.ne.s32.totalorder %s92, %s106
      %p108 = scmp.eq.s32.totalorder %s19, 0
      %p109 = por %p107, %p108
      %s111 = sadd.s32 %s110, 1
      %p114 = scmp.eq.s32.totalorder %s13, 1
      %p115 = scmp.ne.s32.totalorder %s110, %s112
      %p116 = scmp.eq.s32.totalorder %s13, 0
      %p117 = por %p115, %p116
      %p118 = scmp.ne.s32.totalorder %s110, %s112
      %p119 = scmp.eq.s32.totalorder %s18, 1
      %p120 = por %p118, %p119
      %p121 = scmp.ne.s32.totalorder %s112, %s113
      %p122 = scmp.eq.s32.totalorder %s18, 0
      %p123 = por %p121, %p122
      %p124 = scmp.ne.s32.totalorder %s112, %s113
      %p125 = scmp.eq.s32.totalorder %s19, 1
      %p126 = por %p124, %p125
      %p128 = scmp.ne.s32.totalorder %s113, %s127
      %p129 = scmp.eq.s32.totalorder %s19, 0
      %p130 = por %p128, %p129
      %s132 = sadd.s32 %s131, 1
      %p135 = scmp.eq.s32.totalorder %s13, 1
      %p136 = scmp.ne.s32.totalorder %s131, %s133
      %p137 = scmp.eq.s32.totalorder %s13, 0
      %p138 = por %p136, %p137
      %p139 = scmp.ne.s32.totalorder %s131, %s133
      %p140 = scmp.eq.s32.totalorder %s18, 1
      %p141 = por %p139, %p140
      %p142 = scmp.ne.s32.totalorder %s133, %s134
      %p143 = scmp.eq.s32.totalorder %s18, 0
      %p144 = por %p142, %p143
      %p145 = scmp.ne.s32.totalorder %s133, %s134
      %p146 = scmp.eq.s32.totalorder %s19, 1
      %p147 = por %p145, %p146
      %p149 = scmp.ne.s32.totalorder %s134, %s148
      %p150 = scmp.eq.s32.totalorder %s19, 0
      %p151 = por %p149, %p150
      %s152 = ssub.s32 %s13, %s20
      %p153 = scmp.eq.s32.totalorder %s152, 0
      %s155 = sadd.s32 %s154, 1
      %s156 = scalar_select %p153, %s154, %s155
      %p159 = pneg %p153
      %p160 = scmp.eq.s32.totalorder %s13, 1
      %p161 = por %p159, %p160
      %p162 = scmp.ne.s32.totalorder %s154, %s157
      %p163 = scmp.eq.s32.totalorder %s13, 0
      %p164 = por %p162, %p163
      %p165 = scmp.ne.s32.totalorder %s154, %s157
      %p166 = scmp.eq.s32.totalorder %s18, 1
      %p167 = por %p165, %p166
      %p168 = scmp.ne.s32.totalorder %s157, %s158
      %p169 = scmp.eq.s32.totalorder %s18, 0
      %p170 = por %p168, %p169
      %p171 = scmp.ne.s32.totalorder %s157, %s158
      %p172 = scmp.eq.s32.totalorder %s19, 1
      %p173 = por %p171, %p172
      %p175 = scmp.ne.s32.totalorder %s158, %s174
      %p176 = scmp.eq.s32.totalorder %s19, 0
      %p177 = por %p175, %p176
      %p178 = scmp.le.s32.totalorder 1, %s13
      %p179 = scmp.lt.s32.totalorder %s13, 3
      %p180 = pnand %p178, %p179
      %p181 = pneg %p180
      // Predicated region
      $region9: #{att_spatial_forward.1} parent=5 // pred_check
        _
      $region10: #{att_spatial_forward.1} parent=5 // pred_check_branch
        %183 = sbr.rel (%p180) target = $region12
      $region11: #{att_spatial_forward.1} parent=5 // pred_region
        %s184 = ssub.s32 %s13, 1
        // Predicated region
        $region13: #{att_spatial_forward.1} parent=11 // pred_check
          %p185 = pneg %p34
        $region14: #{att_spatial_forward.1} parent=11 // pred_check_branch
          %187 = sbr.rel (%p185) target = $region16
        $region15: #{att_spatial_forward.1} parent=11 // pred_region
          %s189 = ssub.s32 16, 16
          %190 = vsyncadd [#allocation4], %s189
          %s192 = sshll.u32 %s0, 4
          %s193 = int_to_ptr.vmem [resolvable:$true] %s192
          %195 = dma.vmem_to_smem %s193, 16, [#allocation3], [#allocation4]
        $region16: #{att_spatial_forward.1} parent=11 // pred_fallthru
          _
        // Predicated region
        $region17: #{att_spatial_forward.1} parent=11 // pred_check
          %p196 = pneg %p81
        $region18: #{att_spatial_forward.1} parent=11 // pred_check_branch
          %198 = sbr.rel (%p196) target = $region20
        $region19: #{att_spatial_forward.1} parent=11 // pred_region
          _
        $region20: #{att_spatial_forward.1} parent=11 // pred_fallthru
          _
        // Predicated region
        $region21: #{att_spatial_forward.1} parent=11 // pred_check
          %p199 = pneg %p102
        $region22: #{att_spatial_forward.1} parent=11 // pred_check_branch
          %201 = sbr.rel (%p199) target = $region24
        $region23: #{att_spatial_forward.1} parent=11 // pred_region
          _
        $region24: #{att_spatial_forward.1} parent=11 // pred_fallthru
          _
        // Predicated region
        $region25: #{att_spatial_forward.1} parent=11 // pred_check
          %p202 = pneg %p123
        $region26: #{att_spatial_forward.1} parent=11 // pred_check_branch
          %204 = sbr.rel (%p202) target = $region28
        $region27: #{att_spatial_forward.1} parent=11 // pred_region
          _
        $region28: #{att_spatial_forward.1} parent=11 // pred_fallthru
          _
        // Predicated region
        $region29: #{att_spatial_forward.1} parent=11 // pred_check
          %p205 = pneg %p144
        $region30: #{att_spatial_forward.1} parent=11 // pred_check_branch
          %207 = sbr.rel (%p205) target = $region32
        $region31: #{att_spatial_forward.1} parent=11 // pred_region
          _
        $region32: #{att_spatial_forward.1} parent=11 // pred_fallthru
          _
      $region12: #{att_spatial_forward.1} parent=5 // pred_fallthru
        _
      %p208 = scmp.lt.s32.totalorder %s13, 2
      // Predicated region
      $region33: #{att_spatial_forward.1} parent=5 // pred_check
        %p209 = pneg %p208
      $region34: #{att_spatial_forward.1} parent=5 // pred_check_branch
        %211 = sbr.rel (%p209) target = $region36
      $region35: #{att_spatial_forward.1} parent=5 // pred_region
        // Predicated region
        $region37: #{att_spatial_forward.1} parent=35 // pred_check
          %p212 = pneg %p54
        $region38: #{att_spatial_forward.1} parent=35 // pred_check_branch
          %214 = sbr.rel (%p212) target = $region40
        $region39: #{att_spatial_forward.1} parent=35 // pred_region
          %p215 = scmp.lt.s32.totalorder %s13, 1
          %s216 = scalar_select %p215, %s13, 1
          %s217 = smul.addr %s216, 3
          %s218 = smul.addr %s217, 8
          %s219 = scalar_lea.vmem %s1, %s218
        $region40: #{att_spatial_forward.1} parent=35 // pred_fallthru
          _
      $region36: #{att_spatial_forward.1} parent=5 // pred_fallthru
        _
      %p220 = scmp.le.s32.totalorder 1, %s13
      %p221 = scmp.lt.s32.totalorder %s13, 3
      %p222 = pnand %p220, %p221
      %p223 = pneg %p222
      // Predicated region
      $region41: #{att_spatial_forward.1} parent=5 // pred_check
        _
      $region42: #{att_spatial_forward.1} parent=5 // pred_check_branch
        %225 = sbr.rel (%p222) target = $region44
      $region43: #{att_spatial_forward.1} parent=5 // pred_region
        %s226 = ssub.s32 %s13, 1
        // Predicated region
        $region45: #{att_spatial_forward.1} parent=43 // pred_check
          %p227 = pneg %p34
        $region46: #{att_spatial_forward.1} parent=43 // pred_check_branch
          %229 = sbr.rel (%p227) target = $region48
        $region47: #{att_spatial_forward.1} parent=43 // pred_region
          %230 = dma.done [#allocation4], 16
        $region48: #{att_spatial_forward.1} parent=43 // pred_fallthru
          _
        %231 = sfence
        %p232 = pneg %p34
        %p233 = pneg %p31
        %p234 = scmp.lt.s32.totalorder %s18, 1
        %s235 = scalar_select %p234, %s18, 1
        %s236 = smul.addr %s235, 3
        %s237 = smul.addr %s236, 8
        %s238 = scalar_lea.vmem %s1, %s237
        %p239 = pneg %p60
        %p240 = pneg %p57
        %p241 = pneg %p81
        %p242 = pneg %p78
        %p243 = pneg %p102
        %p244 = pneg %p99
        %p245 = pneg %p123
        %p246 = pneg %p120
        %p247 = pneg %p144
        %p248 = pneg %p141
        %p249 = pneg %p170
        %p250 = pneg %p167
        %p251 = scmp.lt.s32.totalorder %s18, 1
        %s252 = scalar_select %p251, %s18, 1
        %s253 = smul.addr %s252, 3
        %s254 = smul.addr %s253, 4
        %s255 = scalar_lea.vmem %s6, %s254
        %p256 = scmp.lt.s32.totalorder %s18, 1
        %s257 = scalar_select %p256, %s18, 1
        %s258 = smul.addr %s257, 3
        %s259 = smul.addr %s258, 8
        %s260 = scalar_lea.vmem %s1, %s259
        %p261 = scmp.lt.s32.totalorder %s18, 1
        %s262 = scalar_select %p261, %s18, 1
        %s263 = smul.addr %s262, 3
        %s264 = smul.addr %s263, 4
        %s265 = scalar_lea.vmem %s6, %s264
        %v266 = vld [vmem:[%s5] sm:$0x7]
        %v267 = vld [vmem:[%s260] sm:$0xff]
        %v268 = vld [vmem:[%s260 + $0x8] sm:$0xff]
        %v269 = vld [vmem:[%s260 + $0x10] sm:$0xff]
        %270 = vst [vmem:[#allocation2] sm:$0xff] %v267
        %271 = vst [vmem:[#allocation2 + $0x8] sm:$0xff] %v268
        %vm272 = vcmask 867328
        %273 = vst.msk [vmem:[#allocation2 + $0x10] sm:$0xff] %vm272, %v269
        %v274 = vld [vmem:[%s2] sm:$0xff]
        %v275 = vld [vmem:[#allocation2] sm:$0xff]
        %v276 = vld [vmem:[#allocation2 + $0x8] sm:$0xff]
        %v277 = vld [vmem:[#allocation2 + $0x10] sm:$0xff]
        %281 = vrot.lane.b32.xlu0 %v275, 127
        %v282 = vpop.permute.xlu0 %281
        %283 = vrot.lane.b32.xlu0 %v276, 127
        %v284 = vpop.permute.xlu0 %283
        %285 = vrot.lane.b32.xlu0 %v277, 127
        %v286 = vpop.permute.xlu0 %285
        %vm287 = vcmask 1039360
        %v288 = vsel %vm287, %v282, %v284
        %v289 = vsel %vm287, %v284, %v286
        %293 = vrot.lane.b32.xlu0 %v275, 126
        %v294 = vpop.permute.xlu0 %293
        %295 = vrot.lane.b32.xlu0 %v276, 126
        %v296 = vpop.permute.xlu0 %295
        %297 = vrot.lane.b32.xlu0 %v277, 126
        %v298 = vpop.permute.xlu0 %297
        %vm299 = vcmask 1031168
        %v300 = vsel %vm299, %v294, %v296
        %v301 = vsel %vm299, %v296, %v298
        %305 = vrot.lane.b32.xlu0 %v275, 110
        %v306 = vpop.permute.xlu0 %305
        %307 = vrot.lane.b32.xlu0 %v276, 110
        %v308 = vpop.permute.xlu0 %307
        %309 = vrot.lane.b32.xlu0 %v277, 110
        %v310 = vpop.permute.xlu0 %309
        %vm311 = vcmask 900096
        %v312 = vsel %vm311, %v306, %v308
        %v313 = vsel %vm311, %v308, %v310
        %317 = vrot.lane.b32.xlu0 %v275, 109
        %v318 = vpop.permute.xlu0 %317
        %319 = vrot.lane.b32.xlu0 %v276, 109
        %v320 = vpop.permute.xlu0 %319
        %321 = vrot.lane.b32.xlu0 %v277, 109
        %v322 = vpop.permute.xlu0 %321
        %vm323 = vcmask 891904
        %v324 = vsel %vm323, %v318, %v320
        %v325 = vsel %vm323, %v320, %v322
        %329 = vrot.lane.b32.xlu0 %v275, 108
        %v330 = vpop.permute.xlu0 %329
        %331 = vrot.lane.b32.xlu0 %v276, 108
        %v332 = vpop.permute.xlu0 %331
        %333 = vrot.lane.b32.xlu0 %v277, 108
        %v334 = vpop.permute.xlu0 %333
        %vm335 = vcmask 883712
        %v336 = vsel %vm335, %v330, %v332
        %v337 = vsel %vm335, %v332, %v334
        %341 = vrot.lane.b32.xlu0 %v275, 92
        %v342 = vpop.permute.xlu0 %341
        %343 = vrot.lane.b32.xlu0 %v276, 92
        %v344 = vpop.permute.xlu0 %343
        %345 = vrot.lane.b32.xlu0 %v277, 92
        %v346 = vpop.permute.xlu0 %345
        %vm347 = vcmask 752640
        %v348 = vsel %vm347, %v342, %v344
        %v349 = vsel %vm347, %v344, %v346
        %353 = vrot.lane.b32.xlu0 %v275, 91
        %v354 = vpop.permute.xlu0 %353
        %355 = vrot.lane.b32.xlu0 %v276, 91
        %v356 = vpop.permute.xlu0 %355
        %357 = vrot.lane.b32.xlu0 %v277, 91
        %v358 = vpop.permute.xlu0 %357
        %vm359 = vcmask 744448
        %v360 = vsel %vm359, %v354, %v356
        %v361 = vsel %vm359, %v356, %v358
        %365 = vrot.lane.b32.xlu0 %v275, 90
        %v366 = vpop.permute.xlu0 %365
        %367 = vrot.lane.b32.xlu0 %v276, 90
        %v368 = vpop.permute.xlu0 %367
        %369 = vrot.lane.b32.xlu0 %v277, 90
        %v370 = vpop.permute.xlu0 %369
        %vm371 = vcmask 736256
        %v372 = vsel %vm371, %v366, %v368
        %v373 = vsel %vm371, %v368, %v370
        %v377 = vld [vmem:[%s3] sm:$0xff]
        %379 = vset.pattern.permute.xlu0 0
        %380 = vperm.xlu0 %379, %v377
        %v381 = vpop.permute.xlu0 %380
        %vm383 = vcmask 588800
        %v385 = vsel %vm383, %v274, 0
        %387 = vmatprep.subr.mxu0 %v276
        %388 = vmatpush1.msra.mxu0 %v275
        %389 = vmatprep.subr.mxu0 %v289
        %390 = vmatpush1.msra.mxu0 %v288
        %391 = vmatprep.subr.mxu0 %v301
        %392 = vmatpush1.msra.mxu0 %v300
        %393 = vmatprep.subr.mxu0 %v313
        %394 = vmatpush1.msra.mxu0 %v312
        %395 = vmatprep.subr.mxu0 %v325
        %396 = vmatpush1.msra.mxu0 %v324
        %397 = vmatprep.subr.mxu0 %v337
        %398 = vmatpush1.msra.mxu0 %v336
        %399 = vmatprep.subr.mxu0 %v349
        %400 = vmatpush1.msra.mxu0 %v348
        %401 = vmatprep.subr.mxu0 %v361
        %402 = vmatpush1.msra.mxu0 %v360
        %403 = vmatprep.subr.mxu0 %v373
        %404 = vmatpush1.msra.mxu0 %v372
        %405 = vmatprep.subr.mxu0 0.0
        %406 = vmatpush1.msra.mxu0 0.0
        %407 = vmatprep.subr.mxu0 0.0
        %408 = vmatpush1.msra.mxu0 0.0
        %409 = vmatprep.subr.mxu0 0.0
        %410 = vmatpush1.msra.mxu0 0.0
        %411 = vmatprep.subr.mxu0 0.0
        %412 = vmatpush1.msra.mxu0 0.0
        %413 = vmatprep.subr.mxu0 0.0
        %414 = vmatpush1.msra.mxu0 0.0
        %415 = vmatprep.subr.mxu0 0.0
        %416 = vmatpush1.msra.mxu0 0.0
        %417 = vmatprep.subr.mxu0 0.0
        %418 = vmatpush1.msra.mxu0 0.0
        %419 = vmatprep.subr.mxu0 0.0
        %420 = vmatpush1.msra.mxu0 0.0
        %421 = vmatprep.subr.mxu0 0.0
        %422 = vmatpush1.msra.mxu0 0.0
        %423 = vmatprep.subr.mxu0 0.0
        %424 = vmatpush1.msra.mxu0 0.0
        %425 = vmatprep.subr.mxu0 0.0
        %426 = vmatpush1.msra.mxu0 0.0
        %427 = vmatprep.subr.mxu0 0.0
        %428 = vmatpush1.msra.mxu0 0.0
        %429 = vmatprep.subr.mxu0 0.0
        %430 = vmatpush1.msra.mxu0 0.0
        %431 = vmatprep.subr.mxu0 0.0
        %432 = vmatpush1.msra.mxu0 0.0
        %433 = vmatprep.subr.mxu0 0.0
        %434 = vmatpush1.msra.mxu0 0.0
        %435 = vmatprep.subr.mxu0 0.0
        %436 = vmatpush1.msra.mxu0 0.0
        %437 = vmatprep.subr.mxu0 0.0
        %438 = vmatpush1.msra.mxu0 0.0
        %439 = vmatprep.subr.mxu0 0.0
        %440 = vmatpush1.msra.mxu0 0.0
        %441 = vmatprep.subr.mxu0 0.0
        %442 = vmatpush1.msra.mxu0 0.0
        %443 = vmatprep.subr.mxu0 0.0
        %444 = vmatpush1.msra.mxu0 0.0
        %445 = vmatprep.subr.mxu0 0.0
        %446 = vmatpush1.msra.mxu0 0.0
        %447 = vmatprep.subr.mxu0 0.0
        %448 = vmatpush1.msra.mxu0 0.0
        %449 = vmatprep.subr.mxu0 0.0
        %450 = vmatpush1.msra.mxu0 0.0
        %451 = vmatprep.mubr.f32.mxu0 0.0
        %452 = vmatmul.mubr.f32.gmra.mrb[0].mxu0 %v385
        %v453 = vpop.f32.mrb[0].mxu0
        %v454 = vadd.f32 %v381, %v453
        %v455 = vpop.f32.mrb[0].mxu0
        %v456 = vadd.f32 %v381, %v455
        %457 = vdwg.mxu0
        %458 = vmatprep.subr.mxu0 0.0
        %459 = vmatpush1.msra.mxu0 %v277
        %460 = vmatprep.subr.mxu0 0.0
        %461 = vmatpush1.msra.mxu0 %v286
        %462 = vmatprep.subr.mxu0 0.0
        %463 = vmatpush1.msra.mxu0 %v298
        %464 = vmatprep.subr.mxu0 0.0
        %465 = vmatpush1.msra.mxu0 %v310
        %466 = vmatprep.subr.mxu0 0.0
        %467 = vmatpush1.msra.mxu0 %v322
        %468 = vmatprep.subr.mxu0 0.0
        %469 = vmatpush1.msra.mxu0 %v334
        %470 = vmatprep.subr.mxu0 0.0
        %471 = vmatpush1.msra.mxu0 %v346
        %472 = vmatprep.subr.mxu0 0.0
        %473 = vmatpush1.msra.mxu0 %v358
        %474 = vmatprep.subr.mxu0 0.0
        %475 = vmatpush1.msra.mxu0 %v370
        %476 = vmatprep.subr.mxu0 0.0
        %477 = vmatpush1.msra.mxu0 0.0
        %478 = vmatprep.subr.mxu0 0.0
        %479 = vmatpush1.msra.mxu0 0.0
        %480 = vmatprep.subr.mxu0 0.0
        %481 = vmatpush1.msra.mxu0 0.0
        %482 = vmatprep.subr.mxu0 0.0
        %483 = vmatpush1.msra.mxu0 0.0
        %484 = vmatprep.subr.mxu0 0.0
        %485 = vmatpush1.msra.mxu0 0.0
        %486 = vmatprep.subr.mxu0 0.0
        %487 = vmatpush1.msra.mxu0 0.0
        %488 = vmatprep.subr.mxu0 0.0
        %489 = vmatpush1.msra.mxu0 0.0
        %490 = vmatprep.subr.mxu0 0.0
        %491 = vmatpush1.msra.mxu0 0.0
        %492 = vmatprep.subr.mxu0 0.0
        %493 = vmatpush1.msra.mxu0 0.0
        %494 = vmatprep.subr.mxu0 0.0
        %495 = vmatpush1.msra.mxu0 0.0
        %496 = vmatprep.subr.mxu0 0.0
        %497 = vmatpush1.msra.mxu0 0.0
        %498 = vmatprep.subr.mxu0 0.0
        %499 = vmatpush1.msra.mxu0 0.0
        %500 = vmatprep.subr.mxu0 0.0
        %501 = vmatpush1.msra.mxu0 0.0
        %502 = vmatprep.subr.mxu0 0.0
        %503 = vmatpush1.msra.mxu0 0.0
        %504 = vmatprep.subr.mxu0 0.0
        %505 = vmatpush1.msra.mxu0 0.0
        %506 = vmatprep.subr.mxu0 0.0
        %507 = vmatpush1.msra.mxu0 0.0
        %508 = vmatprep.subr.mxu0 0.0
        %509 = vmatpush1.msra.mxu0 0.0
        %510 = vmatprep.subr.mxu0 0.0
        %511 = vmatpush1.msra.mxu0 0.0
        %512 = vmatprep.subr.mxu0 0.0
        %513 = vmatpush1.msra.mxu0 0.0
        %514 = vmatprep.subr.mxu0 0.0
        %515 = vmatpush1.msra.mxu0 0.0
        %516 = vmatprep.subr.mxu0 0.0
        %517 = vmatpush1.msra.mxu0 0.0
        %518 = vmatprep.subr.mxu0 0.0
        %519 = vmatpush1.msra.mxu0 0.0
        %520 = vmatprep.subr.mxu0 0.0
        %521 = vmatpush1.msra.mxu0 0.0
        %522 = vmatprep.mubr.f32.mxu0 0.0
        %523 = vmatmul.mubr.f32.gmra.mrb[0].mxu0 %v385
        %v524 = vpop.f32.mrb[0].mxu0
        %v525 = vadd.f32 %v381, %v524
        %v526 = vpop.f32.mrb[0].mxu0
        %527 = vdwg.mxu0
        %s528 = sld [smem:[#allocation3]]
        %vm529 = vcmp.gt.f32.partialorder %v454, 0.0
        %vm530 = vcmp.gt.f32.partialorder %v456, 0.0
        %vm531 = vcmp.gt.f32.partialorder %v525, 0.0
        %v532 = vstv %s528
        %v533 = vmul.f32 %v532, %v454
        %v534 = vmul.f32 %v532, %v456
        %v535 = vmul.f32 %v532, %v525
        %v536 = vsel %vm529, %v454, %v533
        %v537 = vsel %vm530, %v456, %v534
        %v538 = vsel %vm531, %v525, %v535
        %v540 = vlaneseq
        %v541 = vshrl.u32 %v540, 7
        %v542 = vsub.s32 0, %v541
        %v543 = vrot.slane %v266, %v542
        %v544 = vlaneseq
        %v545 = vshrl.u32 %v544, 7
        %v546 = vsub.s32 1, %v545
        %v547 = vrot.slane %v266, %v546
        %v548 = vlaneseq
        %v549 = vshrl.u32 %v548, 7
        %v550 = vsub.s32 2, %v549
        %v551 = vrot.slane %v266, %v550
        %v555 = vmul.f32 %v536, %v543
        %v556 = vmul.f32 %v537, %v547
        %v557 = vmul.f32 %v538, %v551
        %561 = vrot.lane.b32.xlu0 %v555, 19
        %v562 = vpop.permute.xlu0 %561
        %563 = vrot.lane.b32.xlu0 %v556, 19
        %v564 = vpop.permute.xlu0 %563
        %565 = vrot.lane.b32.xlu0 %v557, 19
        %v566 = vpop.permute.xlu0 %565
        %vm567 = vcmask 154624
        %v568 = vsel %vm567, %v562, %v564
        %v569 = vsel %vm567, %v564, %v566
        %vm573 = vcmask 1047704
        %574 = vst.msk [vmem:[#allocation2] sm:$0xff] %vm573, %v562
        %575 = vst [vmem:[#allocation2 + $0x8] sm:$0xff] %v568
        %vm576 = vcmask 711680
        %577 = vst.msk [vmem:[#allocation2 + $0x10] sm:$0xff] %vm576, %v569
        %s578 = sld [smem:[#allocation3 + $0x1]]
        %s579 = scalar_lea.vmem %s2, 8
        %v580 = vld [vmem:[%s579] sm:$0xff]
        %v581 = vld [vmem:[#allocation2] sm:$0xff]
        %v582 = vld [vmem:[#allocation2 + $0x8] sm:$0xff]
        %v583 = vld [vmem:[#allocation2 + $0x10] sm:$0xff]
        %587 = vrot.lane.b32.xlu0 %v581, 127
        %v588 = vpop.permute.xlu0 %587
        %589 = vrot.lane.b32.xlu0 %v582, 127
        %v590 = vpop.permute.xlu0 %589
        %591 = vrot.lane.b32.xlu0 %v583, 127
        %v592 = vpop.permute.xlu0 %591
        %v593 = vsel %vm287, %v588, %v590
        %v594 = vsel %vm287, %v590, %v592
        %598 = vrot.lane.b32.xlu0 %v581, 126
        %v599 = vpop.permute.xlu0 %598
        %600 = vrot.lane.b32.xlu0 %v582, 126
        %v601 = vpop.permute.xlu0 %600
        %602 = vrot.lane.b32.xlu0 %v583, 126
        %v603 = vpop.permute.xlu0 %602
        %v604 = vsel %vm299, %v599, %v601
        %v605 = vsel %vm299, %v601, %v603
        %609 = vrot.lane.b32.xlu0 %v581, 110
        %v610 = vpop.permute.xlu0 %609
        %611 = vrot.lane.b32.xlu0 %v582, 110
        %v612 = vpop.permute.xlu0 %611
        %613 = vrot.lane.b32.xlu0 %v583, 110
        %v614 = vpop.permute.xlu0 %613
        %v615 = vsel %vm311, %v610, %v612
        %v616 = vsel %vm311, %v612, %v614
        %620 = vrot.lane.b32.xlu0 %v581, 109
        %v621 = vpop.permute.xlu0 %620
        %622 = vrot.lane.b32.xlu0 %v582, 109
        %v623 = vpop.permute.xlu0 %622
        %624 = vrot.lane.b32.xlu0 %v583, 109
        %v625 = vpop.permute.xlu0 %624
        %v626 = vsel %vm323, %v621, %v623
        %v627 = vsel %vm323, %v623, %v625
        %631 = vrot.lane.b32.xlu0 %v581, 108
        %v632 = vpop.permute.xlu0 %631
        %633 = vrot.lane.b32.xlu0 %v582, 108
        %v634 = vpop.permute.xlu0 %633
        %635 = vrot.lane.b32.xlu0 %v583, 108
        %v636 = vpop.permute.xlu0 %635
        %v637 = vsel %vm335, %v632, %v634
        %v638 = vsel %vm335, %v634, %v636
        %642 = vrot.lane.b32.xlu0 %v581, 92
        %v643 = vpop.permute.xlu0 %642
        %644 = vrot.lane.b32.xlu0 %v582, 92
        %v645 = vpop.permute.xlu0 %644
        %646 = vrot.lane.b32.xlu0 %v583, 92
        %v647 = vpop.permute.xlu0 %646
        %v648 = vsel %vm347, %v643, %v645
        %v649 = vsel %vm347, %v645, %v647
        %653 = vrot.lane.b32.xlu0 %v581, 91
        %v654 = vpop.permute.xlu0 %653
        %655 = vrot.lane.b32.xlu0 %v582, 91
        %v656 = vpop.permute.xlu0 %655
        %657 = vrot.lane.b32.xlu0 %v583, 91
        %v658 = vpop.permute.xlu0 %657
        %v659 = vsel %vm359, %v654, %v656
        %v660 = vsel %vm359, %v656, %v658
        %664 = vrot.lane.b32.xlu0 %v581, 90
        %v665 = vpop.permute.xlu0 %664
        %666 = vrot.lane.b32.xlu0 %v582, 90
        %v667 = vpop.permute.xlu0 %666
        %668 = vrot.lane.b32.xlu0 %v583, 90
        %v669 = vpop.permute.xlu0 %668
        %v670 = vsel %vm371, %v665, %v667
        %v671 = vsel %vm371, %v667, %v669
        %s675 = scalar_lea.vmem %s3, 8
        %v676 = vld [vmem:[%s675] sm:$0xff]
        %678 = vset.pattern.permute.xlu0 0
        %679 = vperm.xlu0 %678, %v676
        %v680 = vpop.permute.xlu0 %679
        %v683 = vsel %vm383, %v580, 0
        %685 = vmatprep.subr.mxu0 %v582
        %686 = vmatpush1.msra.mxu0 %v581
        %687 = vmatprep.subr.mxu0 %v594
        %688 = vmatpush1.msra.mxu0 %v593
        %689 = vmatprep.subr.mxu0 %v605
        %690 = vmatpush1.msra.mxu0 %v604
        %691 = vmatprep.subr.mxu0 %v616
        %692 = vmatpush1.msra.mxu0 %v615
        %693 = vmatprep.subr.mxu0 %v627
        %694 = vmatpush1.msra.mxu0 %v626
        %695 = vmatprep.subr.mxu0 %v638
        %696 = vmatpush1.msra.mxu0 %v637
        %697 = vmatprep.subr.mxu0 %v649
        %698 = vmatpush1.msra.mxu0 %v648
        %699 = vmatprep.subr.mxu0 %v660
        %700 = vmatpush1.msra.mxu0 %v659
        %701 = vmatprep.subr.mxu0 %v671
        %702 = vmatpush1.msra.mxu0 %v670
        %703 = vmatprep.subr.mxu0 0.0
        %704 = vmatpush1.msra.mxu0 0.0
        %705 = vmatprep.subr.mxu0 0.0
        %706 = vmatpush1.msra.mxu0 0.0
        %707 = vmatprep.subr.mxu0 0.0
        %708 = vmatpush1.msra.mxu0 0.0
        %709 = vmatprep.subr.mxu0 0.0
        %710 = vmatpush1.msra.mxu0 0.0
        %711 = vmatprep.subr.mxu0 0.0
        %712 = vmatpush1.msra.mxu0 0.0
        %713 = vmatprep.subr.mxu0 0.0
        %714 = vmatpush1.msra.mxu0 0.0
        %715 = vmatprep.subr.mxu0 0.0
        %716 = vmatpush1.msra.mxu0 0.0
        %717 = vmatprep.subr.mxu0 0.0
        %718 = vmatpush1.msra.mxu0 0.0
        %719 = vmatprep.subr.mxu0 0.0
        %720 = vmatpush1.msra.mxu0 0.0
        %721 = vmatprep.subr.mxu0 0.0
        %722 = vmatpush1.msra.mxu0 0.0
        %723 = vmatprep.subr.mxu0 0.0
        %724 = vmatpush1.msra.mxu0 0.0
        %725 = vmatprep.subr.mxu0 0.0
        %726 = vmatpush1.msra.mxu0 0.0
        %727 = vmatprep.subr.mxu0 0.0
        %728 = vmatpush1.msra.mxu0 0.0
        %729 = vmatprep.subr.mxu0 0.0
        %730 = vmatpush1.msra.mxu0 0.0
        %731 = vmatprep.subr.mxu0 0.0
        %732 = vmatpush1.msra.mxu0 0.0
        %733 = vmatprep.subr.mxu0 0.0
        %734 = vmatpush1.msra.mxu0 0.0
        %735 = vmatprep.subr.mxu0 0.0
        %736 = vmatpush1.msra.mxu0 0.0
        %737 = vmatprep.subr.mxu0 0.0
        %738 = vmatpush1.msra.mxu0 0.0
        %739 = vmatprep.subr.mxu0 0.0
        %740 = vmatpush1.msra.mxu0 0.0
        %741 = vmatprep.subr.mxu0 0.0
        %742 = vmatpush1.msra.mxu0 0.0
        %743 = vmatprep.subr.mxu0 0.0
        %744 = vmatpush1.msra.mxu0 0.0
        %745 = vmatprep.subr.mxu0 0.0
        %746 = vmatpush1.msra.mxu0 0.0
        %747 = vmatprep.subr.mxu0 0.0
        %748 = vmatpush1.msra.mxu0 0.0
        %749 = vmatprep.mubr.f32.mxu0 0.0
        %750 = vmatmul.mubr.f32.gmra.mrb[0].mxu0 %v683
        %v751 = vpop.f32.mrb[0].mxu0
        %v752 = vadd.f32 %v680, %v751
        %v753 = vpop.f32.mrb[0].mxu0
        %v754 = vadd.f32 %v680, %v753
        %755 = vdwg.mxu0
        %756 = vmatprep.subr.mxu0 0.0
        %757 = vmatpush1.msra.mxu0 %v583
        %758 = vmatprep.subr.mxu0 0.0
        %759 = vmatpush1.msra.mxu0 %v592
        %760 = vmatprep.subr.mxu0 0.0
        %761 = vmatpush1.msra.mxu0 %v603
        %762 = vmatprep.subr.mxu0 0.0
        %763 = vmatpush1.msra.mxu0 %v614
        %764 = vmatprep.subr.mxu0 0.0
        %765 = vmatpush1.msra.mxu0 %v625
        %766 = vmatprep.subr.mxu0 0.0
        %767 = vmatpush1.msra.mxu0 %v636
        %768 = vmatprep.subr.mxu0 0.0
        %769 = vmatpush1.msra.mxu0 %v647
        %770 = vmatprep.subr.mxu0 0.0
        %771 = vmatpush1.msra.mxu0 %v658
        %772 = vmatprep.subr.mxu0 0.0
        %773 = vmatpush1.msra.mxu0 %v669
        %774 = vmatprep.subr.mxu0 0.0
        %775 = vmatpush1.msra.mxu0 0.0
        %776 = vmatprep.subr.mxu0 0.0
        %777 = vmatpush1.msra.mxu0 0.0
        %778 = vmatprep.subr.mxu0 0.0
        %779 = vmatpush1.msra.mxu0 0.0
        %780 = vmatprep.subr.mxu0 0.0
        %781 = vmatpush1.msra.mxu0 0.0
        %782 = vmatprep.subr.mxu0 0.0
        %783 = vmatpush1.msra.mxu0 0.0
        %784 = vmatprep.subr.mxu0 0.0
        %785 = vmatpush1.msra.mxu0 0.0
        %786 = vmatprep.subr.mxu0 0.0
        %787 = vmatpush1.msra.mxu0 0.0
        %788 = vmatprep.subr.mxu0 0.0
        %789 = vmatpush1.msra.mxu0 0.0
        %790 = vmatprep.subr.mxu0 0.0
        %791 = vmatpush1.msra.mxu0 0.0
        %792 = vmatprep.subr.mxu0 0.0
        %793 = vmatpush1.msra.mxu0 0.0
        %794 = vmatprep.subr.mxu0 0.0
        %795 = vmatpush1.msra.mxu0 0.0
        %796 = vmatprep.subr.mxu0 0.0
        %797 = vmatpush1.msra.mxu0 0.0
        %798 = vmatprep.subr.mxu0 0.0
        %799 = vmatpush1.msra.mxu0 0.0
        %800 = vmatprep.subr.mxu0 0.0
        %801 = vmatpush1.msra.mxu0 0.0
        %802 = vmatprep.subr.mxu0 0.0
        %803 = vmatpush1.msra.mxu0 0.0
        %804 = vmatprep.subr.mxu0 0.0
        %805 = vmatpush1.msra.mxu0 0.0
        %806 = vmatprep.subr.mxu0 0.0
        %807 = vmatpush1.msra.mxu0 0.0
        %808 = vmatprep.subr.mxu0 0.0
        %809 = vmatpush1.msra.mxu0 0.0
        %810 = vmatprep.subr.mxu0 0.0
        %811 = vmatpush1.msra.mxu0 0.0
        %812 = vmatprep.subr.mxu0 0.0
        %813 = vmatpush1.msra.mxu0 0.0
        %814 = vmatprep.subr.mxu0 0.0
        %815 = vmatpush1.msra.mxu0 0.0
        %816 = vmatprep.subr.mxu0 0.0
        %817 = vmatpush1.msra.mxu0 0.0
        %818 = vmatprep.subr.mxu0 0.0
        %819 = vmatpush1.msra.mxu0 0.0
        %820 = vmatprep.mubr.f32.mxu0 0.0
        %821 = vmatmul.mubr.f32.gmra.mrb[0].mxu0 %v683
        %v822 = vpop.f32.mrb[0].mxu0
        %v823 = vadd.f32 %v680, %v822
        %v824 = vpop.f32.mrb[0].mxu0
        %825 = vdwg.mxu0
        %vm826 = vcmp.gt.f32.partialorder %v752, 0.0
        %vm827 = vcmp.gt.f32.partialorder %v754, 0.0
        %vm828 = vcmp.gt.f32.partialorder %v823, 0.0
        %v829 = vstv %s578
        %v830 = vmul.f32 %v829, %v752
        %v831 = vmul.f32 %v829, %v754
        %v832 = vmul.f32 %v829, %v823
        %v833 = vsel %vm826, %v752, %v830
        %v834 = vsel %vm827, %v754, %v831
        %v835 = vsel %vm828, %v823, %v832
        %v836 = vmul.f32 %v833, %v543
        %v837 = vmul.f32 %v834, %v547
        %v838 = vmul.f32 %v835, %v551
        %842 = vrot.lane.b32.xlu0 %v836, 19
        %v843 = vpop.permute.xlu0 %842
        %844 = vrot.lane.b32.xlu0 %v837, 19
        %v845 = vpop.permute.xlu0 %844
        %846 = vrot.lane.b32.xlu0 %v838, 19
        %v847 = vpop.permute.xlu0 %846
        %v848 = vsel %vm567, %v843, %v845
        %v849 = vsel %vm567, %v845, %v847
        %853 = vst.msk [vmem:[#allocation2] sm:$0xff] %vm573, %v843
        %854 = vst [vmem:[#allocation2 + $0x8] sm:$0xff] %v848
        %855 = vst.msk [vmem:[#allocation2 + $0x10] sm:$0xff] %vm576, %v849
        %s856 = scalar_lea.vmem %s2, 16
        %v857 = vld [vmem:[%s856] sm:$0xff]
        %v858 = vld [vmem:[#allocation2] sm:$0xff]
        %v859 = vld [vmem:[#allocation2 + $0x8] sm:$0xff]
        %v860 = vld [vmem:[#allocation2 + $0x10] sm:$0xff]
        %864 = vrot.lane.b32.xlu0 %v858, 127
        %v865 = vpop.permute.xlu0 %864
        %866 = vrot.lane.b32.xlu0 %v859, 127
        %v867 = vpop.permute.xlu0 %866
        %868 = vrot.lane.b32.xlu0 %v860, 127
        %v869 = vpop.permute.xlu0 %868
        %v870 = vsel %vm287, %v865, %v867
        %v871 = vsel %vm287, %v867, %v869
        %875 = vrot.lane.b32.xlu0 %v858, 126
        %v876 = vpop.permute.xlu0 %875
        %877 = vrot.lane.b32.xlu0 %v859, 126
        %v878 = vpop.permute.xlu0 %877
        %879 = vrot.lane.b32.xlu0 %v860, 126
        %v880 = vpop.permute.xlu0 %879
        %v881 = vsel %vm299, %v876, %v878
        %v882 = vsel %vm299, %v878, %v880
        %886 = vrot.lane.b32.xlu0 %v858, 110
        %v887 = vpop.permute.xlu0 %886
        %888 = vrot.lane.b32.xlu0 %v859, 110
        %v889 = vpop.permute.xlu0 %888
        %890 = vrot.lane.b32.xlu0 %v860, 110
        %v891 = vpop.permute.xlu0 %890
        %v892 = vsel %vm311, %v887, %v889
        %v893 = vsel %vm311, %v889, %v891
        %897 = vrot.lane.b32.xlu0 %v858, 109
        %v898 = vpop.permute.xlu0 %897
        %899 = vrot.lane.b32.xlu0 %v859, 109
        %v900 = vpop.permute.xlu0 %899
        %901 = vrot.lane.b32.xlu0 %v860, 109
        %v902 = vpop.permute.xlu0 %901
        %v903 = vsel %vm323, %v898, %v900
        %v904 = vsel %vm323, %v900, %v902
        %908 = vrot.lane.b32.xlu0 %v858, 108
        %v909 = vpop.permute.xlu0 %908
        %910 = vrot.lane.b32.xlu0 %v859, 108
        %v911 = vpop.permute.xlu0 %910
        %912 = vrot.lane.b32.xlu0 %v860, 108
        %v913 = vpop.permute.xlu0 %912
        %v914 = vsel %vm335, %v909, %v911
        %v915 = vsel %vm335, %v911, %v913
        %919 = vrot.lane.b32.xlu0 %v858, 92
        %v920 = vpop.permute.xlu0 %919
        %921 = vrot.lane.b32.xlu0 %v859, 92
        %v922 = vpop.permute.xlu0 %921
        %923 = vrot.lane.b32.xlu0 %v860, 92
        %v924 = vpop.permute.xlu0 %923
        %v925 = vsel %vm347, %v920, %v922
        %v926 = vsel %vm347, %v922, %v924
        %930 = vrot.lane.b32.xlu0 %v858, 91
        %v931 = vpop.permute.xlu0 %930
        %932 = vrot.lane.b32.xlu0 %v859, 91
        %v933 = vpop.permute.xlu0 %932
        %934 = vrot.lane.b32.xlu0 %v860, 91
        %v935 = vpop.permute.xlu0 %934
        %v936 = vsel %vm359, %v931, %v933
        %v937 = vsel %vm359, %v933, %v935
        %941 = vrot.lane.b32.xlu0 %v858, 90
        %v942 = vpop.permute.xlu0 %941
        %943 = vrot.lane.b32.xlu0 %v859, 90
        %v944 = vpop.permute.xlu0 %943
        %945 = vrot.lane.b32.xlu0 %v860, 90
        %v946 = vpop.permute.xlu0 %945
        %v947 = vsel %vm371, %v942, %v944
        %v948 = vsel %vm371, %v944, %v946
        %s952 = scalar_lea.vmem %s3, 16
        %v953 = vld [vmem:[%s952] sm:$0xff]
        %955 = vset.pattern.permute.xlu0 0
        %956 = vperm.xlu0 %955, %v953
        %v957 = vpop.permute.xlu0 %956
        %v960 = vsel %vm383, %v857, 0
        %962 = vmatprep.subr.mxu0 %v859
        %963 = vmatpush1.msra.mxu0 %v858
        %964 = vmatprep.subr.mxu0 %v871
        %965 = vmatpush1.msra.mxu0 %v870
        %966 = vmatprep.subr.mxu0 %v882
        %967 = vmatpush1.msra.mxu0 %v881
        %968 = vmatprep.subr.mxu0 %v893
        %969 = vmatpush1.msra.mxu0 %v892
        %970 = vmatprep.subr.mxu0 %v904
        %971 = vmatpush1.msra.mxu0 %v903
        %972 = vmatprep.subr.mxu0 %v915
        %973 = vmatpush1.msra.mxu0 %v914
        %974 = vmatprep.subr.mxu0 %v926
        %975 = vmatpush1.msra.mxu0 %v925
        %976 = vmatprep.subr.mxu0 %v937
        %977 = vmatpush1.msra.mxu0 %v936
        %978 = vmatprep.subr.mxu0 %v948
        %979 = vmatpush1.msra.mxu0 %v947
        %980 = vmatprep.subr.mxu0 0.0
        %981 = vmatpush1.msra.mxu0 0.0
        %982 = vmatprep.subr.mxu0 0.0
        %983 = vmatpush1.msra.mxu0 0.0
        %984 = vmatprep.subr.mxu0 0.0
        %985 = vmatpush1.msra.mxu0 0.0
        %986 = vmatprep.subr.mxu0 0.0
        %987 = vmatpush1.msra.mxu0 0.0
        %988 = vmatprep.subr.mxu0 0.0
        %989 = vmatpush1.msra.mxu0 0.0
        %990 = vmatprep.subr.mxu0 0.0
        %991 = vmatpush1.msra.mxu0 0.0
        %992 = vmatprep.subr.mxu0 0.0
        %993 = vmatpush1.msra.mxu0 0.0
        %994 = vmatprep.subr.mxu0 0.0
        %995 = vmatpush1.msra.mxu0 0.0
        %996 = vmatprep.subr.mxu0 0.0
        %997 = vmatpush1.msra.mxu0 0.0
        %998 = vmatprep.subr.mxu0 0.0
        %999 = vmatpush1.msra.mxu0 0.0
        %1000 = vmatprep.subr.mxu0 0.0
        %1001 = vmatpush1.msra.mxu0 0.0
        %1002 = vmatprep.subr.mxu0 0.0
        %1003 = vmatpush1.msra.mxu0 0.0
        %1004 = vmatprep.subr.mxu0 0.0
        %1005 = vmatpush1.msra.mxu0 0.0
        %1006 = vmatprep.subr.mxu0 0.0
        %1007 = vmatpush1.msra.mxu0 0.0
        %1008 = vmatprep.subr.mxu0 0.0
        %1009 = vmatpush1.msra.mxu0 0.0
        %1010 = vmatprep.subr.mxu0 0.0
        %1011 = vmatpush1.msra.mxu0 0.0
        %1012 = vmatprep.subr.mxu0 0.0
        %1013 = vmatpush1.msra.mxu0 0.0
        %1014 = vmatprep.subr.mxu0 0.0
        %1015 = vmatpush1.msra.mxu0 0.0
        %1016 = vmatprep.subr.mxu0 0.0
        %1017 = vmatpush1.msra.mxu0 0.0
        %1018 = vmatprep.subr.mxu0 0.0
        %1019 = vmatpush1.msra.mxu0 0.0
        %1020 = vmatprep.subr.mxu0 0.0
        %1021 = vmatpush1.msra.mxu0 0.0
        %1022 = vmatprep.subr.mxu0 0.0
        %1023 = vmatpush1.msra.mxu0 0.0
        %1024 = vmatprep.subr.mxu0 0.0
        %1025 = vmatpush1.msra.mxu0 0.0
        %1026 = vmatprep.mubr.f32.mxu0 0.0
        %1027 = vmatmul.mubr.f32.gmra.mrb[0].mxu0 %v960
        %v1028 = vpop.f32.mrb[0].mxu0
        %v1029 = vadd.f32 %v957, %v1028
        %v1030 = vpop.f32.mrb[0].mxu0
        %v1031 = vadd.f32 %v957, %v1030
        %1032 = vdwg.mxu0
        %1033 = vmatprep.subr.mxu0 0.0
        %1034 = vmatpush1.msra.mxu0 %v860
        %1035 = vmatprep.subr.mxu0 0.0
        %1036 = vmatpush1.msra.mxu0 %v869
        %1037 = vmatprep.subr.mxu0 0.0
        %1038 = vmatpush1.msra.mxu0 %v880
        %1039 = vmatprep.subr.mxu0 0.0
        %1040 = vmatpush1.msra.mxu0 %v891
        %1041 = vmatprep.subr.mxu0 0.0
        %1042 = vmatpush1.msra.mxu0 %v902
        %1043 = vmatprep.subr.mxu0 0.0
        %1044 = vmatpush1.msra.mxu0 %v913
        %1045 = vmatprep.subr.mxu0 0.0
        %1046 = vmatpush1.msra.mxu0 %v924
        %1047 = vmatprep.subr.mxu0 0.0
        %1048 = vmatpush1.msra.mxu0 %v935
        %1049 = vmatprep.subr.mxu0 0.0
        %1050 = vmatpush1.msra.mxu0 %v946
        %1051 = vmatprep.subr.mxu0 0.0
        %1052 = vmatpush1.msra.mxu0 0.0
        %1053 = vmatprep.subr.mxu0 0.0
        %1054 = vmatpush1.msra.mxu0 0.0
        %1055 = vmatprep.subr.mxu0 0.0
        %1056 = vmatpush1.msra.mxu0 0.0
        %1057 = vmatprep.subr.mxu0 0.0
        %1058 = vmatpush1.msra.mxu0 0.0
        %1059 = vmatprep.subr.mxu0 0.0
        %1060 = vmatpush1.msra.mxu0 0.0
        %1061 = vmatprep.subr.mxu0 0.0
        %1062 = vmatpush1.msra.mxu0 0.0
        %1063 = vmatprep.subr.mxu0 0.0
        %1064 = vmatpush1.msra.mxu0 0.0
        %1065 = vmatprep.subr.mxu0 0.0
        %1066 = vmatpush1.msra.mxu0 0.0
        %1067 = vmatprep.subr.mxu0 0.0
        %1068 = vmatpush1.msra.mxu0 0.0
        %1069 = vmatprep.subr.mxu0 0.0
        %1070 = vmatpush1.msra.mxu0 0.0
        %1071 = vmatprep.subr.mxu0 0.0
        %1072 = vmatpush1.msra.mxu0 0.0
        %1073 = vmatprep.subr.mxu0 0.0
        %1074 = vmatpush1.msra.mxu0 0.0
        %1075 = vmatprep.subr.mxu0 0.0
        %1076 = vmatpush1.msra.mxu0 0.0
        %1077 = vmatprep.subr.mxu0 0.0
        %1078 = vmatpush1.msra.mxu0 0.0
        %1079 = vmatprep.subr.mxu0 0.0
        %1080 = vmatpush1.msra.mxu0 0.0
        %1081 = vmatprep.subr.mxu0 0.0
        %1082 = vmatpush1.msra.mxu0 0.0
        %1083 = vmatprep.subr.mxu0 0.0
        %1084 = vmatpush1.msra.mxu0 0.0
        %1085 = vmatprep.subr.mxu0 0.0
        %1086 = vmatpush1.msra.mxu0 0.0
        %1087 = vmatprep.subr.mxu0 0.0
        %1088 = vmatpush1.msra.mxu0 0.0
        %1089 = vmatprep.subr.mxu0 0.0
        %1090 = vmatpush1.msra.mxu0 0.0
        %1091 = vmatprep.subr.mxu0 0.0
        %1092 = vmatpush1.msra.mxu0 0.0
        %1093 = vmatprep.subr.mxu0 0.0
        %1094 = vmatpush1.msra.mxu0 0.0
        %1095 = vmatprep.subr.mxu0 0.0
        %1096 = vmatpush1.msra.mxu0 0.0
        %1097 = vmatprep.mubr.f32.mxu0 0.0
        %1098 = vmatmul.mubr.f32.gmra.mrb[0].mxu0 %v960
        %v1099 = vpop.f32.mrb[0].mxu0
        %v1100 = vadd.f32 %v957, %v1099
        %v1101 = vpop.f32.mrb[0].mxu0
        %1102 = vdwg.mxu0
        %vm1103 = vcmp.gt.f32.partialorder %v1029, 0.0
        %vm1104 = vcmp.gt.f32.partialorder %v1031, 0.0
        %vm1105 = vcmp.gt.f32.partialorder %v1100, 0.0
        %v1106 = vmul.f32 %v829, %v1029
        %v1107 = vmul.f32 %v829, %v1031
        %v1108 = vmul.f32 %v829, %v1100
        %v1109 = vsel %vm1103, %v1029, %v1106
        %v1110 = vsel %vm1104, %v1031, %v1107
        %v1111 = vsel %vm1105, %v1100, %v1108
        %v1112 = vmul.f32 %v1109, %v543
        %v1113 = vmul.f32 %v1110, %v547
        %v1114 = vmul.f32 %v1111, %v551
        %v1115 = vadd.f32 %v1112, %v555
        %v1116 = vadd.f32 %v1113, %v556
        %v1117 = vadd.f32 %v1114, %v557
        %1121 = vrot.lane.b32.xlu0 %v1115, 19
        %v1122 = vpop.permute.xlu0 %1121
        %1123 = vrot.lane.b32.xlu0 %v1116, 19
        %v1124 = vpop.permute.xlu0 %1123
        %1125 = vrot.lane.b32.xlu0 %v1117, 19
        %v1126 = vpop.permute.xlu0 %1125
        %v1127 = vsel %vm567, %v1122, %v1124
        %v1128 = vsel %vm567, %v1124, %v1126
        %1132 = vst.msk [vmem:[#allocation2] sm:$0xff] %vm573, %v1122
        %1133 = vst [vmem:[#allocation2 + $0x8] sm:$0xff] %v1127
        %1134 = vst.msk [vmem:[#allocation2 + $0x10] sm:$0xff] %vm576, %v1128
        %s1135 = sld [smem:[#allocation3 + $0x2]]
        %s1136 = scalar_lea.vmem %s2, 24
        %v1137 = vld [vmem:[%s1136] sm:$0xff]
        %v1138 = vld [vmem:[#allocation2] sm:$0xff]
        %v1139 = vld [vmem:[#allocation2 + $0x8] sm:$0xff]
        %v1140 = vld [vmem:[#allocation2 + $0x10] sm:$0xff]
        %1144 = vrot.lane.b32.xlu0 %v1138, 127
        %v1145 = vpop.permute.xlu0 %1144
        %1146 = vrot.lane.b32.xlu0 %v1139, 127
        %v1147 = vpop.permute.xlu0 %1146
        %1148 = vrot.lane.b32.xlu0 %v1140, 127
        %v1149 = vpop.permute.xlu0 %1148
        %v1150 = vsel %vm287, %v1145, %v1147
        %v1151 = vsel %vm287, %v1147, %v1149
        %1155 = vrot.lane.b32.xlu0 %v1138, 126
        %v1156 = vpop.permute.xlu0 %1155
        %1157 = vrot.lane.b32.xlu0 %v1139, 126
        %v1158 = vpop.permute.xlu0 %1157
        %1159 = vrot.lane.b32.xlu0 %v1140, 126
        %v1160 = vpop.permute.xlu0 %1159
        %v1161 = vsel %vm299, %v1156, %v1158
        %v1162 = vsel %vm299, %v1158, %v1160
        %1166 = vrot.lane.b32.xlu0 %v1138, 110
        %v1167 = vpop.permute.xlu0 %1166
        %1168 = vrot.lane.b32.xlu0 %v1139, 110
        %v1169 = vpop.permute.xlu0 %1168
        %1170 = vrot.lane.b32.xlu0 %v1140, 110
        %v1171 = vpop.permute.xlu0 %1170
        %v1172 = vsel %vm311, %v1167, %v1169
        %v1173 = vsel %vm311, %v1169, %v1171
        %1177 = vrot.lane.b32.xlu0 %v1138, 109
        %v1178 = vpop.permute.xlu0 %1177
        %1179 = vrot.lane.b32.xlu0 %v1139, 109
        %v1180 = vpop.permute.xlu0 %1179
        %1181 = vrot.lane.b32.xlu0 %v1140, 109
        %v1182 = vpop.permute.xlu0 %1181
        %v1183 = vsel %vm323, %v1178, %v1180
        %v1184 = vsel %vm323, %v1180, %v1182
        %1188 = vrot.lane.b32.xlu0 %v1138, 108
        %v1189 = vpop.permute.xlu0 %1188
        %1190 = vrot.lane.b32.xlu0 %v1139, 108
        %v1191 = vpop.permute.xlu0 %1190
        %1192 = vrot.lane.b32.xlu0 %v1140, 108
        %v1193 = vpop.permute.xlu0 %1192
        %v1194 = vsel %vm335, %v1189, %v1191
        %v1195 = vsel %vm335, %v1191, %v1193
        %1199 = vrot.lane.b32.xlu0 %v1138, 92
        %v1200 = vpop.permute.xlu0 %1199
        %1201 = vrot.lane.b32.xlu0 %v1139, 92
        %v1202 = vpop.permute.xlu0 %1201
        %1203 = vrot.lane.b32.xlu0 %v1140, 92
        %v1204 = vpop.permute.xlu0 %1203
        %v1205 = vsel %vm347, %v1200, %v1202
        %v1206 = vsel %vm347, %v1202, %v1204
        %1210 = vrot.lane.b32.xlu0 %v1138, 91
        %v1211 = vpop.permute.xlu0 %1210
        %1212 = vrot.lane.b32.xlu0 %v1139, 91
        %v1213 = vpop.permute.xlu0 %1212
        %1214 = vrot.lane.b32.xlu0 %v1140, 91
        %v1215 = vpop.permute.xlu0 %1214
        %v1216 = vsel %vm359, %v1211, %v1213
        %v1217 = vsel %vm359, %v1213, %v1215
        %1221 = vrot.lane.b32.xlu0 %v1138, 90
        %v1222 = vpop.permute.xlu0 %1221
        %1223 = vrot.lane.b32.xlu0 %v1139, 90
        %v1224 = vpop.permute.xlu0 %1223
        %1225 = vrot.lane.b32.xlu0 %v1140, 90
        %v1226 = vpop.permute.xlu0 %1225
        %v1227 = vsel %vm371, %v1222, %v1224
        %v1228 = vsel %vm371, %v1224, %v1226
        %s1232 = scalar_lea.vmem %s3, 24
        %v1233 = vld [vmem:[%s1232] sm:$0xff]
        %1235 = vset.pattern.permute.xlu0 0
        %1236 = vperm.xlu0 %1235, %v1233
        %v1237 = vpop.permute.xlu0 %1236
        %v1240 = vsel %vm383, %v1137, 0
        %1242 = vmatprep.subr.mxu0 %v1139
        %1243 = vmatpush1.msra.mxu0 %v1138
        %1244 = vmatprep.subr.mxu0 %v1151
        %1245 = vmatpush1.msra.mxu0 %v1150
        %1246 = vmatprep.subr.mxu0 %v1162
        %1247 = vmatpush1.msra.mxu0 %v1161
        %1248 = vmatprep.subr.mxu0 %v1173
        %1249 = vmatpush1.msra.mxu0 %v1172
        %1250 = vmatprep.subr.mxu0 %v1184
        %1251 = vmatpush1.msra.mxu0 %v1183
        %1252 = vmatprep.subr.mxu0 %v1195
        %1253 = vmatpush1.msra.mxu0 %v1194
        %1254 = vmatprep.subr.mxu0 %v1206
        %1255 = vmatpush1.msra.mxu0 %v1205
        %1256 = vmatprep.subr.mxu0 %v1217
        %1257 = vmatpush1.msra.mxu0 %v1216
        %1258 = vmatprep.subr.mxu0 %v1228
        %1259 = vmatpush1.msra.mxu0 %v1227
        %1260 = vmatprep.subr.mxu0 0.0
        %1261 = vmatpush1.msra.mxu0 0.0
        %1262 = vmatprep.subr.mxu0 0.0
        %1263 = vmatpush1.msra.mxu0 0.0
        %1264 = vmatprep.subr.mxu0 0.0
        %1265 = vmatpush1.msra.mxu0 0.0
        %1266 = vmatprep.subr.mxu0 0.0
        %1267 = vmatpush1.msra.mxu0 0.0
        %1268 = vmatprep.subr.mxu0 0.0
        %1269 = vmatpush1.msra.mxu0 0.0
        %1270 = vmatprep.subr.mxu0 0.0
        %1271 = vmatpush1.msra.mxu0 0.0
        %1272 = vmatprep.subr.mxu0 0.0
        %1273 = vmatpush1.msra.mxu0 0.0
        %1274 = vmatprep.subr.mxu0 0.0
        %1275 = vmatpush1.msra.mxu0 0.0
        %1276 = vmatprep.subr.mxu0 0.0
        %1277 = vmatpush1.msra.mxu0 0.0
        %1278 = vmatprep.subr.mxu0 0.0
        %1279 = vmatpush1.msra.mxu0 0.0
        %1280 = vmatprep.subr.mxu0 0.0
        %1281 = vmatpush1.msra.mxu0 0.0
        %1282 = vmatprep.subr.mxu0 0.0
        %1283 = vmatpush1.msra.mxu0 0.0
        %1284 = vmatprep.subr.mxu0 0.0
        %1285 = vmatpush1.msra.mxu0 0.0
        %1286 = vmatprep.subr.mxu0 0.0
        %1287 = vmatpush1.msra.mxu0 0.0
        %1288 = vmatprep.subr.mxu0 0.0
        %1289 = vmatpush1.msra.mxu0 0.0
        %1290 = vmatprep.subr.mxu0 0.0
        %1291 = vmatpush1.msra.mxu0 0.0
        %1292 = vmatprep.subr.mxu0 0.0
        %1293 = vmatpush1.msra.mxu0 0.0
        %1294 = vmatprep.subr.mxu0 0.0
        %1295 = vmatpush1.msra.mxu0 0.0
        %1296 = vmatprep.subr.mxu0 0.0
        %1297 = vmatpush1.msra.mxu0 0.0
        %1298 = vmatprep.subr.mxu0 0.0
        %1299 = vmatpush1.msra.mxu0 0.0
        %1300 = vmatprep.subr.mxu0 0.0
        %1301 = vmatpush1.msra.mxu0 0.0
        %1302 = vmatprep.subr.mxu0 0.0
        %1303 = vmatpush1.msra.mxu0 0.0
        %1304 = vmatprep.subr.mxu0 0.0
        %1305 = vmatpush1.msra.mxu0 0.0
        %1306 = vmatprep.mubr.f32.mxu0 0.0
        %1307 = vmatmul.mubr.f32.gmra.mrb[0].mxu0 %v1240
        %v1308 = vpop.f32.mrb[0].mxu0
        %v1309 = vadd.f32 %v1237, %v1308
        %v1310 = vpop.f32.mrb[0].mxu0
        %v1311 = vadd.f32 %v1237, %v1310
        %1312 = vdwg.mxu0
        %1313 = vmatprep.subr.mxu0 0.0
        %1314 = vmatpush1.msra.mxu0 %v1140
        %1315 = vmatprep.subr.mxu0 0.0
        %1316 = vmatpush1.msra.mxu0 %v1149
        %1317 = vmatprep.subr.mxu0 0.0
        %1318 = vmatpush1.msra.mxu0 %v1160
        %1319 = vmatprep.subr.mxu0 0.0
        %1320 = vmatpush1.msra.mxu0 %v1171
        %1321 = vmatprep.subr.mxu0 0.0
        %1322 = vmatpush1.msra.mxu0 %v1182
        %1323 = vmatprep.subr.mxu0 0.0
        %1324 = vmatpush1.msra.mxu0 %v1193
        %1325 = vmatprep.subr.mxu0 0.0
        %1326 = vmatpush1.msra.mxu0 %v1204
        %1327 = vmatprep.subr.mxu0 0.0
        %1328 = vmatpush1.msra.mxu0 %v1215
        %1329 = vmatprep.subr.mxu0 0.0
        %1330 = vmatpush1.msra.mxu0 %v1226
        %1331 = vmatprep.subr.mxu0 0.0
        %1332 = vmatpush1.msra.mxu0 0.0
        %1333 = vmatprep.subr.mxu0 0.0
        %1334 = vmatpush1.msra.mxu0 0.0
        %1335 = vmatprep.subr.mxu0 0.0
        %1336 = vmatpush1.msra.mxu0 0.0
        %1337 = vmatprep.subr.mxu0 0.0
        %1338 = vmatpush1.msra.mxu0 0.0
        %1339 = vmatprep.subr.mxu0 0.0
        %1340 = vmatpush1.msra.mxu0 0.0
        %1341 = vmatprep.subr.mxu0 0.0
        %1342 = vmatpush1.msra.mxu0 0.0
        %1343 = vmatprep.subr.mxu0 0.0
        %1344 = vmatpush1.msra.mxu0 0.0
        %1345 = vmatprep.subr.mxu0 0.0
        %1346 = vmatpush1.msra.mxu0 0.0
        %1347 = vmatprep.subr.mxu0 0.0
        %1348 = vmatpush1.msra.mxu0 0.0
        %1349 = vmatprep.subr.mxu0 0.0
        %1350 = vmatpush1.msra.mxu0 0.0
        %1351 = vmatprep.subr.mxu0 0.0
        %1352 = vmatpush1.msra.mxu0 0.0
        %1353 = vmatprep.subr.mxu0 0.0
        %1354 = vmatpush1.msra.mxu0 0.0
        %1355 = vmatprep.subr.mxu0 0.0
        %1356 = vmatpush1.msra.mxu0 0.0
        %1357 = vmatprep.subr.mxu0 0.0
        %1358 = vmatpush1.msra.mxu0 0.0
        %1359 = vmatprep.subr.mxu0 0.0
        %1360 = vmatpush1.msra.mxu0 0.0
        %1361 = vmatprep.subr.mxu0 0.0
        %1362 = vmatpush1.msra.mxu0 0.0
        %1363 = vmatprep.subr.mxu0 0.0
        %1364 = vmatpush1.msra.mxu0 0.0
        %1365 = vmatprep.subr.mxu0 0.0
        %1366 = vmatpush1.msra.mxu0 0.0
        %1367 = vmatprep.subr.mxu0 0.0
        %1368 = vmatpush1.msra.mxu0 0.0
        %1369 = vmatprep.subr.mxu0 0.0
        %1370 = vmatpush1.msra.mxu0 0.0
        %1371 = vmatprep.subr.mxu0 0.0
        %1372 = vmatpush1.msra.mxu0 0.0
        %1373 = vmatprep.subr.mxu0 0.0
        %1374 = vmatpush1.msra.mxu0 0.0
        %1375 = vmatprep.subr.mxu0 0.0
        %1376 = vmatpush1.msra.mxu0 0.0
        %1377 = vmatprep.mubr.f32.mxu0 0.0
        %1378 = vmatmul.mubr.f32.gmra.mrb[0].mxu0 %v1240
        %v1379 = vpop.f32.mrb[0].mxu0
        %v1380 = vadd.f32 %v1237, %v1379
        %v1381 = vpop.f32.mrb[0].mxu0
        %1382 = vdwg.mxu0
        %vm1383 = vcmp.gt.f32.partialorder %v1309, 0.0
        %vm1384 = vcmp.gt.f32.partialorder %v1311, 0.0
        %vm1385 = vcmp.gt.f32.partialorder %v1380, 0.0
        %v1386 = vstv %s1135
        %v1387 = vmul.f32 %v1386, %v1309
        %v1388 = vmul.f32 %v1386, %v1311
        %v1389 = vmul.f32 %v1386, %v1380
        %v1390 = vsel %vm1383, %v1309, %v1387
        %v1391 = vsel %vm1384, %v1311, %v1388
        %v1392 = vsel %vm1385, %v1380, %v1389
        %v1393 = vmul.f32 %v1390, %v543
        %v1394 = vmul.f32 %v1391, %v547
        %v1395 = vmul.f32 %v1392, %v551
        %1399 = vrot.lane.b32.xlu0 %v1393, 19
        %v1400 = vpop.permute.xlu0 %1399
        %1401 = vrot.lane.b32.xlu0 %v1394, 19
        %v1402 = vpop.permute.xlu0 %1401
        %1403 = vrot.lane.b32.xlu0 %v1395, 19
        %v1404 = vpop.permute.xlu0 %1403
        %v1405 = vsel %vm567, %v1400, %v1402
        %v1406 = vsel %vm567, %v1402, %v1404
        %1410 = vst.msk [vmem:[#allocation2] sm:$0xff] %vm573, %v1400
        %1411 = vst [vmem:[#allocation2 + $0x8] sm:$0xff] %v1405
        %1412 = vst.msk [vmem:[#allocation2 + $0x10] sm:$0xff] %vm576, %v1406
        %s1413 = scalar_lea.vmem %s2, 32
        %v1414 = vld [vmem:[%s1413] sm:$0xff]
        %v1415 = vld [vmem:[#allocation2] sm:$0xff]
        %v1416 = vld [vmem:[#allocation2 + $0x8] sm:$0xff]
        %v1417 = vld [vmem:[#allocation2 + $0x10] sm:$0xff]
        %1421 = vrot.lane.b32.xlu0 %v1415, 127
        %v1422 = vpop.permute.xlu0 %1421
        %1423 = vrot.lane.b32.xlu0 %v1416, 127
        %v1424 = vpop.permute.xlu0 %1423
        %1425 = vrot.lane.b32.xlu0 %v1417, 127
        %v1426 = vpop.permute.xlu0 %1425
        %v1427 = vsel %vm287, %v1422, %v1424
        %v1428 = vsel %vm287, %v1424, %v1426
        %1432 = vrot.lane.b32.xlu0 %v1415, 126
        %v1433 = vpop.permute.xlu0 %1432
        %1434 = vrot.lane.b32.xlu0 %v1416, 126
        %v1435 = vpop.permute.xlu0 %1434
        %1436 = vrot.lane.b32.xlu0 %v1417, 126
        %v1437 = vpop.permute.xlu0 %1436
        %v1438 = vsel %vm299, %v1433, %v1435
        %v1439 = vsel %vm299, %v1435, %v1437
        %1443 = vrot.lane.b32.xlu0 %v1415, 110
        %v1444 = vpop.permute.xlu0 %1443
        %1445 = vrot.lane.b32.xlu0 %v1416, 110
        %v1446 = vpop.permute.xlu0 %1445
        %1447 = vrot.lane.b32.xlu0 %v1417, 110
        %v1448 = vpop.permute.xlu0 %1447
        %v1449 = vsel %vm311, %v1444, %v1446
        %v1450 = vsel %vm311, %v1446, %v1448
        %1454 = vrot.lane.b32.xlu0 %v1415, 109
        %v1455 = vpop.permute.xlu0 %1454
        %1456 = vrot.lane.b32.xlu0 %v1416, 109
        %v1457 = vpop.permute.xlu0 %1456
        %1458 = vrot.lane.b32.xlu0 %v1417, 109
        %v1459 = vpop.permute.xlu0 %1458
        %v1460 = vsel %vm323, %v1455, %v1457
        %v1461 = vsel %vm323, %v1457, %v1459
        %1465 = vrot.lane.b32.xlu0 %v1415, 108
        %v1466 = vpop.permute.xlu0 %1465
        %1467 = vrot.lane.b32.xlu0 %v1416, 108
        %v1468 = vpop.permute.xlu0 %1467
        %1469 = vrot.lane.b32.xlu0 %v1417, 108
        %v1470 = vpop.permute.xlu0 %1469
        %v1471 = vsel %vm335, %v1466, %v1468
        %v1472 = vsel %vm335, %v1468, %v1470
        %1476 = vrot.lane.b32.xlu0 %v1415, 92
        %v1477 = vpop.permute.xlu0 %1476
        %1478 = vrot.lane.b32.xlu0 %v1416, 92
        %v1479 = vpop.permute.xlu0 %1478
        %1480 = vrot.lane.b32.xlu0 %v1417, 92
        %v1481 = vpop.permute.xlu0 %1480
        %v1482 = vsel %vm347, %v1477, %v1479
        %v1483 = vsel %vm347, %v1479, %v1481
        %1487 = vrot.lane.b32.xlu0 %v1415, 91
        %v1488 = vpop.permute.xlu0 %1487
        %1489 = vrot.lane.b32.xlu0 %v1416, 91
        %v1490 = vpop.permute.xlu0 %1489
        %1491 = vrot.lane.b32.xlu0 %v1417, 91
        %v1492 = vpop.permute.xlu0 %1491
        %v1493 = vsel %vm359, %v1488, %v1490
        %v1494 = vsel %vm359, %v1490, %v1492
        %1498 = vrot.lane.b32.xlu0 %v1415, 90
        %v1499 = vpop.permute.xlu0 %1498
        %1500 = vrot.lane.b32.xlu0 %v1416, 90
        %v1501 = vpop.permute.xlu0 %1500
        %1502 = vrot.lane.b32.xlu0 %v1417, 90
        %v1503 = vpop.permute.xlu0 %1502
        %v1504 = vsel %vm371, %v1499, %v1501
        %v1505 = vsel %vm371, %v1501, %v1503
        %s1509 = scalar_lea.vmem %s3, 32
        %v1510 = vld [vmem:[%s1509] sm:$0xff]
        %1512 = vset.pattern.permute.xlu0 0
        %1513 = vperm.xlu0 %1512, %v1510
        %v1514 = vpop.permute.xlu0 %1513
        %v1517 = vsel %vm383, %v1414, 0
        %1519 = vmatprep.subr.mxu0 %v1416
        %1520 = vmatpush1.msra.mxu0 %v1415
        %1521 = vmatprep.subr.mxu0 %v1428
        %1522 = vmatpush1.msra.mxu0 %v1427
        %1523 = vmatprep.subr.mxu0 %v1439
        %1524 = vmatpush1.msra.mxu0 %v1438
        %1525 = vmatprep.subr.mxu0 %v1450
        %1526 = vmatpush1.msra.mxu0 %v1449
        %1527 = vmatprep.subr.mxu0 %v1461
        %1528 = vmatpush1.msra.mxu0 %v1460
        %1529 = vmatprep.subr.mxu0 %v1472
        %1530 = vmatpush1.msra.mxu0 %v1471
        %1531 = vmatprep.subr.mxu0 %v1483
        %1532 = vmatpush1.msra.mxu0 %v1482
        %1533 = vmatprep.subr.mxu0 %v1494
        %1534 = vmatpush1.msra.mxu0 %v1493
        %1535 = vmatprep.subr.mxu0 %v1505
        %1536 = vmatpush1.msra.mxu0 %v1504
        %1537 = vmatprep.subr.mxu0 0.0
        %1538 = vmatpush1.msra.mxu0 0.0
        %1539 = vmatprep.subr.mxu0 0.0
        %1540 = vmatpush1.msra.mxu0 0.0
        %1541 = vmatprep.subr.mxu0 0.0
        %1542 = vmatpush1.msra.mxu0 0.0
        %1543 = vmatprep.subr.mxu0 0.0
        %1544 = vmatpush1.msra.mxu0 0.0
        %1545 = vmatprep.subr.mxu0 0.0
        %1546 = vmatpush1.msra.mxu0 0.0
        %1547 = vmatprep.subr.mxu0 0.0
        %1548 = vmatpush1.msra.mxu0 0.0
        %1549 = vmatprep.subr.mxu0 0.0
        %1550 = vmatpush1.msra.mxu0 0.0
        %1551 = vmatprep.subr.mxu0 0.0
        %1552 = vmatpush1.msra.mxu0 0.0
        %1553 = vmatprep.subr.mxu0 0.0
        %1554 = vmatpush1.msra.mxu0 0.0
        %1555 = vmatprep.subr.mxu0 0.0
        %1556 = vmatpush1.msra.mxu0 0.0
        %1557 = vmatprep.subr.mxu0 0.0
        %1558 = vmatpush1.msra.mxu0 0.0
        %1559 = vmatprep.subr.mxu0 0.0
        %1560 = vmatpush1.msra.mxu0 0.0
        %1561 = vmatprep.subr.mxu0 0.0
        %1562 = vmatpush1.msra.mxu0 0.0
        %1563 = vmatprep.subr.mxu0 0.0
        %1564 = vmatpush1.msra.mxu0 0.0
        %1565 = vmatprep.subr.mxu0 0.0
        %1566 = vmatpush1.msra.mxu0 0.0
        %1567 = vmatprep.subr.mxu0 0.0
        %1568 = vmatpush1.msra.mxu0 0.0
        %1569 = vmatprep.subr.mxu0 0.0
        %1570 = vmatpush1.msra.mxu0 0.0
        %1571 = vmatprep.subr.mxu0 0.0
        %1572 = vmatpush1.msra.mxu0 0.0
        %1573 = vmatprep.subr.mxu0 0.0
        %1574 = vmatpush1.msra.mxu0 0.0
        %1575 = vmatprep.subr.mxu0 0.0
        %1576 = vmatpush1.msra.mxu0 0.0
        %1577 = vmatprep.subr.mxu0 0.0
        %1578 = vmatpush1.msra.mxu0 0.0
        %1579 = vmatprep.subr.mxu0 0.0
        %1580 = vmatpush1.msra.mxu0 0.0
        %1581 = vmatprep.subr.mxu0 0.0
        %1582 = vmatpush1.msra.mxu0 0.0
        %1583 = vmatprep.mubr.f32.mxu0 0.0
        %1584 = vmatmul.mubr.f32.gmra.mrb[0].mxu0 %v1517
        %v1585 = vpop.f32.mrb[0].mxu0
        %v1586 = vadd.f32 %v1514, %v1585
        %v1587 = vpop.f32.mrb[0].mxu0
        %v1588 = vadd.f32 %v1514, %v1587
        %1589 = vdwg.mxu0
        %1590 = vmatprep.subr.mxu0 0.0
        %1591 = vmatpush1.msra.mxu0 %v1417
        %1592 = vmatprep.subr.mxu0 0.0
        %1593 = vmatpush1.msra.mxu0 %v1426
        %1594 = vmatprep.subr.mxu0 0.0
        %1595 = vmatpush1.msra.mxu0 %v1437
        %1596 = vmatprep.subr.mxu0 0.0
        %1597 = vmatpush1.msra.mxu0 %v1448
        %1598 = vmatprep.subr.mxu0 0.0
        %1599 = vmatpush1.msra.mxu0 %v1459
        %1600 = vmatprep.subr.mxu0 0.0
        %1601 = vmatpush1.msra.mxu0 %v1470
        %1602 = vmatprep.subr.mxu0 0.0
        %1603 = vmatpush1.msra.mxu0 %v1481
        %1604 = vmatprep.subr.mxu0 0.0
        %1605 = vmatpush1.msra.mxu0 %v1492
        %1606 = vmatprep.subr.mxu0 0.0
        %1607 = vmatpush1.msra.mxu0 %v1503
        %1608 = vmatprep.subr.mxu0 0.0
        %1609 = vmatpush1.msra.mxu0 0.0
        %1610 = vmatprep.subr.mxu0 0.0
        %1611 = vmatpush1.msra.mxu0 0.0
        %1612 = vmatprep.subr.mxu0 0.0
        %1613 = vmatpush1.msra.mxu0 0.0
        %1614 = vmatprep.subr.mxu0 0.0
        %1615 = vmatpush1.msra.mxu0 0.0
        %1616 = vmatprep.subr.mxu0 0.0
        %1617 = vmatpush1.msra.mxu0 0.0
        %1618 = vmatprep.subr.mxu0 0.0
        %1619 = vmatpush1.msra.mxu0 0.0
        %1620 = vmatprep.subr.mxu0 0.0
        %1621 = vmatpush1.msra.mxu0 0.0
        %1622 = vmatprep.subr.mxu0 0.0
        %1623 = vmatpush1.msra.mxu0 0.0
        %1624 = vmatprep.subr.mxu0 0.0
        %1625 = vmatpush1.msra.mxu0 0.0
        %1626 = vmatprep.subr.mxu0 0.0
        %1627 = vmatpush1.msra.mxu0 0.0
        %1628 = vmatprep.subr.mxu0 0.0
        %1629 = vmatpush1.msra.mxu0 0.0
        %1630 = vmatprep.subr.mxu0 0.0
        %1631 = vmatpush1.msra.mxu0 0.0
        %1632 = vmatprep.subr.mxu0 0.0
        %1633 = vmatpush1.msra.mxu0 0.0
        %1634 = vmatprep.subr.mxu0 0.0
        %1635 = vmatpush1.msra.mxu0 0.0
        %1636 = vmatprep.subr.mxu0 0.0
        %1637 = vmatpush1.msra.mxu0 0.0
        %1638 = vmatprep.subr.mxu0 0.0
        %1639 = vmatpush1.msra.mxu0 0.0
        %1640 = vmatprep.subr.mxu0 0.0
        %1641 = vmatpush1.msra.mxu0 0.0
        %1642 = vmatprep.subr.mxu0 0.0
        %1643 = vmatpush1.msra.mxu0 0.0
        %1644 = vmatprep.subr.mxu0 0.0
        %1645 = vmatpush1.msra.mxu0 0.0
        %1646 = vmatprep.subr.mxu0 0.0
        %1647 = vmatpush1.msra.mxu0 0.0
        %1648 = vmatprep.subr.mxu0 0.0
        %1649 = vmatpush1.msra.mxu0 0.0
        %1650 = vmatprep.subr.mxu0 0.0
        %1651 = vmatpush1.msra.mxu0 0.0
        %1652 = vmatprep.subr.mxu0 0.0
        %1653 = vmatpush1.msra.mxu0 0.0
        %1654 = vmatprep.mubr.f32.mxu0 0.0
        %1655 = vmatmul.mubr.f32.gmra.mrb[0].mxu0 %v1517
        %v1656 = vpop.f32.mrb[0].mxu0
        %v1657 = vadd.f32 %v1514, %v1656
        %v1658 = vpop.f32.mrb[0].mxu0
        %1659 = vdwg.mxu0
        %vm1660 = vcmp.gt.f32.partialorder %v1586, 0.0
        %vm1661 = vcmp.gt.f32.partialorder %v1588, 0.0
        %vm1662 = vcmp.gt.f32.partialorder %v1657, 0.0
        %v1663 = vmul.f32 %v1386, %v1586
        %v1664 = vmul.f32 %v1386, %v1588
        %v1665 = vmul.f32 %v1386, %v1657
        %v1666 = vsel %vm1660, %v1586, %v1663
        %v1667 = vsel %vm1661, %v1588, %v1664
        %v1668 = vsel %vm1662, %v1657, %v1665
        %v1669 = vmul.f32 %v1666, %v543
        %v1670 = vmul.f32 %v1667, %v547
        %v1671 = vmul.f32 %v1668, %v551
        %v1672 = vadd.f32 %v1669, %v1115
        %v1673 = vadd.f32 %v1670, %v1116
        %v1674 = vadd.f32 %v1671, %v1117
        %1678 = vrot.lane.b32.xlu0 %v1672, 19
        %v1679 = vpop.permute.xlu0 %1678
        %1680 = vrot.lane.b32.xlu0 %v1673, 19
        %v1681 = vpop.permute.xlu0 %1680
        %1682 = vrot.lane.b32.xlu0 %v1674, 19
        %v1683 = vpop.permute.xlu0 %1682
        %v1684 = vsel %vm567, %v1679, %v1681
        %v1685 = vsel %vm567, %v1681, %v1683
        %1689 = vst.msk [vmem:[#allocation2] sm:$0xff] %vm573, %v1679
        %1690 = vst [vmem:[#allocation2 + $0x8] sm:$0xff] %v1684
        %1691 = vst.msk [vmem:[#allocation2 + $0x10] sm:$0xff] %vm576, %v1685
        %s1692 = sld [smem:[#allocation3 + $0x3]]
        %s1693 = scalar_lea.vmem %s2, 40
        %v1694 = vld [vmem:[%s1693] sm:$0xff]
        %v1695 = vld [vmem:[#allocation2] sm:$0xff]
        %v1696 = vld [vmem:[#allocation2 + $0x8] sm:$0xff]
        %v1697 = vld [vmem:[#allocation2 + $0x10] sm:$0xff]
        %1701 = vrot.lane.b32.xlu0 %v1695, 127
        %v1702 = vpop.permute.xlu0 %1701
        %1703 = vrot.lane.b32.xlu0 %v1696, 127
        %v1704 = vpop.permute.xlu0 %1703
        %1705 = vrot.lane.b32.xlu0 %v1697, 127
        %v1706 = vpop.permute.xlu0 %1705
        %v1707 = vsel %vm287, %v1702, %v1704
        %v1708 = vsel %vm287, %v1704, %v1706
        %1712 = vrot.lane.b32.xlu0 %v1695, 126
        %v1713 = vpop.permute.xlu0 %1712
        %1714 = vrot.lane.b32.xlu0 %v1696, 126
        %v1715 = vpop.permute.xlu0 %1714
        %1716 = vrot.lane.b32.xlu0 %v1697, 126
        %v1717 = vpop.permute.xlu0 %1716
        %v1718 = vsel %vm299, %v1713, %v1715
        %v1719 = vsel %vm299, %v1715, %v1717
        %1723 = vrot.lane.b32.xlu0 %v1695, 110
        %v1724 = vpop.permute.xlu0 %1723
        %1725 = vrot.lane.b32.xlu0 %v1696, 110
        %v1726 = vpop.permute.xlu0 %1725
        %1727 = vrot.lane.b32.xlu0 %v1697, 110
        %v1728 = vpop.permute.xlu0 %1727
        %v1729 = vsel %vm311, %v1724, %v1726
        %v1730 = vsel %vm311, %v1726, %v1728
        %1734 = vrot.lane.b32.xlu0 %v1695, 109
        %v1735 = vpop.permute.xlu0 %1734
        %1736 = vrot.lane.b32.xlu0 %v1696, 109
        %v1737 = vpop.permute.xlu0 %1736
        %1738 = vrot.lane.b32.xlu0 %v1697, 109
        %v1739 = vpop.permute.xlu0 %1738
        %v1740 = vsel %vm323, %v1735, %v1737
        %v1741 = vsel %vm323, %v1737, %v1739
        %1745 = vrot.lane.b32.xlu0 %v1695, 108
        %v1746 = vpop.permute.xlu0 %1745
        %1747 = vrot.lane.b32.xlu0 %v1696, 108
        %v1748 = vpop.permute.xlu0 %1747
        %1749 = vrot.lane.b32.xlu0 %v1697, 108
        %v1750 = vpop.permute.xlu0 %1749
        %v1751 = vsel %vm335, %v1746, %v1748
        %v1752 = vsel %vm335, %v1748, %v1750
        %1756 = vrot.lane.b32.xlu0 %v1695, 92
        %v1757 = vpop.permute.xlu0 %1756
        %1758 = vrot.lane.b32.xlu0 %v1696, 92
        %v1759 = vpop.permute.xlu0 %1758
        %1760 = vrot.lane.b32.xlu0 %v1697, 92
        %v1761 = vpop.permute.xlu0 %1760
        %v1762 = vsel %vm347, %v1757, %v1759
        %v1763 = vsel %vm347, %v1759, %v1761
        %1767 = vrot.lane.b32.xlu0 %v1695, 91
        %v1768 = vpop.permute.xlu0 %1767
        %1769 = vrot.lane.b32.xlu0 %v1696, 91
        %v1770 = vpop.permute.xlu0 %1769
        %1771 = vrot.lane.b32.xlu0 %v1697, 91
        %v1772 = vpop.permute.xlu0 %1771
        %v1773 = vsel %vm359, %v1768, %v1770
        %v1774 = vsel %vm359, %v1770, %v1772
        %1778 = vrot.lane.b32.xlu0 %v1695, 90
        %v1779 = vpop.permute.xlu0 %1778
        %1780 = vrot.lane.b32.xlu0 %v1696, 90
        %v1781 = vpop.permute.xlu0 %1780
        %1782 = vrot.lane.b32.xlu0 %v1697, 90
        %v1783 = vpop.permute.xlu0 %1782
        %v1784 = vsel %vm371, %v1779, %v1781
        %v1785 = vsel %vm371, %v1781, %v1783
        %s1789 = scalar_lea.vmem %s3, 40
        %v1790 = vld [vmem:[%s1789] sm:$0xff]
        %1792 = vset.pattern.permute.xlu0 0
        %1793 = vperm.xlu0 %1792, %v1790
        %v1794 = vpop.permute.xlu0 %1793
        %v1797 = vsel %vm383, %v1694, 0
        %1799 = vmatprep.subr.mxu0 %v1696
        %1800 = vmatpush1.msra.mxu0 %v1695
        %1801 = vmatprep.subr.mxu0 %v1708
        %1802 = vmatpush1.msra.mxu0 %v1707
        %1803 = vmatprep.subr.mxu0 %v1719
        %1804 = vmatpush1.msra.mxu0 %v1718
        %1805 = vmatprep.subr.mxu0 %v1730
        %1806 = vmatpush1.msra.mxu0 %v1729
        %1807 = vmatprep.subr.mxu0 %v1741
        %1808 = vmatpush1.msra.mxu0 %v1740
        %1809 = vmatprep.subr.mxu0 %v1752
        %1810 = vmatpush1.msra.mxu0 %v1751
        %1811 = vmatprep.subr.mxu0 %v1763
        %1812 = vmatpush1.msra.mxu0 %v1762
        %1813 = vmatprep.subr.mxu0 %v1774
        %1814 = vmatpush1.msra.mxu0 %v1773
        %1815 = vmatprep.subr.mxu0 %v1785
        %1816 = vmatpush1.msra.mxu0 %v1784
        %1817 = vmatprep.subr.mxu0 0.0
        %1818 = vmatpush1.msra.mxu0 0.0
        %1819 = vmatprep.subr.mxu0 0.0
        %1820 = vmatpush1.msra.mxu0 0.0
        %1821 = vmatprep.subr.mxu0 0.0
        %1822 = vmatpush1.msra.mxu0 0.0
        %1823 = vmatprep.subr.mxu0 0.0
        %1824 = vmatpush1.msra.mxu0 0.0
        %1825 = vmatprep.subr.mxu0 0.0
        %1826 = vmatpush1.msra.mxu0 0.0
        %1827 = vmatprep.subr.mxu0 0.0
        %1828 = vmatpush1.msra.mxu0 0.0
        %1829 = vmatprep.subr.mxu0 0.0
        %1830 = vmatpush1.msra.mxu0 0.0
        %1831 = vmatprep.subr.mxu0 0.0
        %1832 = vmatpush1.msra.mxu0 0.0
        %1833 = vmatprep.subr.mxu0 0.0
        %1834 = vmatpush1.msra.mxu0 0.0
        %1835 = vmatprep.subr.mxu0 0.0
        %1836 = vmatpush1.msra.mxu0 0.0
        %1837 = vmatprep.subr.mxu0 0.0
        %1838 = vmatpush1.msra.mxu0 0.0
        %1839 = vmatprep.subr.mxu0 0.0
        %1840 = vmatpush1.msra.mxu0 0.0
        %1841 = vmatprep.subr.mxu0 0.0
        %1842 = vmatpush1.msra.mxu0 0.0
        %1843 = vmatprep.subr.mxu0 0.0
        %1844 = vmatpush1.msra.mxu0 0.0
        %1845 = vmatprep.subr.mxu0 0.0
        %1846 = vmatpush1.msra.mxu0 0.0
        %1847 = vmatprep.subr.mxu0 0.0
        %1848 = vmatpush1.msra.mxu0 0.0
        %1849 = vmatprep.subr.mxu0 0.0
        %1850 = vmatpush1.msra.mxu0 0.0
        %1851 = vmatprep.subr.mxu0 0.0
        %1852 = vmatpush1.msra.mxu0 0.0
        %1853 = vmatprep.subr.mxu0 0.0
        %1854 = vmatpush1.msra.mxu0 0.0
        %1855 = vmatprep.subr.mxu0 0.0
        %1856 = vmatpush1.msra.mxu0 0.0
        %1857 = vmatprep.subr.mxu0 0.0
        %1858 = vmatpush1.msra.mxu0 0.0
        %1859 = vmatprep.subr.mxu0 0.0
        %1860 = vmatpush1.msra.mxu0 0.0
        %1861 = vmatprep.subr.mxu0 0.0
        %1862 = vmatpush1.msra.mxu0 0.0
        %1863 = vmatprep.mubr.f32.mxu0 0.0
        %1864 = vmatmul.mubr.f32.gmra.mrb[0].mxu0 %v1797
        %v1865 = vpop.f32.mrb[0].mxu0
        %v1866 = vadd.f32 %v1794, %v1865
        %v1867 = vpop.f32.mrb[0].mxu0
        %v1868 = vadd.f32 %v1794, %v1867
        %1869 = vdwg.mxu0
        %1870 = vmatprep.subr.mxu0 0.0
        %1871 = vmatpush1.msra.mxu0 %v1697
        %1872 = vmatprep.subr.mxu0 0.0
        %1873 = vmatpush1.msra.mxu0 %v1706
        %1874 = vmatprep.subr.mxu0 0.0
        %1875 = vmatpush1.msra.mxu0 %v1717
        %1876 = vmatprep.subr.mxu0 0.0
        %1877 = vmatpush1.msra.mxu0 %v1728
        %1878 = vmatprep.subr.mxu0 0.0
        %1879 = vmatpush1.msra.mxu0 %v1739
        %1880 = vmatprep.subr.mxu0 0.0
        %1881 = vmatpush1.msra.mxu0 %v1750
        %1882 = vmatprep.subr.mxu0 0.0
        %1883 = vmatpush1.msra.mxu0 %v1761
        %1884 = vmatprep.subr.mxu0 0.0
        %1885 = vmatpush1.msra.mxu0 %v1772
        %1886 = vmatprep.subr.mxu0 0.0
        %1887 = vmatpush1.msra.mxu0 %v1783
        %1888 = vmatprep.subr.mxu0 0.0
        %1889 = vmatpush1.msra.mxu0 0.0
        %1890 = vmatprep.subr.mxu0 0.0
        %1891 = vmatpush1.msra.mxu0 0.0
        %1892 = vmatprep.subr.mxu0 0.0
        %1893 = vmatpush1.msra.mxu0 0.0
        %1894 = vmatprep.subr.mxu0 0.0
        %1895 = vmatpush1.msra.mxu0 0.0
        %1896 = vmatprep.subr.mxu0 0.0
        %1897 = vmatpush1.msra.mxu0 0.0
        %1898 = vmatprep.subr.mxu0 0.0
        %1899 = vmatpush1.msra.mxu0 0.0
        %1900 = vmatprep.subr.mxu0 0.0
        %1901 = vmatpush1.msra.mxu0 0.0
        %1902 = vmatprep.subr.mxu0 0.0
        %1903 = vmatpush1.msra.mxu0 0.0
        %1904 = vmatprep.subr.mxu0 0.0
        %1905 = vmatpush1.msra.mxu0 0.0
        %1906 = vmatprep.subr.mxu0 0.0
        %1907 = vmatpush1.msra.mxu0 0.0
        %1908 = vmatprep.subr.mxu0 0.0
        %1909 = vmatpush1.msra.mxu0 0.0
        %1910 = vmatprep.subr.mxu0 0.0
        %1911 = vmatpush1.msra.mxu0 0.0
        %1912 = vmatprep.subr.mxu0 0.0
        %1913 = vmatpush1.msra.mxu0 0.0
        %1914 = vmatprep.subr.mxu0 0.0
        %1915 = vmatpush1.msra.mxu0 0.0
        %1916 = vmatprep.subr.mxu0 0.0
        %1917 = vmatpush1.msra.mxu0 0.0
        %1918 = vmatprep.subr.mxu0 0.0
        %1919 = vmatpush1.msra.mxu0 0.0
        %1920 = vmatprep.subr.mxu0 0.0
        %1921 = vmatpush1.msra.mxu0 0.0
        %1922 = vmatprep.subr.mxu0 0.0
        %1923 = vmatpush1.msra.mxu0 0.0
        %1924 = vmatprep.subr.mxu0 0.0
        %1925 = vmatpush1.msra.mxu0 0.0
        %1926 = vmatprep.subr.mxu0 0.0
        %1927 = vmatpush1.msra.mxu0 0.0
        %1928 = vmatprep.subr.mxu0 0.0
        %1929 = vmatpush1.msra.mxu0 0.0
        %1930 = vmatprep.subr.mxu0 0.0
        %1931 = vmatpush1.msra.mxu0 0.0
        %1932 = vmatprep.subr.mxu0 0.0
        %1933 = vmatpush1.msra.mxu0 0.0
        %1934 = vmatprep.mubr.f32.mxu0 0.0
        %1935 = vmatmul.mubr.f32.gmra.mrb[0].mxu0 %v1797
        %v1936 = vpop.f32.mrb[0].mxu0
        %v1937 = vadd.f32 %v1794, %v1936
        %v1938 = vpop.f32.mrb[0].mxu0
        %1939 = vdwg.mxu0
        %vm1940 = vcmp.gt.f32.partialorder %v1866, 0.0
        %vm1941 = vcmp.gt.f32.partialorder %v1868, 0.0
        %vm1942 = vcmp.gt.f32.partialorder %v1937, 0.0
        %v1943 = vstv %s1692
        %v1944 = vmul.f32 %v1943, %v1866
        %v1945 = vmul.f32 %v1943, %v1868
        %v1946 = vmul.f32 %v1943, %v1937
        %v1947 = vsel %vm1940, %v1866, %v1944
        %v1948 = vsel %vm1941, %v1868, %v1945
        %v1949 = vsel %vm1942, %v1937, %v1946
        %v1950 = vmul.f32 %v1947, %v543
        %v1951 = vmul.f32 %v1948, %v547
        %v1952 = vmul.f32 %v1949, %v551
        %1956 = vrot.lane.b32.xlu0 %v1950, 19
        %v1957 = vpop.permute.xlu0 %1956
        %1958 = vrot.lane.b32.xlu0 %v1951, 19
        %v1959 = vpop.permute.xlu0 %1958
        %1960 = vrot.lane.b32.xlu0 %v1952, 19
        %v1961 = vpop.permute.xlu0 %1960
        %v1962 = vsel %vm567, %v1957, %v1959
        %v1963 = vsel %vm567, %v1959, %v1961
        %1967 = vst.msk [vmem:[#allocation2] sm:$0xff] %vm573, %v1957
        %1968 = vst [vmem:[#allocation2 + $0x8] sm:$0xff] %v1962
        %1969 = vst.msk [vmem:[#allocation2 + $0x10] sm:$0xff] %vm576, %v1963
        %s1970 = scalar_lea.vmem %s2, 48
        %v1971 = vld [vmem:[%s1970] sm:$0xff]
        %v1972 = vld [vmem:[#allocation2] sm:$0xff]
        %v1973 = vld [vmem:[#allocation2 + $0x8] sm:$0xff]
        %v1974 = vld [vmem:[#allocation2 + $0x10] sm:$0xff]
        %1978 = vrot.lane.b32.xlu0 %v1972, 127
        %v1979 = vpop.permute.xlu0 %1978
        %1980 = vrot.lane.b32.xlu0 %v1973, 127
        %v1981 = vpop.permute.xlu0 %1980
        %1982 = vrot.lane.b32.xlu0 %v1974, 127
        %v1983 = vpop.permute.xlu0 %1982
        %v1984 = vsel %vm287, %v1979, %v1981
        %v1985 = vsel %vm287, %v1981, %v1983
        %1989 = vrot.lane.b32.xlu0 %v1972, 126
        %v1990 = vpop.permute.xlu0 %1989
        %1991 = vrot.lane.b32.xlu0 %v1973, 126
        %v1992 = vpop.permute.xlu0 %1991
        %1993 = vrot.lane.b32.xlu0 %v1974, 126
        %v1994 = vpop.permute.xlu0 %1993
        %v1995 = vsel %vm299, %v1990, %v1992
        %v1996 = vsel %vm299, %v1992, %v1994
        %2000 = vrot.lane.b32.xlu0 %v1972, 110
        %v2001 = vpop.permute.xlu0 %2000
        %2002 = vrot.lane.b32.xlu0 %v1973, 110
        %v2003 = vpop.permute.xlu0 %2002
        %2004 = vrot.lane.b32.xlu0 %v1974, 110
        %v2005 = vpop.permute.xlu0 %2004
        %v2006 = vsel %vm311, %v2001, %v2003
        %v2007 = vsel %vm311, %v2003, %v2005
        %2011 = vrot.lane.b32.xlu0 %v1972, 109
        %v2012 = vpop.permute.xlu0 %2011
        %2013 = vrot.lane.b32.xlu0 %v1973, 109
        %v2014 = vpop.permute.xlu0 %2013
        %2015 = vrot.lane.b32.xlu0 %v1974, 109
        %v2016 = vpop.permute.xlu0 %2015
        %v2017 = vsel %vm323, %v2012, %v2014
        %v2018 = vsel %vm323, %v2014, %v2016
        %2022 = vrot.lane.b32.xlu0 %v1972, 108
        %v2023 = vpop.permute.xlu0 %2022
        %2024 = vrot.lane.b32.xlu0 %v1973, 108
        %v2025 = vpop.permute.xlu0 %2024
        %2026 = vrot.lane.b32.xlu0 %v1974, 108
        %v2027 = vpop.permute.xlu0 %2026
        %v2028 = vsel %vm335, %v2023, %v2025
        %v2029 = vsel %vm335, %v2025, %v2027
        %2033 = vrot.lane.b32.xlu0 %v1972, 92
        %v2034 = vpop.permute.xlu0 %2033
        %2035 = vrot.lane.b32.xlu0 %v1973, 92
        %v2036 = vpop.permute.xlu0 %2035
        %2037 = vrot.lane.b32.xlu0 %v1974, 92
        %v2038 = vpop.permute.xlu0 %2037
        %v2039 = vsel %vm347, %v2034, %v2036
        %v2040 = vsel %vm347, %v2036, %v2038
        %2044 = vrot.lane.b32.xlu0 %v1972, 91
        %v2045 = vpop.permute.xlu0 %2044
        %2046 = vrot.lane.b32.xlu0 %v1973, 91
        %v2047 = vpop.permute.xlu0 %2046
        %2048 = vrot.lane.b32.xlu0 %v1974, 91
        %v2049 = vpop.permute.xlu0 %2048
        %v2050 = vsel %vm359, %v2045, %v2047
        %v2051 = vsel %vm359, %v2047, %v2049
        %2055 = vrot.lane.b32.xlu0 %v1972, 90
        %v2056 = vpop.permute.xlu0 %2055
        %2057 = vrot.lane.b32.xlu0 %v1973, 90
        %v2058 = vpop.permute.xlu0 %2057
        %2059 = vrot.lane.b32.xlu0 %v1974, 90
        %v2060 = vpop.permute.xlu0 %2059
        %v2061 = vsel %vm371, %v2056, %v2058
        %v2062 = vsel %vm371, %v2058, %v2060
        %s2066 = scalar_lea.vmem %s3, 48
        %v2067 = vld [vmem:[%s2066] sm:$0xff]
        %2069 = vset.pattern.permute.xlu0 0
        %2070 = vperm.xlu0 %2069, %v2067
        %v2071 = vpop.permute.xlu0 %2070
        %v2074 = vsel %vm383, %v1971, 0
        %2076 = vmatprep.subr.mxu0 %v1973
        %2077 = vmatpush1.msra.mxu0 %v1972
        %2078 = vmatprep.subr.mxu0 %v1985
        %2079 = vmatpush1.msra.mxu0 %v1984
        %2080 = vmatprep.subr.mxu0 %v1996
        %2081 = vmatpush1.msra.mxu0 %v1995
        %2082 = vmatprep.subr.mxu0 %v2007
        %2083 = vmatpush1.msra.mxu0 %v2006
        %2084 = vmatprep.subr.mxu0 %v2018
        %2085 = vmatpush1.msra.mxu0 %v2017
        %2086 = vmatprep.subr.mxu0 %v2029
        %2087 = vmatpush1.msra.mxu0 %v2028
        %2088 = vmatprep.subr.mxu0 %v2040
        %2089 = vmatpush1.msra.mxu0 %v2039
        %2090 = vmatprep.subr.mxu0 %v2051
        %2091 = vmatpush1.msra.mxu0 %v2050
        %2092 = vmatprep.subr.mxu0 %v2062
        %2093 = vmatpush1.msra.mxu0 %v2061
        %2094 = vmatprep.subr.mxu0 0.0
        %2095 = vmatpush1.msra.mxu0 0.0
        %2096 = vmatprep.subr.mxu0 0.0
        %2097 = vmatpush1.msra.mxu0 0.0
        %2098 = vmatprep.subr.mxu0 0.0
        %2099 = vmatpush1.msra.mxu0 0.0
        %2100 = vmatprep.subr.mxu0 0.0
        %2101 = vmatpush1.msra.mxu0 0.0
        %2102 = vmatprep.subr.mxu0 0.0
        %2103 = vmatpush1.msra.mxu0 0.0
        %2104 = vmatprep.subr.mxu0 0.0
        %2105 = vmatpush1.msra.mxu0 0.0
        %2106 = vmatprep.subr.mxu0 0.0
        %2107 = vmatpush1.msra.mxu0 0.0
        %2108 = vmatprep.subr.mxu0 0.0
        %2109 = vmatpush1.msra.mxu0 0.0
        %2110 = vmatprep.subr.mxu0 0.0
        %2111 = vmatpush1.msra.mxu0 0.0
        %2112 = vmatprep.subr.mxu0 0.0
        %2113 = vmatpush1.msra.mxu0 0.0
        %2114 = vmatprep.subr.mxu0 0.0
        %2115 = vmatpush1.msra.mxu0 0.0
        %2116 = vmatprep.subr.mxu0 0.0
        %2117 = vmatpush1.msra.mxu0 0.0
        %2118 = vmatprep.subr.mxu0 0.0
        %2119 = vmatpush1.msra.mxu0 0.0
        %2120 = vmatprep.subr.mxu0 0.0
        %2121 = vmatpush1.msra.mxu0 0.0
        %2122 = vmatprep.subr.mxu0 0.0
        %2123 = vmatpush1.msra.mxu0 0.0
        %2124 = vmatprep.subr.mxu0 0.0
        %2125 = vmatpush1.msra.mxu0 0.0
        %2126 = vmatprep.subr.mxu0 0.0
        %2127 = vmatpush1.msra.mxu0 0.0
        %2128 = vmatprep.subr.mxu0 0.0
        %2129 = vmatpush1.msra.mxu0 0.0
        %2130 = vmatprep.subr.mxu0 0.0
        %2131 = vmatpush1.msra.mxu0 0.0
        %2132 = vmatprep.subr.mxu0 0.0
        %2133 = vmatpush1.msra.mxu0 0.0
        %2134 = vmatprep.subr.mxu0 0.0
        %2135 = vmatpush1.msra.mxu0 0.0
        %2136 = vmatprep.subr.mxu0 0.0
        %2137 = vmatpush1.msra.mxu0 0.0
        %2138 = vmatprep.subr.mxu0 0.0
        %2139 = vmatpush1.msra.mxu0 0.0
        %2140 = vmatprep.mubr.f32.mxu0 0.0
        %2141 = vmatmul.mubr.f32.gmra.mrb[0].mxu0 %v2074
        %v2142 = vpop.f32.mrb[0].mxu0
        %v2143 = vadd.f32 %v2071, %v2142
        %v2144 = vpop.f32.mrb[0].mxu0
        %v2145 = vadd.f32 %v2071, %v2144
        %2146 = vdwg.mxu0
        %2147 = vmatprep.subr.mxu0 0.0
        %2148 = vmatpush1.msra.mxu0 %v1974
        %2149 = vmatprep.subr.mxu0 0.0
        %2150 = vmatpush1.msra.mxu0 %v1983
        %2151 = vmatprep.subr.mxu0 0.0
        %2152 = vmatpush1.msra.mxu0 %v1994
        %2153 = vmatprep.subr.mxu0 0.0
        %2154 = vmatpush1.msra.mxu0 %v2005
        %2155 = vmatprep.subr.mxu0 0.0
        %2156 = vmatpush1.msra.mxu0 %v2016
        %2157 = vmatprep.subr.mxu0 0.0
        %2158 = vmatpush1.msra.mxu0 %v2027
        %2159 = vmatprep.subr.mxu0 0.0
        %2160 = vmatpush1.msra.mxu0 %v2038
        %2161 = vmatprep.subr.mxu0 0.0
        %2162 = vmatpush1.msra.mxu0 %v2049
        %2163 = vmatprep.subr.mxu0 0.0
        %2164 = vmatpush1.msra.mxu0 %v2060
        %2165 = vmatprep.subr.mxu0 0.0
        %2166 = vmatpush1.msra.mxu0 0.0
        %2167 = vmatprep.subr.mxu0 0.0
        %2168 = vmatpush1.msra.mxu0 0.0
        %2169 = vmatprep.subr.mxu0 0.0
        %2170 = vmatpush1.msra.mxu0 0.0
        %2171 = vmatprep.subr.mxu0 0.0
        %2172 = vmatpush1.msra.mxu0 0.0
        %2173 = vmatprep.subr.mxu0 0.0
        %2174 = vmatpush1.msra.mxu0 0.0
        %2175 = vmatprep.subr.mxu0 0.0
        %2176 = vmatpush1.msra.mxu0 0.0
        %2177 = vmatprep.subr.mxu0 0.0
        %2178 = vmatpush1.msra.mxu0 0.0
        %2179 = vmatprep.subr.mxu0 0.0
        %2180 = vmatpush1.msra.mxu0 0.0
        %2181 = vmatprep.subr.mxu0 0.0
        %2182 = vmatpush1.msra.mxu0 0.0
        %2183 = vmatprep.subr.mxu0 0.0
        %2184 = vmatpush1.msra.mxu0 0.0
        %2185 = vmatprep.subr.mxu0 0.0
        %2186 = vmatpush1.msra.mxu0 0.0
        %2187 = vmatprep.subr.mxu0 0.0
        %2188 = vmatpush1.msra.mxu0 0.0
        %2189 = vmatprep.subr.mxu0 0.0
        %2190 = vmatpush1.msra.mxu0 0.0
        %2191 = vmatprep.subr.mxu0 0.0
        %2192 = vmatpush1.msra.mxu0 0.0
        %2193 = vmatprep.subr.mxu0 0.0
        %2194 = vmatpush1.msra.mxu0 0.0
        %2195 = vmatprep.subr.mxu0 0.0
        %2196 = vmatpush1.msra.mxu0 0.0
        %2197 = vmatprep.subr.mxu0 0.0
        %2198 = vmatpush1.msra.mxu0 0.0
        %2199 = vmatprep.subr.mxu0 0.0
        %2200 = vmatpush1.msra.mxu0 0.0
        %2201 = vmatprep.subr.mxu0 0.0
        %2202 = vmatpush1.msra.mxu0 0.0
        %2203 = vmatprep.subr.mxu0 0.0
        %2204 = vmatpush1.msra.mxu0 0.0
        %2205 = vmatprep.subr.mxu0 0.0
        %2206 = vmatpush1.msra.mxu0 0.0
        %2207 = vmatprep.subr.mxu0 0.0
        %2208 = vmatpush1.msra.mxu0 0.0
        %2209 = vmatprep.subr.mxu0 0.0
        %2210 = vmatpush1.msra.mxu0 0.0
        %2211 = vmatprep.mubr.f32.mxu0 0.0
        %2212 = vmatmul.mubr.f32.gmra.mrb[0].mxu0 %v2074
        %v2213 = vpop.f32.mrb[0].mxu0
        %v2214 = vadd.f32 %v2071, %v2213
        %v2215 = vpop.f32.mrb[0].mxu0
        %2216 = vdwg.mxu0
        %vm2217 = vcmp.gt.f32.partialorder %v2143, 0.0
        %vm2218 = vcmp.gt.f32.partialorder %v2145, 0.0
        %vm2219 = vcmp.gt.f32.partialorder %v2214, 0.0
        %v2220 = vmul.f32 %v1943, %v2143
        %v2221 = vmul.f32 %v1943, %v2145
        %v2222 = vmul.f32 %v1943, %v2214
        %v2223 = vsel %vm2217, %v2143, %v2220
        %v2224 = vsel %vm2218, %v2145, %v2221
        %v2225 = vsel %vm2219, %v2214, %v2222
        %v2226 = vmul.f32 %v2223, %v543
        %v2227 = vmul.f32 %v2224, %v547
        %v2228 = vmul.f32 %v2225, %v551
        %v2229 = vadd.f32 %v2226, %v1672
        %v2230 = vadd.f32 %v2227, %v1673
        %v2231 = vadd.f32 %v2228, %v1674
        %2235 = vrot.lane.b32.xlu0 %v2229, 19
        %v2236 = vpop.permute.xlu0 %2235
        %2237 = vrot.lane.b32.xlu0 %v2230, 19
        %v2238 = vpop.permute.xlu0 %2237
        %2239 = vrot.lane.b32.xlu0 %v2231, 19
        %v2240 = vpop.permute.xlu0 %2239
        %v2241 = vsel %vm567, %v2236, %v2238
        %v2242 = vsel %vm567, %v2238, %v2240
        %2246 = vst.msk [vmem:[#allocation2] sm:$0xff] %vm573, %v2236
        %2247 = vst [vmem:[#allocation2 + $0x8] sm:$0xff] %v2241
        %2248 = vst.msk [vmem:[#allocation2 + $0x10] sm:$0xff] %vm576, %v2242
        %s2249 = sld [smem:[#allocation3 + $0x4]]
        %s2250 = scalar_lea.vmem %s2, 56
        %v2251 = vld [vmem:[%s2250] sm:$0xff]
        %v2252 = vld [vmem:[#allocation2] sm:$0xff]
        %v2253 = vld [vmem:[#allocation2 + $0x8] sm:$0xff]
        %v2254 = vld [vmem:[#allocation2 + $0x10] sm:$0xff]
        %2258 = vrot.lane.b32.xlu0 %v2252, 127
        %v2259 = vpop.permute.xlu0 %2258
        %2260 = vrot.lane.b32.xlu0 %v2253, 127
        %v2261 = vpop.permute.xlu0 %2260
        %2262 = vrot.lane.b32.xlu0 %v2254, 127
        %v2263 = vpop.permute.xlu0 %2262
        %v2264 = vsel %vm287, %v2259, %v2261
        %v2265 = vsel %vm287, %v2261, %v2263
        %2269 = vrot.lane.b32.xlu0 %v2252, 126
        %v2270 = vpop.permute.xlu0 %2269
        %2271 = vrot.lane.b32.xlu0 %v2253, 126
        %v2272 = vpop.permute.xlu0 %2271
        %2273 = vrot.lane.b32.xlu0 %v2254, 126
        %v2274 = vpop.permute.xlu0 %2273
        %v2275 = vsel %vm299, %v2270, %v2272
        %v2276 = vsel %vm299, %v2272, %v2274
        %2280 = vrot.lane.b32.xlu0 %v2252, 110
        %v2281 = vpop.permute.xlu0 %2280
        %2282 = vrot.lane.b32.xlu0 %v2253, 110
        %v2283 = vpop.permute.xlu0 %2282
        %2284 = vrot.lane.b32.xlu0 %v2254, 110
        %v2285 = vpop.permute.xlu0 %2284
        %v2286 = vsel %vm311, %v2281, %v2283
        %v2287 = vsel %vm311, %v2283, %v2285
        %2291 = vrot.lane.b32.xlu0 %v2252, 109
        %v2292 = vpop.permute.xlu0 %2291
        %2293 = vrot.lane.b32.xlu0 %v2253, 109
        %v2294 = vpop.permute.xlu0 %2293
        %2295 = vrot.lane.b32.xlu0 %v2254, 109
        %v2296 = vpop.permute.xlu0 %2295
        %v2297 = vsel %vm323, %v2292, %v2294
        %v2298 = vsel %vm323, %v2294, %v2296
        %2302 = vrot.lane.b32.xlu0 %v2252, 108
        %v2303 = vpop.permute.xlu0 %2302
        %2304 = vrot.lane.b32.xlu0 %v2253, 108
        %v2305 = vpop.permute.xlu0 %2304
        %2306 = vrot.lane.b32.xlu0 %v2254, 108
        %v2307 = vpop.permute.xlu0 %2306
        %v2308 = vsel %vm335, %v2303, %v2305
        %v2309 = vsel %vm335, %v2305, %v2307
        %2313 = vrot.lane.b32.xlu0 %v2252, 92
        %v2314 = vpop.permute.xlu0 %2313
        %2315 = vrot.lane.b32.xlu0 %v2253, 92
        %v2316 = vpop.permute.xlu0 %2315
        %2317 = vrot.lane.b32.xlu0 %v2254, 92
        %v2318 = vpop.permute.xlu0 %2317
        %v2319 = vsel %vm347, %v2314, %v2316
        %v2320 = vsel %vm347, %v2316, %v2318
        %2324 = vrot.lane.b32.xlu0 %v2252, 91
        %v2325 = vpop.permute.xlu0 %2324
        %2326 = vrot.lane.b32.xlu0 %v2253, 91
        %v2327 = vpop.permute.xlu0 %2326
        %2328 = vrot.lane.b32.xlu0 %v2254, 91
        %v2329 = vpop.permute.xlu0 %2328
        %v2330 = vsel %vm359, %v2325, %v2327
        %v2331 = vsel %vm359, %v2327, %v2329
        %2335 = vrot.lane.b32.xlu0 %v2252, 90
        %v2336 = vpop.permute.xlu0 %2335
        %2337 = vrot.lane.b32.xlu0 %v2253, 90
        %v2338 = vpop.permute.xlu0 %2337
        %2339 = vrot.lane.b32.xlu0 %v2254, 90
        %v2340 = vpop.permute.xlu0 %2339
        %v2341 = vsel %vm371, %v2336, %v2338
        %v2342 = vsel %vm371, %v2338, %v2340
        %s2346 = scalar_lea.vmem %s3, 56
        %v2347 = vld [vmem:[%s2346] sm:$0xff]
        %2349 = vset.pattern.permute.xlu0 0
        %2350 = vperm.xlu0 %2349, %v2347
        %v2351 = vpop.permute.xlu0 %2350
        %v2354 = vsel %vm383, %v2251, 0
        %2356 = vmatprep.subr.mxu0 %v2253
        %2357 = vmatpush1.msra.mxu0 %v2252
        %2358 = vmatprep.subr.mxu0 %v2265
        %2359 = vmatpush1.msra.mxu0 %v2264
        %2360 = vmatprep.subr.mxu0 %v2276
        %2361 = vmatpush1.msra.mxu0 %v2275
        %2362 = vmatprep.subr.mxu0 %v2287
        %2363 = vmatpush1.msra.mxu0 %v2286
        %2364 = vmatprep.subr.mxu0 %v2298
        %2365 = vmatpush1.msra.mxu0 %v2297
        %2366 = vmatprep.subr.mxu0 %v2309
        %2367 = vmatpush1.msra.mxu0 %v2308
        %2368 = vmatprep.subr.mxu0 %v2320
        %2369 = vmatpush1.msra.mxu0 %v2319
        %2370 = vmatprep.subr.mxu0 %v2331
        %2371 = vmatpush1.msra.mxu0 %v2330
        %2372 = vmatprep.subr.mxu0 %v2342
        %2373 = vmatpush1.msra.mxu0 %v2341
        %2374 = vmatprep.subr.mxu0 0.0
        %2375 = vmatpush1.msra.mxu0 0.0
        %2376 = vmatprep.subr.mxu0 0.0
        %2377 = vmatpush1.msra.mxu0 0.0
        %2378 = vmatprep.subr.mxu0 0.0
        %2379 = vmatpush1.msra.mxu0 0.0
        %2380 = vmatprep.subr.mxu0 0.0
        %2381 = vmatpush1.msra.mxu0 0.0
        %2382 = vmatprep.subr.mxu0 0.0
        %2383 = vmatpush1.msra.mxu0 0.0
        %2384 = vmatprep.subr.mxu0 0.0
        %2385 = vmatpush1.msra.mxu0 0.0
        %2386 = vmatprep.subr.mxu0 0.0
        %2387 = vmatpush1.msra.mxu0 0.0
        %2388 = vmatprep.subr.mxu0 0.0
        %2389 = vmatpush1.msra.mxu0 0.0
        %2390 = vmatprep.subr.mxu0 0.0
        %2391 = vmatpush1.msra.mxu0 0.0
        %2392 = vmatprep.subr.mxu0 0.0
        %2393 = vmatpush1.msra.mxu0 0.0
        %2394 = vmatprep.subr.mxu0 0.0
        %2395 = vmatpush1.msra.mxu0 0.0
        %2396 = vmatprep.subr.mxu0 0.0
        %2397 = vmatpush1.msra.mxu0 0.0
        %2398 = vmatprep.subr.mxu0 0.0
        %2399 = vmatpush1.msra.mxu0 0.0
        %2400 = vmatprep.subr.mxu0 0.0
        %2401 = vmatpush1.msra.mxu0 0.0
        %2402 = vmatprep.subr.mxu0 0.0
        %2403 = vmatpush1.msra.mxu0 0.0
        %2404 = vmatprep.subr.mxu0 0.0
        %2405 = vmatpush1.msra.mxu0 0.0
        %2406 = vmatprep.subr.mxu0 0.0
        %2407 = vmatpush1.msra.mxu0 0.0
        %2408 = vmatprep.subr.mxu0 0.0
        %2409 = vmatpush1.msra.mxu0 0.0
        %2410 = vmatprep.subr.mxu0 0.0
        %2411 = vmatpush1.msra.mxu0 0.0
        %2412 = vmatprep.subr.mxu0 0.0
        %2413 = vmatpush1.msra.mxu0 0.0
        %2414 = vmatprep.subr.mxu0 0.0
        %2415 = vmatpush1.msra.mxu0 0.0
        %2416 = vmatprep.subr.mxu0 0.0
        %2417 = vmatpush1.msra.mxu0 0.0
        %2418 = vmatprep.subr.mxu0 0.0
        %2419 = vmatpush1.msra.mxu0 0.0
        %2420 = vmatprep.mubr.f32.mxu0 0.0
        %2421 = vmatmul.mubr.f32.gmra.mrb[0].mxu0 %v2354
        %v2422 = vpop.f32.mrb[0].mxu0
        %v2423 = vadd.f32 %v2351, %v2422
        %v2424 = vpop.f32.mrb[0].mxu0
        %v2425 = vadd.f32 %v2351, %v2424
        %2426 = vdwg.mxu0
        %2427 = vmatprep.subr.mxu0 0.0
        %2428 = vmatpush1.msra.mxu0 %v2254
        %2429 = vmatprep.subr.mxu0 0.0
        %2430 = vmatpush1.msra.mxu0 %v2263
        %2431 = vmatprep.subr.mxu0 0.0
        %2432 = vmatpush1.msra.mxu0 %v2274
        %2433 = vmatprep.subr.mxu0 0.0
        %2434 = vmatpush1.msra.mxu0 %v2285
        %2435 = vmatprep.subr.mxu0 0.0
        %2436 = vmatpush1.msra.mxu0 %v2296
        %2437 = vmatprep.subr.mxu0 0.0
        %2438 = vmatpush1.msra.mxu0 %v2307
        %2439 = vmatprep.subr.mxu0 0.0
        %2440 = vmatpush1.msra.mxu0 %v2318
        %2441 = vmatprep.subr.mxu0 0.0
        %2442 = vmatpush1.msra.mxu0 %v2329
        %2443 = vmatprep.subr.mxu0 0.0
        %2444 = vmatpush1.msra.mxu0 %v2340
        %2445 = vmatprep.subr.mxu0 0.0
        %2446 = vmatpush1.msra.mxu0 0.0
        %2447 = vmatprep.subr.mxu0 0.0
        %2448 = vmatpush1.msra.mxu0 0.0
        %2449 = vmatprep.subr.mxu0 0.0
        %2450 = vmatpush1.msra.mxu0 0.0
        %2451 = vmatprep.subr.mxu0 0.0
        %2452 = vmatpush1.msra.mxu0 0.0
        %2453 = vmatprep.subr.mxu0 0.0
        %2454 = vmatpush1.msra.mxu0 0.0
        %2455 = vmatprep.subr.mxu0 0.0
        %2456 = vmatpush1.msra.mxu0 0.0
        %2457 = vmatprep.subr.mxu0 0.0
        %2458 = vmatpush1.msra.mxu0 0.0
        %2459 = vmatprep.subr.mxu0 0.0
        %2460 = vmatpush1.msra.mxu0 0.0
        %2461 = vmatprep.subr.mxu0 0.0
        %2462 = vmatpush1.msra.mxu0 0.0
        %2463 = vmatprep.subr.mxu0 0.0
        %2464 = vmatpush1.msra.mxu0 0.0
        %2465 = vmatprep.subr.mxu0 0.0
        %2466 = vmatpush1.msra.mxu0 0.0
        %2467 = vmatprep.subr.mxu0 0.0
        %2468 = vmatpush1.msra.mxu0 0.0
        %2469 = vmatprep.subr.mxu0 0.0
        %2470 = vmatpush1.msra.mxu0 0.0
        %2471 = vmatprep.subr.mxu0 0.0
        %2472 = vmatpush1.msra.mxu0 0.0
        %2473 = vmatprep.subr.mxu0 0.0
        %2474 = vmatpush1.msra.mxu0 0.0
        %2475 = vmatprep.subr.mxu0 0.0
        %2476 = vmatpush1.msra.mxu0 0.0
        %2477 = vmatprep.subr.mxu0 0.0
        %2478 = vmatpush1.msra.mxu0 0.0
        %2479 = vmatprep.subr.mxu0 0.0
        %2480 = vmatpush1.msra.mxu0 0.0
        %2481 = vmatprep.subr.mxu0 0.0
        %2482 = vmatpush1.msra.mxu0 0.0
        %2483 = vmatprep.subr.mxu0 0.0
        %2484 = vmatpush1.msra.mxu0 0.0
        %2485 = vmatprep.subr.mxu0 0.0
        %2486 = vmatpush1.msra.mxu0 0.0
        %2487 = vmatprep.subr.mxu0 0.0
        %2488 = vmatpush1.msra.mxu0 0.0
        %2489 = vmatprep.subr.mxu0 0.0
        %2490 = vmatpush1.msra.mxu0 0.0
        %2491 = vmatprep.mubr.f32.mxu0 0.0
        %2492 = vmatmul.mubr.f32.gmra.mrb[0].mxu0 %v2354
        %v2493 = vpop.f32.mrb[0].mxu0
        %v2494 = vadd.f32 %v2351, %v2493
        %v2495 = vpop.f32.mrb[0].mxu0
        %2496 = vdwg.mxu0
        %vm2497 = vcmp.gt.f32.partialorder %v2423, 0.0
        %vm2498 = vcmp.gt.f32.partialorder %v2425, 0.0
        %vm2499 = vcmp.gt.f32.partialorder %v2494, 0.0
        %v2500 = vstv %s2249
        %v2501 = vmul.f32 %v2500, %v2423
        %v2502 = vmul.f32 %v2500, %v2425
        %v2503 = vmul.f32 %v2500, %v2494
        %v2504 = vsel %vm2497, %v2423, %v2501
        %v2505 = vsel %vm2498, %v2425, %v2502
        %v2506 = vsel %vm2499, %v2494, %v2503
        %v2507 = vmul.f32 %v2504, %v543
        %v2508 = vmul.f32 %v2505, %v547
        %v2509 = vmul.f32 %v2506, %v551
        %2513 = vrot.lane.b32.xlu0 %v2507, 19
        %v2514 = vpop.permute.xlu0 %2513
        %2515 = vrot.lane.b32.xlu0 %v2508, 19
        %v2516 = vpop.permute.xlu0 %2515
        %2517 = vrot.lane.b32.xlu0 %v2509, 19
        %v2518 = vpop.permute.xlu0 %2517
        %v2519 = vsel %vm567, %v2514, %v2516
        %v2520 = vsel %vm567, %v2516, %v2518
        %2524 = vst.msk [vmem:[#allocation2] sm:$0xff] %vm573, %v2514
        %2525 = vst [vmem:[#allocation2 + $0x8] sm:$0xff] %v2519
        %2526 = vst.msk [vmem:[#allocation2 + $0x10] sm:$0xff] %vm576, %v2520
        %s2527 = scalar_lea.vmem %s2, 64
        %v2528 = vld [vmem:[%s2527] sm:$0xff]
        %v2529 = vld [vmem:[#allocation2] sm:$0xff]
        %v2530 = vld [vmem:[#allocation2 + $0x8] sm:$0xff]
        %v2531 = vld [vmem:[#allocation2 + $0x10] sm:$0xff]
        %2535 = vrot.lane.b32.xlu0 %v2529, 127
        %v2536 = vpop.permute.xlu0 %2535
        %2537 = vrot.lane.b32.xlu0 %v2530, 127
        %v2538 = vpop.permute.xlu0 %2537
        %2539 = vrot.lane.b32.xlu0 %v2531, 127
        %v2540 = vpop.permute.xlu0 %2539
        %v2541 = vsel %vm287, %v2536, %v2538
        %v2542 = vsel %vm287, %v2538, %v2540
        %2546 = vrot.lane.b32.xlu0 %v2529, 126
        %v2547 = vpop.permute.xlu0 %2546
        %2548 = vrot.lane.b32.xlu0 %v2530, 126
        %v2549 = vpop.permute.xlu0 %2548
        %2550 = vrot.lane.b32.xlu0 %v2531, 126
        %v2551 = vpop.permute.xlu0 %2550
        %v2552 = vsel %vm299, %v2547, %v2549
        %v2553 = vsel %vm299, %v2549, %v2551
        %2557 = vrot.lane.b32.xlu0 %v2529, 110
        %v2558 = vpop.permute.xlu0 %2557
        %2559 = vrot.lane.b32.xlu0 %v2530, 110
        %v2560 = vpop.permute.xlu0 %2559
        %2561 = vrot.lane.b32.xlu0 %v2531, 110
        %v2562 = vpop.permute.xlu0 %2561
        %v2563 = vsel %vm311, %v2558, %v2560
        %v2564 = vsel %vm311, %v2560, %v2562
        %2568 = vrot.lane.b32.xlu0 %v2529, 109
        %v2569 = vpop.permute.xlu0 %2568
        %2570 = vrot.lane.b32.xlu0 %v2530, 109
        %v2571 = vpop.permute.xlu0 %2570
        %2572 = vrot.lane.b32.xlu0 %v2531, 109
        %v2573 = vpop.permute.xlu0 %2572
        %v2574 = vsel %vm323, %v2569, %v2571
        %v2575 = vsel %vm323, %v2571, %v2573
        %2579 = vrot.lane.b32.xlu0 %v2529, 108
        %v2580 = vpop.permute.xlu0 %2579
        %2581 = vrot.lane.b32.xlu0 %v2530, 108
        %v2582 = vpop.permute.xlu0 %2581
        %2583 = vrot.lane.b32.xlu0 %v2531, 108
        %v2584 = vpop.permute.xlu0 %2583
        %v2585 = vsel %vm335, %v2580, %v2582
        %v2586 = vsel %vm335, %v2582, %v2584
        %2590 = vrot.lane.b32.xlu0 %v2529, 92
        %v2591 = vpop.permute.xlu0 %2590
        %2592 = vrot.lane.b32.xlu0 %v2530, 92
        %v2593 = vpop.permute.xlu0 %2592
        %2594 = vrot.lane.b32.xlu0 %v2531, 92
        %v2595 = vpop.permute.xlu0 %2594
        %v2596 = vsel %vm347, %v2591, %v2593
        %v2597 = vsel %vm347, %v2593, %v2595
        %2601 = vrot.lane.b32.xlu0 %v2529, 91
        %v2602 = vpop.permute.xlu0 %2601
        %2603 = vrot.lane.b32.xlu0 %v2530, 91
        %v2604 = vpop.permute.xlu0 %2603
        %2605 = vrot.lane.b32.xlu0 %v2531, 91
        %v2606 = vpop.permute.xlu0 %2605
        %v2607 = vsel %vm359, %v2602, %v2604
        %v2608 = vsel %vm359, %v2604, %v2606
        %2612 = vrot.lane.b32.xlu0 %v2529, 90
        %v2613 = vpop.permute.xlu0 %2612
        %2614 = vrot.lane.b32.xlu0 %v2530, 90
        %v2615 = vpop.permute.xlu0 %2614
        %2616 = vrot.lane.b32.xlu0 %v2531, 90
        %v2617 = vpop.permute.xlu0 %2616
        %v2618 = vsel %vm371, %v2613, %v2615
        %v2619 = vsel %vm371, %v2615, %v2617
        %s2623 = scalar_lea.vmem %s3, 64
        %v2624 = vld [vmem:[%s2623] sm:$0xff]
        %2626 = vset.pattern.permute.xlu0 0
        %2627 = vperm.xlu0 %2626, %v2624
        %v2628 = vpop.permute.xlu0 %2627
        %v2631 = vsel %vm383, %v2528, 0
        %2633 = vmatprep.subr.mxu0 %v2530
        %2634 = vmatpush1.msra.mxu0 %v2529
        %2635 = vmatprep.subr.mxu0 %v2542
        %2636 = vmatpush1.msra.mxu0 %v2541
        %2637 = vmatprep.subr.mxu0 %v2553
        %2638 = vmatpush1.msra.mxu0 %v2552
        %2639 = vmatprep.subr.mxu0 %v2564
        %2640 = vmatpush1.msra.mxu0 %v2563
        %2641 = vmatprep.subr.mxu0 %v2575
        %2642 = vmatpush1.msra.mxu0 %v2574
        %2643 = vmatprep.subr.mxu0 %v2586
        %2644 = vmatpush1.msra.mxu0 %v2585
        %2645 = vmatprep.subr.mxu0 %v2597
        %2646 = vmatpush1.msra.mxu0 %v2596
        %2647 = vmatprep.subr.mxu0 %v2608
        %2648 = vmatpush1.msra.mxu0 %v2607
        %2649 = vmatprep.subr.mxu0 %v2619
        %2650 = vmatpush1.msra.mxu0 %v2618
        %2651 = vmatprep.subr.mxu0 0.0
        %2652 = vmatpush1.msra.mxu0 0.0
        %2653 = vmatprep.subr.mxu0 0.0
        %2654 = vmatpush1.msra.mxu0 0.0
        %2655 = vmatprep.subr.mxu0 0.0
        %2656 = vmatpush1.msra.mxu0 0.0
        %2657 = vmatprep.subr.mxu0 0.0
        %2658 = vmatpush1.msra.mxu0 0.0
        %2659 = vmatprep.subr.mxu0 0.0
        %2660 = vmatpush1.msra.mxu0 0.0
        %2661 = vmatprep.subr.mxu0 0.0
        %2662 = vmatpush1.msra.mxu0 0.0
        %2663 = vmatprep.subr.mxu0 0.0
        %2664 = vmatpush1.msra.mxu0 0.0
        %2665 = vmatprep.subr.mxu0 0.0
        %2666 = vmatpush1.msra.mxu0 0.0
        %2667 = vmatprep.subr.mxu0 0.0
        %2668 = vmatpush1.msra.mxu0 0.0
        %2669 = vmatprep.subr.mxu0 0.0
        %2670 = vmatpush1.msra.mxu0 0.0
        %2671 = vmatprep.subr.mxu0 0.0
        %2672 = vmatpush1.msra.mxu0 0.0
        %2673 = vmatprep.subr.mxu0 0.0
        %2674 = vmatpush1.msra.mxu0 0.0
        %2675 = vmatprep.subr.mxu0 0.0
        %2676 = vmatpush1.msra.mxu0 0.0
        %2677 = vmatprep.subr.mxu0 0.0
        %2678 = vmatpush1.msra.mxu0 0.0
        %2679 = vmatprep.subr.mxu0 0.0
        %2680 = vmatpush1.msra.mxu0 0.0
        %2681 = vmatprep.subr.mxu0 0.0
        %2682 = vmatpush1.msra.mxu0 0.0
        %2683 = vmatprep.subr.mxu0 0.0
        %2684 = vmatpush1.msra.mxu0 0.0
        %2685 = vmatprep.subr.mxu0 0.0
        %2686 = vmatpush1.msra.mxu0 0.0
        %2687 = vmatprep.subr.mxu0 0.0
        %2688 = vmatpush1.msra.mxu0 0.0
        %2689 = vmatprep.subr.mxu0 0.0
        %2690 = vmatpush1.msra.mxu0 0.0
        %2691 = vmatprep.subr.mxu0 0.0
        %2692 = vmatpush1.msra.mxu0 0.0
        %2693 = vmatprep.subr.mxu0 0.0
        %2694 = vmatpush1.msra.mxu0 0.0
        %2695 = vmatprep.subr.mxu0 0.0
        %2696 = vmatpush1.msra.mxu0 0.0
        %2697 = vmatprep.mubr.f32.mxu0 0.0
        %2698 = vmatmul.mubr.f32.gmra.mrb[0].mxu0 %v2631
        %v2699 = vpop.f32.mrb[0].mxu0
        %v2700 = vadd.f32 %v2628, %v2699
        %v2701 = vpop.f32.mrb[0].mxu0
        %v2702 = vadd.f32 %v2628, %v2701
        %2703 = vdwg.mxu0
        %2704 = vmatprep.subr.mxu0 0.0
        %2705 = vmatpush1.msra.mxu0 %v2531
        %2706 = vmatprep.subr.mxu0 0.0
        %2707 = vmatpush1.msra.mxu0 %v2540
        %2708 = vmatprep.subr.mxu0 0.0
        %2709 = vmatpush1.msra.mxu0 %v2551
        %2710 = vmatprep.subr.mxu0 0.0
        %2711 = vmatpush1.msra.mxu0 %v2562
        %2712 = vmatprep.subr.mxu0 0.0
        %2713 = vmatpush1.msra.mxu0 %v2573
        %2714 = vmatprep.subr.mxu0 0.0
        %2715 = vmatpush1.msra.mxu0 %v2584
        %2716 = vmatprep.subr.mxu0 0.0
        %2717 = vmatpush1.msra.mxu0 %v2595
        %2718 = vmatprep.subr.mxu0 0.0
        %2719 = vmatpush1.msra.mxu0 %v2606
        %2720 = vmatprep.subr.mxu0 0.0
        %2721 = vmatpush1.msra.mxu0 %v2617
        %2722 = vmatprep.subr.mxu0 0.0
        %2723 = vmatpush1.msra.mxu0 0.0
        %2724 = vmatprep.subr.mxu0 0.0
        %2725 = vmatpush1.msra.mxu0 0.0
        %2726 = vmatprep.subr.mxu0 0.0
        %2727 = vmatpush1.msra.mxu0 0.0
        %2728 = vmatprep.subr.mxu0 0.0
        %2729 = vmatpush1.msra.mxu0 0.0
        %2730 = vmatprep.subr.mxu0 0.0
        %2731 = vmatpush1.msra.mxu0 0.0
        %2732 = vmatprep.subr.mxu0 0.0
        %2733 = vmatpush1.msra.mxu0 0.0
        %2734 = vmatprep.subr.mxu0 0.0
        %2735 = vmatpush1.msra.mxu0 0.0
        %2736 = vmatprep.subr.mxu0 0.0
        %2737 = vmatpush1.msra.mxu0 0.0
        %2738 = vmatprep.subr.mxu0 0.0
        %2739 = vmatpush1.msra.mxu0 0.0
        %2740 = vmatprep.subr.mxu0 0.0
        %2741 = vmatpush1.msra.mxu0 0.0
        %2742 = vmatprep.subr.mxu0 0.0
        %2743 = vmatpush1.msra.mxu0 0.0
        %2744 = vmatprep.subr.mxu0 0.0
        %2745 = vmatpush1.msra.mxu0 0.0
        %2746 = vmatprep.subr.mxu0 0.0
        %2747 = vmatpush1.msra.mxu0 0.0
        %2748 = vmatprep.subr.mxu0 0.0
        %2749 = vmatpush1.msra.mxu0 0.0
        %2750 = vmatprep.subr.mxu0 0.0
        %2751 = vmatpush1.msra.mxu0 0.0
        %2752 = vmatprep.subr.mxu0 0.0
        %2753 = vmatpush1.msra.mxu0 0.0
        %2754 = vmatprep.subr.mxu0 0.0
        %2755 = vmatpush1.msra.mxu0 0.0
        %2756 = vmatprep.subr.mxu0 0.0
        %2757 = vmatpush1.msra.mxu0 0.0
        %2758 = vmatprep.subr.mxu0 0.0
        %2759 = vmatpush1.msra.mxu0 0.0
        %2760 = vmatprep.subr.mxu0 0.0
        %2761 = vmatpush1.msra.mxu0 0.0
        %2762 = vmatprep.subr.mxu0 0.0
        %2763 = vmatpush1.msra.mxu0 0.0
        %2764 = vmatprep.subr.mxu0 0.0
        %2765 = vmatpush1.msra.mxu0 0.0
        %2766 = vmatprep.subr.mxu0 0.0
        %2767 = vmatpush1.msra.mxu0 0.0
        %2768 = vmatprep.mubr.f32.mxu0 0.0
        %2769 = vmatmul.mubr.f32.gmra.mrb[0].mxu0 %v2631
        %v2770 = vpop.f32.mrb[0].mxu0
        %v2771 = vadd.f32 %v2628, %v2770
        %v2772 = vpop.f32.mrb[0].mxu0
        %2773 = vdwg.mxu0
        %vm2774 = vcmp.gt.f32.partialorder %v2700, 0.0
        %vm2775 = vcmp.gt.f32.partialorder %v2702, 0.0
        %vm2776 = vcmp.gt.f32.partialorder %v2771, 0.0
        %v2777 = vmul.f32 %v2500, %v2700
        %v2778 = vmul.f32 %v2500, %v2702
        %v2779 = vmul.f32 %v2500, %v2771
        %v2780 = vsel %vm2774, %v2700, %v2777
        %v2781 = vsel %vm2775, %v2702, %v2778
        %v2782 = vsel %vm2776, %v2771, %v2779
        %v2783 = vmul.f32 %v2780, %v543
        %v2784 = vmul.f32 %v2781, %v547
        %v2785 = vmul.f32 %v2782, %v551
        %v2786 = vadd.f32 %v2783, %v2229
        %v2787 = vadd.f32 %v2784, %v2230
        %v2788 = vadd.f32 %v2785, %v2231
        %2792 = vrot.lane.b32.xlu0 %v2786, 19
        %v2793 = vpop.permute.xlu0 %2792
        %2794 = vrot.lane.b32.xlu0 %v2787, 19
        %v2795 = vpop.permute.xlu0 %2794
        %2796 = vrot.lane.b32.xlu0 %v2788, 19
        %v2797 = vpop.permute.xlu0 %2796
        %v2798 = vsel %vm567, %v2793, %v2795
        %v2799 = vsel %vm567, %v2795, %v2797
        %2803 = vst.msk [vmem:[#allocation2] sm:$0xff] %vm573, %v2793
        %2804 = vst [vmem:[#allocation2 + $0x8] sm:$0xff] %v2798
        %2805 = vst.msk [vmem:[#allocation2 + $0x10] sm:$0xff] %vm576, %v2799
        %s2806 = sld [smem:[#allocation3 + $0x5]]
        %s2807 = scalar_lea.vmem %s2, 72
        %v2808 = vld [vmem:[%s2807] sm:$0xff]
        %v2809 = vld [vmem:[#allocation2] sm:$0xff]
        %v2810 = vld [vmem:[#allocation2 + $0x8] sm:$0xff]
        %v2811 = vld [vmem:[#allocation2 + $0x10] sm:$0xff]
        %2815 = vrot.lane.b32.xlu0 %v2809, 127
        %v2816 = vpop.permute.xlu0 %2815
        %2817 = vrot.lane.b32.xlu0 %v2810, 127
        %v2818 = vpop.permute.xlu0 %2817
        %2819 = vrot.lane.b32.xlu0 %v2811, 127
        %v2820 = vpop.permute.xlu0 %2819
        %v2821 = vsel %vm287, %v2816, %v2818
        %v2822 = vsel %vm287, %v2818, %v2820
        %2826 = vrot.lane.b32.xlu0 %v2809, 126
        %v2827 = vpop.permute.xlu0 %2826
        %2828 = vrot.lane.b32.xlu0 %v2810, 126
        %v2829 = vpop.permute.xlu0 %2828
        %2830 = vrot.lane.b32.xlu0 %v2811, 126
        %v2831 = vpop.permute.xlu0 %2830
        %v2832 = vsel %vm299, %v2827, %v2829
        %v2833 = vsel %vm299, %v2829, %v2831
        %2837 = vrot.lane.b32.xlu0 %v2809, 110
        %v2838 = vpop.permute.xlu0 %2837
        %2839 = vrot.lane.b32.xlu0 %v2810, 110
        %v2840 = vpop.permute.xlu0 %2839
        %2841 = vrot.lane.b32.xlu0 %v2811, 110
        %v2842 = vpop.permute.xlu0 %2841
        %v2843 = vsel %vm311, %v2838, %v2840
        %v2844 = vsel %vm311, %v2840, %v2842
        %2848 = vrot.lane.b32.xlu0 %v2809, 109
        %v2849 = vpop.permute.xlu0 %2848
        %2850 = vrot.lane.b32.xlu0 %v2810, 109
        %v2851 = vpop.permute.xlu0 %2850
        %2852 = vrot.lane.b32.xlu0 %v2811, 109
        %v2853 = vpop.permute.xlu0 %2852
        %v2854 = vsel %vm323, %v2849, %v2851
        %v2855 = vsel %vm323, %v2851, %v2853
        %2859 = vrot.lane.b32.xlu0 %v2809, 108
        %v2860 = vpop.permute.xlu0 %2859
        %2861 = vrot.lane.b32.xlu0 %v2810, 108
        %v2862 = vpop.permute.xlu0 %2861
        %2863 = vrot.lane.b32.xlu0 %v2811, 108
        %v2864 = vpop.permute.xlu0 %2863
        %v2865 = vsel %vm335, %v2860, %v2862
        %v2866 = vsel %vm335, %v2862, %v2864
        %2870 = vrot.lane.b32.xlu0 %v2809, 92
        %v2871 = vpop.permute.xlu0 %2870
        %2872 = vrot.lane.b32.xlu0 %v2810, 92
        %v2873 = vpop.permute.xlu0 %2872
        %2874 = vrot.lane.b32.xlu0 %v2811, 92
        %v2875 = vpop.permute.xlu0 %2874
        %v2876 = vsel %vm347, %v2871, %v2873
        %v2877 = vsel %vm347, %v2873, %v2875
        %2881 = vrot.lane.b32.xlu0 %v2809, 91
        %v2882 = vpop.permute.xlu0 %2881
        %2883 = vrot.lane.b32.xlu0 %v2810, 91
        %v2884 = vpop.permute.xlu0 %2883
        %2885 = vrot.lane.b32.xlu0 %v2811, 91
        %v2886 = vpop.permute.xlu0 %2885
        %v2887 = vsel %vm359, %v2882, %v2884
        %v2888 = vsel %vm359, %v2884, %v2886
        %2892 = vrot.lane.b32.xlu0 %v2809, 90
        %v2893 = vpop.permute.xlu0 %2892
        %2894 = vrot.lane.b32.xlu0 %v2810, 90
        %v2895 = vpop.permute.xlu0 %2894
        %2896 = vrot.lane.b32.xlu0 %v2811, 90
        %v2897 = vpop.permute.xlu0 %2896
        %v2898 = vsel %vm371, %v2893, %v2895
        %v2899 = vsel %vm371, %v2895, %v2897
        %s2903 = scalar_lea.vmem %s3, 72
        %v2904 = vld [vmem:[%s2903] sm:$0xff]
        %2906 = vset.pattern.permute.xlu0 0
        %2907 = vperm.xlu0 %2906, %v2904
        %v2908 = vpop.permute.xlu0 %2907
        %v2911 = vsel %vm383, %v2808, 0
        %2913 = vmatprep.subr.mxu0 %v2810
        %2914 = vmatpush1.msra.mxu0 %v2809
        %2915 = vmatprep.subr.mxu0 %v2822
        %2916 = vmatpush1.msra.mxu0 %v2821
        %2917 = vmatprep.subr.mxu0 %v2833
        %2918 = vmatpush1.msra.mxu0 %v2832
        %2919 = vmatprep.subr.mxu0 %v2844
        %2920 = vmatpush1.msra.mxu0 %v2843
        %2921 = vmatprep.subr.mxu0 %v2855
        %2922 = vmatpush1.msra.mxu0 %v2854
        %2923 = vmatprep.subr.mxu0 %v2866
        %2924 = vmatpush1.msra.mxu0 %v2865
        %2925 = vmatprep.subr.mxu0 %v2877
        %2926 = vmatpush1.msra.mxu0 %v2876
        %2927 = vmatprep.subr.mxu0 %v2888
        %2928 = vmatpush1.msra.mxu0 %v2887
        %2929 = vmatprep.subr.mxu0 %v2899
        %2930 = vmatpush1.msra.mxu0 %v2898
        %2931 = vmatprep.subr.mxu0 0.0
        %2932 = vmatpush1.msra.mxu0 0.0
        %2933 = vmatprep.subr.mxu0 0.0
        %2934 = vmatpush1.msra.mxu0 0.0
        %2935 = vmatprep.subr.mxu0 0.0
        %2936 = vmatpush1.msra.mxu0 0.0
        %2937 = vmatprep.subr.mxu0 0.0
        %2938 = vmatpush1.msra.mxu0 0.0
        %2939 = vmatprep.subr.mxu0 0.0
        %2940 = vmatpush1.msra.mxu0 0.0
        %2941 = vmatprep.subr.mxu0 0.0
        %2942 = vmatpush1.msra.mxu0 0.0
        %2943 = vmatprep.subr.mxu0 0.0
        %2944 = vmatpush1.msra.mxu0 0.0
        %2945 = vmatprep.subr.mxu0 0.0
        %2946 = vmatpush1.msra.mxu0 0.0
        %2947 = vmatprep.subr.mxu0 0.0
        %2948 = vmatpush1.msra.mxu0 0.0
        %2949 = vmatprep.subr.mxu0 0.0
        %2950 = vmatpush1.msra.mxu0 0.0
        %2951 = vmatprep.subr.mxu0 0.0
        %2952 = vmatpush1.msra.mxu0 0.0
        %2953 = vmatprep.subr.mxu0 0.0
        %2954 = vmatpush1.msra.mxu0 0.0
        %2955 = vmatprep.subr.mxu0 0.0
        %2956 = vmatpush1.msra.mxu0 0.0
        %2957 = vmatprep.subr.mxu0 0.0
        %2958 = vmatpush1.msra.mxu0 0.0
        %2959 = vmatprep.subr.mxu0 0.0
        %2960 = vmatpush1.msra.mxu0 0.0
        %2961 = vmatprep.subr.mxu0 0.0
        %2962 = vmatpush1.msra.mxu0 0.0
        %2963 = vmatprep.subr.mxu0 0.0
        %2964 = vmatpush1.msra.mxu0 0.0
        %2965 = vmatprep.subr.mxu0 0.0
        %2966 = vmatpush1.msra.mxu0 0.0
        %2967 = vmatprep.subr.mxu0 0.0
        %2968 = vmatpush1.msra.mxu0 0.0
        %2969 = vmatprep.subr.mxu0 0.0
        %2970 = vmatpush1.msra.mxu0 0.0
        %2971 = vmatprep.subr.mxu0 0.0
        %2972 = vmatpush1.msra.mxu0 0.0
        %2973 = vmatprep.subr.mxu0 0.0
        %2974 = vmatpush1.msra.mxu0 0.0
        %2975 = vmatprep.subr.mxu0 0.0
        %2976 = vmatpush1.msra.mxu0 0.0
        %2977 = vmatprep.mubr.f32.mxu0 0.0
        %2978 = vmatmul.mubr.f32.gmra.mrb[0].mxu0 %v2911
        %v2979 = vpop.f32.mrb[0].mxu0
        %v2980 = vadd.f32 %v2908, %v2979
        %v2981 = vpop.f32.mrb[0].mxu0
        %v2982 = vadd.f32 %v2908, %v2981
        %2983 = vdwg.mxu0
        %2984 = vmatprep.subr.mxu0 0.0
        %2985 = vmatpush1.msra.mxu0 %v2811
        %2986 = vmatprep.subr.mxu0 0.0
        %2987 = vmatpush1.msra.mxu0 %v2820
        %2988 = vmatprep.subr.mxu0 0.0
        %2989 = vmatpush1.msra.mxu0 %v2831
        %2990 = vmatprep.subr.mxu0 0.0
        %2991 = vmatpush1.msra.mxu0 %v2842
        %2992 = vmatprep.subr.mxu0 0.0
        %2993 = vmatpush1.msra.mxu0 %v2853
        %2994 = vmatprep.subr.mxu0 0.0
        %2995 = vmatpush1.msra.mxu0 %v2864
        %2996 = vmatprep.subr.mxu0 0.0
        %2997 = vmatpush1.msra.mxu0 %v2875
        %2998 = vmatprep.subr.mxu0 0.0
        %2999 = vmatpush1.msra.mxu0 %v2886
        %3000 = vmatprep.subr.mxu0 0.0
        %3001 = vmatpush1.msra.mxu0 %v2897
        %3002 = vmatprep.subr.mxu0 0.0
        %3003 = vmatpush1.msra.mxu0 0.0
        %3004 = vmatprep.subr.mxu0 0.0
        %3005 = vmatpush1.msra.mxu0 0.0
        %3006 = vmatprep.subr.mxu0 0.0
        %3007 = vmatpush1.msra.mxu0 0.0
        %3008 = vmatprep.subr.mxu0 0.0
        %3009 = vmatpush1.msra.mxu0 0.0
        %3010 = vmatprep.subr.mxu0 0.0
        %3011 = vmatpush1.msra.mxu0 0.0
        %3012 = vmatprep.subr.mxu0 0.0
        %3013 = vmatpush1.msra.mxu0 0.0
        %3014 = vmatprep.subr.mxu0 0.0
        %3015 = vmatpush1.msra.mxu0 0.0
        %3016 = vmatprep.subr.mxu0 0.0
        %3017 = vmatpush1.msra.mxu0 0.0
        %3018 = vmatprep.subr.mxu0 0.0
        %3019 = vmatpush1.msra.mxu0 0.0
        %3020 = vmatprep.subr.mxu0 0.0
        %3021 = vmatpush1.msra.mxu0 0.0
        %3022 = vmatprep.subr.mxu0 0.0
        %3023 = vmatpush1.msra.mxu0 0.0
        %3024 = vmatprep.subr.mxu0 0.0
        %3025 = vmatpush1.msra.mxu0 0.0
        %3026 = vmatprep.subr.mxu0 0.0
        %3027 = vmatpush1.msra.mxu0 0.0
        %3028 = vmatprep.subr.mxu0 0.0
        %3029 = vmatpush1.msra.mxu0 0.0
        %3030 = vmatprep.subr.mxu0 0.0
        %3031 = vmatpush1.msra.mxu0 0.0
        %3032 = vmatprep.subr.mxu0 0.0
        %3033 = vmatpush1.msra.mxu0 0.0
        %3034 = vmatprep.subr.mxu0 0.0
        %3035 = vmatpush1.msra.mxu0 0.0
        %3036 = vmatprep.subr.mxu0 0.0
        %3037 = vmatpush1.msra.mxu0 0.0
        %3038 = vmatprep.subr.mxu0 0.0
        %3039 = vmatpush1.msra.mxu0 0.0
        %3040 = vmatprep.subr.mxu0 0.0
        %3041 = vmatpush1.msra.mxu0 0.0
        %3042 = vmatprep.subr.mxu0 0.0
        %3043 = vmatpush1.msra.mxu0 0.0
        %3044 = vmatprep.subr.mxu0 0.0
        %3045 = vmatpush1.msra.mxu0 0.0
        %3046 = vmatprep.subr.mxu0 0.0
        %3047 = vmatpush1.msra.mxu0 0.0
        %3048 = vmatprep.mubr.f32.mxu0 0.0
        %3049 = vmatmul.mubr.f32.gmra.mrb[0].mxu0 %v2911
        %v3050 = vpop.f32.mrb[0].mxu0
        %v3051 = vadd.f32 %v2908, %v3050
        %v3052 = vpop.f32.mrb[0].mxu0
        %3053 = vdwg.mxu0
        %vm3054 = vcmp.gt.f32.partialorder %v2980, 0.0
        %vm3055 = vcmp.gt.f32.partialorder %v2982, 0.0
        %vm3056 = vcmp.gt.f32.partialorder %v3051, 0.0
        %v3057 = vstv %s2806
        %v3058 = vmul.f32 %v3057, %v2980
        %v3059 = vmul.f32 %v3057, %v2982
        %v3060 = vmul.f32 %v3057, %v3051
        %v3061 = vsel %vm3054, %v2980, %v3058
        %v3062 = vsel %vm3055, %v2982, %v3059
        %v3063 = vsel %vm3056, %v3051, %v3060
        %v3064 = vmul.f32 %v3061, %v543
        %v3065 = vmul.f32 %v3062, %v547
        %v3066 = vmul.f32 %v3063, %v551
        %3070 = vrot.lane.b32.xlu0 %v3064, 19
        %v3071 = vpop.permute.xlu0 %3070
        %3072 = vrot.lane.b32.xlu0 %v3065, 19
        %v3073 = vpop.permute.xlu0 %3072
        %3074 = vrot.lane.b32.xlu0 %v3066, 19
        %v3075 = vpop.permute.xlu0 %3074
        %v3076 = vsel %vm567, %v3071, %v3073
        %v3077 = vsel %vm567, %v3073, %v3075
        %3081 = vst.msk [vmem:[#allocation2] sm:$0xff] %vm573, %v3071
        %3082 = vst [vmem:[#allocation2 + $0x8] sm:$0xff] %v3076
        %3083 = vst.msk [vmem:[#allocation2 + $0x10] sm:$0xff] %vm576, %v3077
        %s3084 = scalar_lea.vmem %s2, 80
        %v3085 = vld [vmem:[%s3084] sm:$0xff]
        %v3086 = vld [vmem:[#allocation2] sm:$0xff]
        %v3087 = vld [vmem:[#allocation2 + $0x8] sm:$0xff]
        %v3088 = vld [vmem:[#allocation2 + $0x10] sm:$0xff]
        %3092 = vrot.lane.b32.xlu0 %v3086, 127
        %v3093 = vpop.permute.xlu0 %3092
        %3094 = vrot.lane.b32.xlu0 %v3087, 127
        %v3095 = vpop.permute.xlu0 %3094
        %3096 = vrot.lane.b32.xlu0 %v3088, 127
        %v3097 = vpop.permute.xlu0 %3096
        %v3098 = vsel %vm287, %v3093, %v3095
        %v3099 = vsel %vm287, %v3095, %v3097
        %3103 = vrot.lane.b32.xlu0 %v3086, 126
        %v3104 = vpop.permute.xlu0 %3103
        %3105 = vrot.lane.b32.xlu0 %v3087, 126
        %v3106 = vpop.permute.xlu0 %3105
        %3107 = vrot.lane.b32.xlu0 %v3088, 126
        %v3108 = vpop.permute.xlu0 %3107
        %v3109 = vsel %vm299, %v3104, %v3106
        %v3110 = vsel %vm299, %v3106, %v3108
        %3114 = vrot.lane.b32.xlu0 %v3086, 110
        %v3115 = vpop.permute.xlu0 %3114
        %3116 = vrot.lane.b32.xlu0 %v3087, 110
        %v3117 = vpop.permute.xlu0 %3116
        %3118 = vrot.lane.b32.xlu0 %v3088, 110
        %v3119 = vpop.permute.xlu0 %3118
        %v3120 = vsel %vm311, %v3115, %v3117
        %v3121 = vsel %vm311, %v3117, %v3119
        %3125 = vrot.lane.b32.xlu0 %v3086, 109
        %v3126 = vpop.permute.xlu0 %3125
        %3127 = vrot.lane.b32.xlu0 %v3087, 109
        %v3128 = vpop.permute.xlu0 %3127
        %3129 = vrot.lane.b32.xlu0 %v3088, 109
        %v3130 = vpop.permute.xlu0 %3129
        %v3131 = vsel %vm323, %v3126, %v3128
        %v3132 = vsel %vm323, %v3128, %v3130
        %3136 = vrot.lane.b32.xlu0 %v3086, 108
        %v3137 = vpop.permute.xlu0 %3136
        %3138 = vrot.lane.b32.xlu0 %v3087, 108
        %v3139 = vpop.permute.xlu0 %3138
        %3140 = vrot.lane.b32.xlu0 %v3088, 108
        %v3141 = vpop.permute.xlu0 %3140
        %v3142 = vsel %vm335, %v3137, %v3139
        %v3143 = vsel %vm335, %v3139, %v3141
        %3147 = vrot.lane.b32.xlu0 %v3086, 92
        %v3148 = vpop.permute.xlu0 %3147
        %3149 = vrot.lane.b32.xlu0 %v3087, 92
        %v3150 = vpop.permute.xlu0 %3149
        %3151 = vrot.lane.b32.xlu0 %v3088, 92
        %v3152 = vpop.permute.xlu0 %3151
        %v3153 = vsel %vm347, %v3148, %v3150
        %v3154 = vsel %vm347, %v3150, %v3152
        %3158 = vrot.lane.b32.xlu0 %v3086, 91
        %v3159 = vpop.permute.xlu0 %3158
        %3160 = vrot.lane.b32.xlu0 %v3087, 91
        %v3161 = vpop.permute.xlu0 %3160
        %3162 = vrot.lane.b32.xlu0 %v3088, 91
        %v3163 = vpop.permute.xlu0 %3162
        %v3164 = vsel %vm359, %v3159, %v3161
        %v3165 = vsel %vm359, %v3161, %v3163
        %3169 = vrot.lane.b32.xlu0 %v3086, 90
        %v3170 = vpop.permute.xlu0 %3169
        %3171 = vrot.lane.b32.xlu0 %v3087, 90
        %v3172 = vpop.permute.xlu0 %3171
        %3173 = vrot.lane.b32.xlu0 %v3088, 90
        %v3174 = vpop.permute.xlu0 %3173
        %v3175 = vsel %vm371, %v3170, %v3172
        %v3176 = vsel %vm371, %v3172, %v3174
        %s3180 = scalar_lea.vmem %s3, 80
        %v3181 = vld [vmem:[%s3180] sm:$0xff]
        %3183 = vset.pattern.permute.xlu0 0
        %3184 = vperm.xlu0 %3183, %v3181
        %v3185 = vpop.permute.xlu0 %3184
        %v3188 = vsel %vm383, %v3085, 0
        %3190 = vmatprep.subr.mxu0 %v3087
        %3191 = vmatpush1.msra.mxu0 %v3086
        %3192 = vmatprep.subr.mxu0 %v3099
        %3193 = vmatpush1.msra.mxu0 %v3098
        %3194 = vmatprep.subr.mxu0 %v3110
        %3195 = vmatpush1.msra.mxu0 %v3109
        %3196 = vmatprep.subr.mxu0 %v3121
        %3197 = vmatpush1.msra.mxu0 %v3120
        %3198 = vmatprep.subr.mxu0 %v3132
        %3199 = vmatpush1.msra.mxu0 %v3131
        %3200 = vmatprep.subr.mxu0 %v3143
        %3201 = vmatpush1.msra.mxu0 %v3142
        %3202 = vmatprep.subr.mxu0 %v3154
        %3203 = vmatpush1.msra.mxu0 %v3153
        %3204 = vmatprep.subr.mxu0 %v3165
        %3205 = vmatpush1.msra.mxu0 %v3164
        %3206 = vmatprep.subr.mxu0 %v3176
        %3207 = vmatpush1.msra.mxu0 %v3175
        %3208 = vmatprep.subr.mxu0 0.0
        %3209 = vmatpush1.msra.mxu0 0.0
        %3210 = vmatprep.subr.mxu0 0.0
        %3211 = vmatpush1.msra.mxu0 0.0
        %3212 = vmatprep.subr.mxu0 0.0
        %3213 = vmatpush1.msra.mxu0 0.0
        %3214 = vmatprep.subr.mxu0 0.0
        %3215 = vmatpush1.msra.mxu0 0.0
        %3216 = vmatprep.subr.mxu0 0.0
        %3217 = vmatpush1.msra.mxu0 0.0
        %3218 = vmatprep.subr.mxu0 0.0
        %3219 = vmatpush1.msra.mxu0 0.0
        %3220 = vmatprep.subr.mxu0 0.0
        %3221 = vmatpush1.msra.mxu0 0.0
        %3222 = vmatprep.subr.mxu0 0.0
        %3223 = vmatpush1.msra.mxu0 0.0
        %3224 = vmatprep.subr.mxu0 0.0
        %3225 = vmatpush1.msra.mxu0 0.0
        %3226 = vmatprep.subr.mxu0 0.0
        %3227 = vmatpush1.msra.mxu0 0.0
        %3228 = vmatprep.subr.mxu0 0.0
        %3229 = vmatpush1.msra.mxu0 0.0
        %3230 = vmatprep.subr.mxu0 0.0
        %3231 = vmatpush1.msra.mxu0 0.0
        %3232 = vmatprep.subr.mxu0 0.0
        %3233 = vmatpush1.msra.mxu0 0.0
        %3234 = vmatprep.subr.mxu0 0.0
        %3235 = vmatpush1.msra.mxu0 0.0
        %3236 = vmatprep.subr.mxu0 0.0
        %3237 = vmatpush1.msra.mxu0 0.0
        %3238 = vmatprep.subr.mxu0 0.0
        %3239 = vmatpush1.msra.mxu0 0.0
        %3240 = vmatprep.subr.mxu0 0.0
        %3241 = vmatpush1.msra.mxu0 0.0
        %3242 = vmatprep.subr.mxu0 0.0
        %3243 = vmatpush1.msra.mxu0 0.0
        %3244 = vmatprep.subr.mxu0 0.0
        %3245 = vmatpush1.msra.mxu0 0.0
        %3246 = vmatprep.subr.mxu0 0.0
        %3247 = vmatpush1.msra.mxu0 0.0
        %3248 = vmatprep.subr.mxu0 0.0
        %3249 = vmatpush1.msra.mxu0 0.0
        %3250 = vmatprep.subr.mxu0 0.0
        %3251 = vmatpush1.msra.mxu0 0.0
        %3252 = vmatprep.subr.mxu0 0.0
        %3253 = vmatpush1.msra.mxu0 0.0
        %3254 = vmatprep.mubr.f32.mxu0 0.0
        %3255 = vmatmul.mubr.f32.gmra.mrb[0].mxu0 %v3188
        %v3256 = vpop.f32.mrb[0].mxu0
        %v3257 = vadd.f32 %v3185, %v3256
        %v3258 = vpop.f32.mrb[0].mxu0
        %v3259 = vadd.f32 %v3185, %v3258
        %3260 = vdwg.mxu0
        %3261 = vmatprep.subr.mxu0 0.0
        %3262 = vmatpush1.msra.mxu0 %v3088
        %3263 = vmatprep.subr.mxu0 0.0
        %3264 = vmatpush1.msra.mxu0 %v3097
        %3265 = vmatprep.subr.mxu0 0.0
        %3266 = vmatpush1.msra.mxu0 %v3108
        %3267 = vmatprep.subr.mxu0 0.0
        %3268 = vmatpush1.msra.mxu0 %v3119
        %3269 = vmatprep.subr.mxu0 0.0
        %3270 = vmatpush1.msra.mxu0 %v3130
        %3271 = vmatprep.subr.mxu0 0.0
        %3272 = vmatpush1.msra.mxu0 %v3141
        %3273 = vmatprep.subr.mxu0 0.0
        %3274 = vmatpush1.msra.mxu0 %v3152
        %3275 = vmatprep.subr.mxu0 0.0
        %3276 = vmatpush1.msra.mxu0 %v3163
        %3277 = vmatprep.subr.mxu0 0.0
        %3278 = vmatpush1.msra.mxu0 %v3174
        %3279 = vmatprep.subr.mxu0 0.0
        %3280 = vmatpush1.msra.mxu0 0.0
        %3281 = vmatprep.subr.mxu0 0.0
        %3282 = vmatpush1.msra.mxu0 0.0
        %3283 = vmatprep.subr.mxu0 0.0
        %3284 = vmatpush1.msra.mxu0 0.0
        %3285 = vmatprep.subr.mxu0 0.0
        %3286 = vmatpush1.msra.mxu0 0.0
        %3287 = vmatprep.subr.mxu0 0.0
        %3288 = vmatpush1.msra.mxu0 0.0
        %3289 = vmatprep.subr.mxu0 0.0
        %3290 = vmatpush1.msra.mxu0 0.0
        %3291 = vmatprep.subr.mxu0 0.0
        %3292 = vmatpush1.msra.mxu0 0.0
        %3293 = vmatprep.subr.mxu0 0.0
        %3294 = vmatpush1.msra.mxu0 0.0
        %3295 = vmatprep.subr.mxu0 0.0
        %3296 = vmatpush1.msra.mxu0 0.0
        %3297 = vmatprep.subr.mxu0 0.0
        %3298 = vmatpush1.msra.mxu0 0.0
        %3299 = vmatprep.subr.mxu0 0.0
        %3300 = vmatpush1.msra.mxu0 0.0
        %3301 = vmatprep.subr.mxu0 0.0
        %3302 = vmatpush1.msra.mxu0 0.0
        %3303 = vmatprep.subr.mxu0 0.0
        %3304 = vmatpush1.msra.mxu0 0.0
        %3305 = vmatprep.subr.mxu0 0.0
        %3306 = vmatpush1.msra.mxu0 0.0
        %3307 = vmatprep.subr.mxu0 0.0
        %3308 = vmatpush1.msra.mxu0 0.0
        %3309 = vmatprep.subr.mxu0 0.0
        %3310 = vmatpush1.msra.mxu0 0.0
        %3311 = vmatprep.subr.mxu0 0.0
        %3312 = vmatpush1.msra.mxu0 0.0
        %3313 = vmatprep.subr.mxu0 0.0
        %3314 = vmatpush1.msra.mxu0 0.0
        %3315 = vmatprep.subr.mxu0 0.0
        %3316 = vmatpush1.msra.mxu0 0.0
        %3317 = vmatprep.subr.mxu0 0.0
        %3318 = vmatpush1.msra.mxu0 0.0
        %3319 = vmatprep.subr.mxu0 0.0
        %3320 = vmatpush1.msra.mxu0 0.0
        %3321 = vmatprep.subr.mxu0 0.0
        %3322 = vmatpush1.msra.mxu0 0.0
        %3323 = vmatprep.subr.mxu0 0.0
        %3324 = vmatpush1.msra.mxu0 0.0
        %3325 = vmatprep.mubr.f32.mxu0 0.0
        %3326 = vmatmul.mubr.f32.gmra.mrb[0].mxu0 %v3188
        %v3327 = vpop.f32.mrb[0].mxu0
        %v3328 = vadd.f32 %v3185, %v3327
        %v3329 = vpop.f32.mrb[0].mxu0
        %3330 = vdwg.mxu0
        %vm3331 = vcmp.gt.f32.partialorder %v3257, 0.0
        %vm3332 = vcmp.gt.f32.partialorder %v3259, 0.0
        %vm3333 = vcmp.gt.f32.partialorder %v3328, 0.0
        %v3334 = vmul.f32 %v3057, %v3257
        %v3335 = vmul.f32 %v3057, %v3259
        %v3336 = vmul.f32 %v3057, %v3328
        %v3337 = vsel %vm3331, %v3257, %v3334
        %v3338 = vsel %vm3332, %v3259, %v3335
        %v3339 = vsel %vm3333, %v3328, %v3336
        %v3340 = vmul.f32 %v3337, %v543
        %v3341 = vmul.f32 %v3338, %v547
        %v3342 = vmul.f32 %v3339, %v551
        %v3343 = vadd.f32 %v3340, %v2786
        %v3344 = vadd.f32 %v3341, %v2787
        %v3345 = vadd.f32 %v3342, %v2788
        %3349 = vrot.lane.b32.xlu0 %v3343, 19
        %v3350 = vpop.permute.xlu0 %3349
        %3351 = vrot.lane.b32.xlu0 %v3344, 19
        %v3352 = vpop.permute.xlu0 %3351
        %3353 = vrot.lane.b32.xlu0 %v3345, 19
        %v3354 = vpop.permute.xlu0 %3353
        %v3355 = vsel %vm567, %v3350, %v3352
        %v3356 = vsel %vm567, %v3352, %v3354
        %3360 = vst.msk [vmem:[#allocation2] sm:$0xff] %vm573, %v3350
        %3361 = vst [vmem:[#allocation2 + $0x8] sm:$0xff] %v3355
        %3362 = vst.msk [vmem:[#allocation2 + $0x10] sm:$0xff] %vm576, %v3356
        %s3363 = sld [smem:[#allocation3 + $0x6]]
        %s3364 = scalar_lea.vmem %s2, 88
        %v3365 = vld [vmem:[%s3364] sm:$0xff]
        %v3366 = vld [vmem:[#allocation2] sm:$0xff]
        %v3367 = vld [vmem:[#allocation2 + $0x8] sm:$0xff]
        %v3368 = vld [vmem:[#allocation2 + $0x10] sm:$0xff]
        %3372 = vrot.lane.b32.xlu0 %v3366, 127
        %v3373 = vpop.permute.xlu0 %3372
        %3374 = vrot.lane.b32.xlu0 %v3367, 127
        %v3375 = vpop.permute.xlu0 %3374
        %3376 = vrot.lane.b32.xlu0 %v3368, 127
        %v3377 = vpop.permute.xlu0 %3376
        %v3378 = vsel %vm287, %v3373, %v3375
        %v3379 = vsel %vm287, %v3375, %v3377
        %3383 = vrot.lane.b32.xlu0 %v3366, 126
        %v3384 = vpop.permute.xlu0 %3383
        %3385 = vrot.lane.b32.xlu0 %v3367, 126
        %v3386 = vpop.permute.xlu0 %3385
        %3387 = vrot.lane.b32.xlu0 %v3368, 126
        %v3388 = vpop.permute.xlu0 %3387
        %v3389 = vsel %vm299, %v3384, %v3386
        %v3390 = vsel %vm299, %v3386, %v3388
        %3394 = vrot.lane.b32.xlu0 %v3366, 110
        %v3395 = vpop.permute.xlu0 %3394
        %3396 = vrot.lane.b32.xlu0 %v3367, 110
        %v3397 = vpop.permute.xlu0 %3396
        %3398 = vrot.lane.b32.xlu0 %v3368, 110
        %v3399 = vpop.permute.xlu0 %3398
        %v3400 = vsel %vm311, %v3395, %v3397
        %v3401 = vsel %vm311, %v3397, %v3399
        %3405 = vrot.lane.b32.xlu0 %v3366, 109
        %v3406 = vpop.permute.xlu0 %3405
        %3407 = vrot.lane.b32.xlu0 %v3367, 109
        %v3408 = vpop.permute.xlu0 %3407
        %3409 = vrot.lane.b32.xlu0 %v3368, 109
        %v3410 = vpop.permute.xlu0 %3409
        %v3411 = vsel %vm323, %v3406, %v3408
        %v3412 = vsel %vm323, %v3408, %v3410
        %3416 = vrot.lane.b32.xlu0 %v3366, 108
        %v3417 = vpop.permute.xlu0 %3416
        %3418 = vrot.lane.b32.xlu0 %v3367, 108
        %v3419 = vpop.permute.xlu0 %3418
        %3420 = vrot.lane.b32.xlu0 %v3368, 108
        %v3421 = vpop.permute.xlu0 %3420
        %v3422 = vsel %vm335, %v3417, %v3419
        %v3423 = vsel %vm335, %v3419, %v3421
        %3427 = vrot.lane.b32.xlu0 %v3366, 92
        %v3428 = vpop.permute.xlu0 %3427
        %3429 = vrot.lane.b32.xlu0 %v3367, 92
        %v3430 = vpop.permute.xlu0 %3429
        %3431 = vrot.lane.b32.xlu0 %v3368, 92
        %v3432 = vpop.permute.xlu0 %3431
        %v3433 = vsel %vm347, %v3428, %v3430
        %v3434 = vsel %vm347, %v3430, %v3432
        %3438 = vrot.lane.b32.xlu0 %v3366, 91
        %v3439 = vpop.permute.xlu0 %3438
        %3440 = vrot.lane.b32.xlu0 %v3367, 91
        %v3441 = vpop.permute.xlu0 %3440
        %3442 = vrot.lane.b32.xlu0 %v3368, 91
        %v3443 = vpop.permute.xlu0 %3442
        %v3444 = vsel %vm359, %v3439, %v3441
        %v3445 = vsel %vm359, %v3441, %v3443
        %3449 = vrot.lane.b32.xlu0 %v3366, 90
        %v3450 = vpop.permute.xlu0 %3449
        %3451 = vrot.lane.b32.xlu0 %v3367, 90
        %v3452 = vpop.permute.xlu0 %3451
        %3453 = vrot.lane.b32.xlu0 %v3368, 90
        %v3454 = vpop.permute.xlu0 %3453
        %v3455 = vsel %vm371, %v3450, %v3452
        %v3456 = vsel %vm371, %v3452, %v3454
        %s3460 = scalar_lea.vmem %s3, 88
        %v3461 = vld [vmem:[%s3460] sm:$0xff]
        %3463 = vset.pattern.permute.xlu0 0
        %3464 = vperm.xlu0 %3463, %v3461
        %v3465 = vpop.permute.xlu0 %3464
        %v3468 = vsel %vm383, %v3365, 0
        %3470 = vmatprep.subr.mxu0 %v3367
        %3471 = vmatpush1.msra.mxu0 %v3366
        %3472 = vmatprep.subr.mxu0 %v3379
        %3473 = vmatpush1.msra.mxu0 %v3378
        %3474 = vmatprep.subr.mxu0 %v3390
        %3475 = vmatpush1.msra.mxu0 %v3389
        %3476 = vmatprep.subr.mxu0 %v3401
        %3477 = vmatpush1.msra.mxu0 %v3400
        %3478 = vmatprep.subr.mxu0 %v3412
        %3479 = vmatpush1.msra.mxu0 %v3411
        %3480 = vmatprep.subr.mxu0 %v3423
        %3481 = vmatpush1.msra.mxu0 %v3422
        %3482 = vmatprep.subr.mxu0 %v3434
        %3483 = vmatpush1.msra.mxu0 %v3433
        %3484 = vmatprep.subr.mxu0 %v3445
        %3485 = vmatpush1.msra.mxu0 %v3444
        %3486 = vmatprep.subr.mxu0 %v3456
        %3487 = vmatpush1.msra.mxu0 %v3455
        %3488 = vmatprep.subr.mxu0 0.0
        %3489 = vmatpush1.msra.mxu0 0.0
        %3490 = vmatprep.subr.mxu0 0.0
        %3491 = vmatpush1.msra.mxu0 0.0
        %3492 = vmatprep.subr.mxu0 0.0
        %3493 = vmatpush1.msra.mxu0 0.0
        %3494 = vmatprep.subr.mxu0 0.0
        %3495 = vmatpush1.msra.mxu0 0.0
        %3496 = vmatprep.subr.mxu0 0.0
        %3497 = vmatpush1.msra.mxu0 0.0
        %3498 = vmatprep.subr.mxu0 0.0
        %3499 = vmatpush1.msra.mxu0 0.0
        %3500 = vmatprep.subr.mxu0 0.0
        %3501 = vmatpush1.msra.mxu0 0.0
        %3502 = vmatprep.subr.mxu0 0.0
        %3503 = vmatpush1.msra.mxu0 0.0
        %3504 = vmatprep.subr.mxu0 0.0
        %3505 = vmatpush1.msra.mxu0 0.0
        %3506 = vmatprep.subr.mxu0 0.0
        %3507 = vmatpush1.msra.mxu0 0.0
        %3508 = vmatprep.subr.mxu0 0.0
        %3509 = vmatpush1.msra.mxu0 0.0
        %3510 = vmatprep.subr.mxu0 0.0
        %3511 = vmatpush1.msra.mxu0 0.0
        %3512 = vmatprep.subr.mxu0 0.0
        %3513 = vmatpush1.msra.mxu0 0.0
        %3514 = vmatprep.subr.mxu0 0.0
        %3515 = vmatpush1.msra.mxu0 0.0
        %3516 = vmatprep.subr.mxu0 0.0
        %3517 = vmatpush1.msra.mxu0 0.0
        %3518 = vmatprep.subr.mxu0 0.0
        %3519 = vmatpush1.msra.mxu0 0.0
        %3520 = vmatprep.subr.mxu0 0.0
        %3521 = vmatpush1.msra.mxu0 0.0
        %3522 = vmatprep.subr.mxu0 0.0
        %3523 = vmatpush1.msra.mxu0 0.0
        %3524 = vmatprep.subr.mxu0 0.0
        %3525 = vmatpush1.msra.mxu0 0.0
        %3526 = vmatprep.subr.mxu0 0.0
        %3527 = vmatpush1.msra.mxu0 0.0
        %3528 = vmatprep.subr.mxu0 0.0
        %3529 = vmatpush1.msra.mxu0 0.0
        %3530 = vmatprep.subr.mxu0 0.0
        %3531 = vmatpush1.msra.mxu0 0.0
        %3532 = vmatprep.subr.mxu0 0.0
        %3533 = vmatpush1.msra.mxu0 0.0
        %3534 = vmatprep.mubr.f32.mxu0 0.0
        %3535 = vmatmul.mubr.f32.gmra.mrb[0].mxu0 %v3468
        %v3536 = vpop.f32.mrb[0].mxu0
        %v3537 = vadd.f32 %v3465, %v3536
        %v3538 = vpop.f32.mrb[0].mxu0
        %v3539 = vadd.f32 %v3465, %v3538
        %3540 = vdwg.mxu0
        %3541 = vmatprep.subr.mxu0 0.0
        %3542 = vmatpush1.msra.mxu0 %v3368
        %3543 = vmatprep.subr.mxu0 0.0
        %3544 = vmatpush1.msra.mxu0 %v3377
        %3545 = vmatprep.subr.mxu0 0.0
        %3546 = vmatpush1.msra.mxu0 %v3388
        %3547 = vmatprep.subr.mxu0 0.0
        %3548 = vmatpush1.msra.mxu0 %v3399
        %3549 = vmatprep.subr.mxu0 0.0
        %3550 = vmatpush1.msra.mxu0 %v3410
        %3551 = vmatprep.subr.mxu0 0.0
        %3552 = vmatpush1.msra.mxu0 %v3421
        %3553 = vmatprep.subr.mxu0 0.0
        %3554 = vmatpush1.msra.mxu0 %v3432
        %3555 = vmatprep.subr.mxu0 0.0
        %3556 = vmatpush1.msra.mxu0 %v3443
        %3557 = vmatprep.subr.mxu0 0.0
        %3558 = vmatpush1.msra.mxu0 %v3454
        %3559 = vmatprep.subr.mxu0 0.0
        %3560 = vmatpush1.msra.mxu0 0.0
        %3561 = vmatprep.subr.mxu0 0.0
        %3562 = vmatpush1.msra.mxu0 0.0
        %3563 = vmatprep.subr.mxu0 0.0
        %3564 = vmatpush1.msra.mxu0 0.0
        %3565 = vmatprep.subr.mxu0 0.0
        %3566 = vmatpush1.msra.mxu0 0.0
        %3567 = vmatprep.subr.mxu0 0.0
        %3568 = vmatpush1.msra.mxu0 0.0
        %3569 = vmatprep.subr.mxu0 0.0
        %3570 = vmatpush1.msra.mxu0 0.0
        %3571 = vmatprep.subr.mxu0 0.0
        %3572 = vmatpush1.msra.mxu0 0.0
        %3573 = vmatprep.subr.mxu0 0.0
        %3574 = vmatpush1.msra.mxu0 0.0
        %3575 = vmatprep.subr.mxu0 0.0
        %3576 = vmatpush1.msra.mxu0 0.0
        %3577 = vmatprep.subr.mxu0 0.0
        %3578 = vmatpush1.msra.mxu0 0.0
        %3579 = vmatprep.subr.mxu0 0.0
        %3580 = vmatpush1.msra.mxu0 0.0
        %3581 = vmatprep.subr.mxu0 0.0
        %3582 = vmatpush1.msra.mxu0 0.0
        %3583 = vmatprep.subr.mxu0 0.0
        %3584 = vmatpush1.msra.mxu0 0.0
        %3585 = vmatprep.subr.mxu0 0.0
        %3586 = vmatpush1.msra.mxu0 0.0
        %3587 = vmatprep.subr.mxu0 0.0
        %3588 = vmatpush1.msra.mxu0 0.0
        %3589 = vmatprep.subr.mxu0 0.0
        %3590 = vmatpush1.msra.mxu0 0.0
        %3591 = vmatprep.subr.mxu0 0.0
        %3592 = vmatpush1.msra.mxu0 0.0
        %3593 = vmatprep.subr.mxu0 0.0
        %3594 = vmatpush1.msra.mxu0 0.0
        %3595 = vmatprep.subr.mxu0 0.0
        %3596 = vmatpush1.msra.mxu0 0.0
        %3597 = vmatprep.subr.mxu0 0.0
        %3598 = vmatpush1.msra.mxu0 0.0
        %3599 = vmatprep.subr.mxu0 0.0
        %3600 = vmatpush1.msra.mxu0 0.0
        %3601 = vmatprep.subr.mxu0 0.0
        %3602 = vmatpush1.msra.mxu0 0.0
        %3603 = vmatprep.subr.mxu0 0.0
        %3604 = vmatpush1.msra.mxu0 0.0
        %3605 = vmatprep.mubr.f32.mxu0 0.0
        %3606 = vmatmul.mubr.f32.gmra.mrb[0].mxu0 %v3468
        %v3607 = vpop.f32.mrb[0].mxu0
        %v3608 = vadd.f32 %v3465, %v3607
        %v3609 = vpop.f32.mrb[0].mxu0
        %3610 = vdwg.mxu0
        %vm3611 = vcmp.gt.f32.partialorder %v3537, 0.0
        %vm3612 = vcmp.gt.f32.partialorder %v3539, 0.0
        %vm3613 = vcmp.gt.f32.partialorder %v3608, 0.0
        %v3614 = vstv %s3363
        %v3615 = vmul.f32 %v3614, %v3537
        %v3616 = vmul.f32 %v3614, %v3539
        %v3617 = vmul.f32 %v3614, %v3608
        %v3618 = vsel %vm3611, %v3537, %v3615
        %v3619 = vsel %vm3612, %v3539, %v3616
        %v3620 = vsel %vm3613, %v3608, %v3617
        %v3621 = vmul.f32 %v3618, %v543
        %v3622 = vmul.f32 %v3619, %v547
        %v3623 = vmul.f32 %v3620, %v551
        %3627 = vrot.lane.b32.xlu0 %v3621, 19
        %v3628 = vpop.permute.xlu0 %3627
        %3629 = vrot.lane.b32.xlu0 %v3622, 19
        %v3630 = vpop.permute.xlu0 %3629
        %3631 = vrot.lane.b32.xlu0 %v3623, 19
        %v3632 = vpop.permute.xlu0 %3631
        %v3633 = vsel %vm567, %v3628, %v3630
        %v3634 = vsel %vm567, %v3630, %v3632
        %3638 = vst.msk [vmem:[#allocation2] sm:$0xff] %vm573, %v3628
        %3639 = vst [vmem:[#allocation2 + $0x8] sm:$0xff] %v3633
        %3640 = vst.msk [vmem:[#allocation2 + $0x10] sm:$0xff] %vm576, %v3634
        %s3641 = scalar_lea.vmem %s2, 96
        %v3642 = vld [vmem:[%s3641] sm:$0xff]
        %v3643 = vld [vmem:[#allocation2] sm:$0xff]
        %v3644 = vld [vmem:[#allocation2 + $0x8] sm:$0xff]
        %v3645 = vld [vmem:[#allocation2 + $0x10] sm:$0xff]
        %3649 = vrot.lane.b32.xlu0 %v3643, 127
        %v3650 = vpop.permute.xlu0 %3649
        %3651 = vrot.lane.b32.xlu0 %v3644, 127
        %v3652 = vpop.permute.xlu0 %3651
        %3653 = vrot.lane.b32.xlu0 %v3645, 127
        %v3654 = vpop.permute.xlu0 %3653
        %v3655 = vsel %vm287, %v3650, %v3652
        %v3656 = vsel %vm287, %v3652, %v3654
        %3660 = vrot.lane.b32.xlu0 %v3643, 126
        %v3661 = vpop.permute.xlu0 %3660
        %3662 = vrot.lane.b32.xlu0 %v3644, 126
        %v3663 = vpop.permute.xlu0 %3662
        %3664 = vrot.lane.b32.xlu0 %v3645, 126
        %v3665 = vpop.permute.xlu0 %3664
        %v3666 = vsel %vm299, %v3661, %v3663
        %v3667 = vsel %vm299, %v3663, %v3665
        %3671 = vrot.lane.b32.xlu0 %v3643, 110
        %v3672 = vpop.permute.xlu0 %3671
        %3673 = vrot.lane.b32.xlu0 %v3644, 110
        %v3674 = vpop.permute.xlu0 %3673
        %3675 = vrot.lane.b32.xlu0 %v3645, 110
        %v3676 = vpop.permute.xlu0 %3675
        %v3677 = vsel %vm311, %v3672, %v3674
        %v3678 = vsel %vm311, %v3674, %v3676
        %3682 = vrot.lane.b32.xlu0 %v3643, 109
        %v3683 = vpop.permute.xlu0 %3682
        %3684 = vrot.lane.b32.xlu0 %v3644, 109
        %v3685 = vpop.permute.xlu0 %3684
        %3686 = vrot.lane.b32.xlu0 %v3645, 109
        %v3687 = vpop.permute.xlu0 %3686
        %v3688 = vsel %vm323, %v3683, %v3685
        %v3689 = vsel %vm323, %v3685, %v3687
        %3693 = vrot.lane.b32.xlu0 %v3643, 108
        %v3694 = vpop.permute.xlu0 %3693
        %3695 = vrot.lane.b32.xlu0 %v3644, 108
        %v3696 = vpop.permute.xlu0 %3695
        %3697 = vrot.lane.b32.xlu0 %v3645, 108
        %v3698 = vpop.permute.xlu0 %3697
        %v3699 = vsel %vm335, %v3694, %v3696
        %v3700 = vsel %vm335, %v3696, %v3698
        %3704 = vrot.lane.b32.xlu0 %v3643, 92
        %v3705 = vpop.permute.xlu0 %3704
        %3706 = vrot.lane.b32.xlu0 %v3644, 92
        %v3707 = vpop.permute.xlu0 %3706
        %3708 = vrot.lane.b32.xlu0 %v3645, 92
        %v3709 = vpop.permute.xlu0 %3708
        %v3710 = vsel %vm347, %v3705, %v3707
        %v3711 = vsel %vm347, %v3707, %v3709
        %3715 = vrot.lane.b32.xlu0 %v3643, 91
        %v3716 = vpop.permute.xlu0 %3715
        %3717 = vrot.lane.b32.xlu0 %v3644, 91
        %v3718 = vpop.permute.xlu0 %3717
        %3719 = vrot.lane.b32.xlu0 %v3645, 91
        %v3720 = vpop.permute.xlu0 %3719
        %v3721 = vsel %vm359, %v3716, %v3718
        %v3722 = vsel %vm359, %v3718, %v3720
        %3726 = vrot.lane.b32.xlu0 %v3643, 90
        %v3727 = vpop.permute.xlu0 %3726
        %3728 = vrot.lane.b32.xlu0 %v3644, 90
        %v3729 = vpop.permute.xlu0 %3728
        %3730 = vrot.lane.b32.xlu0 %v3645, 90
        %v3731 = vpop.permute.xlu0 %3730
        %v3732 = vsel %vm371, %v3727, %v3729
        %v3733 = vsel %vm371, %v3729, %v3731
        %s3737 = scalar_lea.vmem %s3, 96
        %v3738 = vld [vmem:[%s3737] sm:$0xff]
        %3740 = vset.pattern.permute.xlu0 0
        %3741 = vperm.xlu0 %3740, %v3738
        %v3742 = vpop.permute.xlu0 %3741
        %v3745 = vsel %vm383, %v3642, 0
        %3747 = vmatprep.subr.mxu0 %v3644
        %3748 = vmatpush1.msra.mxu0 %v3643
        %3749 = vmatprep.subr.mxu0 %v3656
        %3750 = vmatpush1.msra.mxu0 %v3655
        %3751 = vmatprep.subr.mxu0 %v3667
        %3752 = vmatpush1.msra.mxu0 %v3666
        %3753 = vmatprep.subr.mxu0 %v3678
        %3754 = vmatpush1.msra.mxu0 %v3677
        %3755 = vmatprep.subr.mxu0 %v3689
        %3756 = vmatpush1.msra.mxu0 %v3688
        %3757 = vmatprep.subr.mxu0 %v3700
        %3758 = vmatpush1.msra.mxu0 %v3699
        %3759 = vmatprep.subr.mxu0 %v3711
        %3760 = vmatpush1.msra.mxu0 %v3710
        %3761 = vmatprep.subr.mxu0 %v3722
        %3762 = vmatpush1.msra.mxu0 %v3721
        %3763 = vmatprep.subr.mxu0 %v3733
        %3764 = vmatpush1.msra.mxu0 %v3732
        %3765 = vmatprep.subr.mxu0 0.0
        %3766 = vmatpush1.msra.mxu0 0.0
        %3767 = vmatprep.subr.mxu0 0.0
        %3768 = vmatpush1.msra.mxu0 0.0
        %3769 = vmatprep.subr.mxu0 0.0
        %3770 = vmatpush1.msra.mxu0 0.0
        %3771 = vmatprep.subr.mxu0 0.0
        %3772 = vmatpush1.msra.mxu0 0.0
        %3773 = vmatprep.subr.mxu0 0.0
        %3774 = vmatpush1.msra.mxu0 0.0
        %3775 = vmatprep.subr.mxu0 0.0
        %3776 = vmatpush1.msra.mxu0 0.0
        %3777 = vmatprep.subr.mxu0 0.0
        %3778 = vmatpush1.msra.mxu0 0.0
        %3779 = vmatprep.subr.mxu0 0.0
        %3780 = vmatpush1.msra.mxu0 0.0
        %3781 = vmatprep.subr.mxu0 0.0
        %3782 = vmatpush1.msra.mxu0 0.0
        %3783 = vmatprep.subr.mxu0 0.0
        %3784 = vmatpush1.msra.mxu0 0.0
        %3785 = vmatprep.subr.mxu0 0.0
        %3786 = vmatpush1.msra.mxu0 0.0
        %3787 = vmatprep.subr.mxu0 0.0
        %3788 = vmatpush1.msra.mxu0 0.0
        %3789 = vmatprep.subr.mxu0 0.0
        %3790 = vmatpush1.msra.mxu0 0.0
        %3791 = vmatprep.subr.mxu0 0.0
        %3792 = vmatpush1.msra.mxu0 0.0
        %3793 = vmatprep.subr.mxu0 0.0
        %3794 = vmatpush1.msra.mxu0 0.0
        %3795 = vmatprep.subr.mxu0 0.0
        %3796 = vmatpush1.msra.mxu0 0.0
        %3797 = vmatprep.subr.mxu0 0.0
        %3798 = vmatpush1.msra.mxu0 0.0
        %3799 = vmatprep.subr.mxu0 0.0
        %3800 = vmatpush1.msra.mxu0 0.0
        %3801 = vmatprep.subr.mxu0 0.0
        %3802 = vmatpush1.msra.mxu0 0.0
        %3803 = vmatprep.subr.mxu0 0.0
        %3804 = vmatpush1.msra.mxu0 0.0
        %3805 = vmatprep.subr.mxu0 0.0
        %3806 = vmatpush1.msra.mxu0 0.0
        %3807 = vmatprep.subr.mxu0 0.0
        %3808 = vmatpush1.msra.mxu0 0.0
        %3809 = vmatprep.subr.mxu0 0.0
        %3810 = vmatpush1.msra.mxu0 0.0
        %3811 = vmatprep.mubr.f32.mxu0 0.0
        %3812 = vmatmul.mubr.f32.gmra.mrb[0].mxu0 %v3745
        %v3813 = vpop.f32.mrb[0].mxu0
        %v3814 = vadd.f32 %v3742, %v3813
        %v3815 = vpop.f32.mrb[0].mxu0
        %v3816 = vadd.f32 %v3742, %v3815
        %3817 = vdwg.mxu0
        %3818 = vmatprep.subr.mxu0 0.0
        %3819 = vmatpush1.msra.mxu0 %v3645
        %3820 = vmatprep.subr.mxu0 0.0
        %3821 = vmatpush1.msra.mxu0 %v3654
        %3822 = vmatprep.subr.mxu0 0.0
        %3823 = vmatpush1.msra.mxu0 %v3665
        %3824 = vmatprep.subr.mxu0 0.0
        %3825 = vmatpush1.msra.mxu0 %v3676
        %3826 = vmatprep.subr.mxu0 0.0
        %3827 = vmatpush1.msra.mxu0 %v3687
        %3828 = vmatprep.subr.mxu0 0.0
        %3829 = vmatpush1.msra.mxu0 %v3698
        %3830 = vmatprep.subr.mxu0 0.0
        %3831 = vmatpush1.msra.mxu0 %v3709
        %3832 = vmatprep.subr.mxu0 0.0
        %3833 = vmatpush1.msra.mxu0 %v3720
        %3834 = vmatprep.subr.mxu0 0.0
        %3835 = vmatpush1.msra.mxu0 %v3731
        %3836 = vmatprep.subr.mxu0 0.0
        %3837 = vmatpush1.msra.mxu0 0.0
        %3838 = vmatprep.subr.mxu0 0.0
        %3839 = vmatpush1.msra.mxu0 0.0
        %3840 = vmatprep.subr.mxu0 0.0
        %3841 = vmatpush1.msra.mxu0 0.0
        %3842 = vmatprep.subr.mxu0 0.0
        %3843 = vmatpush1.msra.mxu0 0.0
        %3844 = vmatprep.subr.mxu0 0.0
        %3845 = vmatpush1.msra.mxu0 0.0
        %3846 = vmatprep.subr.mxu0 0.0
        %3847 = vmatpush1.msra.mxu0 0.0
        %3848 = vmatprep.subr.mxu0 0.0
        %3849 = vmatpush1.msra.mxu0 0.0
        %3850 = vmatprep.subr.mxu0 0.0
        %3851 = vmatpush1.msra.mxu0 0.0
        %3852 = vmatprep.subr.mxu0 0.0
        %3853 = vmatpush1.msra.mxu0 0.0
        %3854 = vmatprep.subr.mxu0 0.0
        %3855 = vmatpush1.msra.mxu0 0.0
        %3856 = vmatprep.subr.mxu0 0.0
        %3857 = vmatpush1.msra.mxu0 0.0
        %3858 = vmatprep.subr.mxu0 0.0
        %3859 = vmatpush1.msra.mxu0 0.0
        %3860 = vmatprep.subr.mxu0 0.0
        %3861 = vmatpush1.msra.mxu0 0.0
        %3862 = vmatprep.subr.mxu0 0.0
        %3863 = vmatpush1.msra.mxu0 0.0
        %3864 = vmatprep.subr.mxu0 0.0
        %3865 = vmatpush1.msra.mxu0 0.0
        %3866 = vmatprep.subr.mxu0 0.0
        %3867 = vmatpush1.msra.mxu0 0.0
        %3868 = vmatprep.subr.mxu0 0.0
        %3869 = vmatpush1.msra.mxu0 0.0
        %3870 = vmatprep.subr.mxu0 0.0
        %3871 = vmatpush1.msra.mxu0 0.0
        %3872 = vmatprep.subr.mxu0 0.0
        %3873 = vmatpush1.msra.mxu0 0.0
        %3874 = vmatprep.subr.mxu0 0.0
        %3875 = vmatpush1.msra.mxu0 0.0
        %3876 = vmatprep.subr.mxu0 0.0
        %3877 = vmatpush1.msra.mxu0 0.0
        %3878 = vmatprep.subr.mxu0 0.0
        %3879 = vmatpush1.msra.mxu0 0.0
        %3880 = vmatprep.subr.mxu0 0.0
        %3881 = vmatpush1.msra.mxu0 0.0
        %3882 = vmatprep.mubr.f32.mxu0 0.0
        %3883 = vmatmul.mubr.f32.gmra.mrb[0].mxu0 %v3745
        %v3884 = vpop.f32.mrb[0].mxu0
        %v3885 = vadd.f32 %v3742, %v3884
        %v3886 = vpop.f32.mrb[0].mxu0
        %3887 = vdwg.mxu0
        %vm3888 = vcmp.gt.f32.partialorder %v3814, 0.0
        %vm3889 = vcmp.gt.f32.partialorder %v3816, 0.0
        %vm3890 = vcmp.gt.f32.partialorder %v3885, 0.0
        %v3891 = vmul.f32 %v3614, %v3814
        %v3892 = vmul.f32 %v3614, %v3816
        %v3893 = vmul.f32 %v3614, %v3885
        %v3894 = vsel %vm3888, %v3814, %v3891
        %v3895 = vsel %vm3889, %v3816, %v3892
        %v3896 = vsel %vm3890, %v3885, %v3893
        %v3897 = vmul.f32 %v3894, %v543
        %v3898 = vmul.f32 %v3895, %v547
        %v3899 = vmul.f32 %v3896, %v551
        %v3900 = vadd.f32 %v3897, %v3343
        %v3901 = vadd.f32 %v3898, %v3344
        %v3902 = vadd.f32 %v3899, %v3345
        %3906 = vrot.lane.b32.xlu0 %v3900, 19
        %v3907 = vpop.permute.xlu0 %3906
        %3908 = vrot.lane.b32.xlu0 %v3901, 19
        %v3909 = vpop.permute.xlu0 %3908
        %3910 = vrot.lane.b32.xlu0 %v3902, 19
        %v3911 = vpop.permute.xlu0 %3910
        %v3912 = vsel %vm567, %v3907, %v3909
        %v3913 = vsel %vm567, %v3909, %v3911
        %3917 = vst.msk [vmem:[#allocation2] sm:$0xff] %vm573, %v3907
        %3918 = vst [vmem:[#allocation2 + $0x8] sm:$0xff] %v3912
        %3919 = vst.msk [vmem:[#allocation2 + $0x10] sm:$0xff] %vm576, %v3913
        %v3920 = vld [vmem:[%s4] sm:$0xf]
        %v3921 = vld [vmem:[#allocation2] sm:$0xff]
        %v3922 = vld [vmem:[#allocation2 + $0x8] sm:$0xff]
        %v3923 = vld [vmem:[#allocation2 + $0x10] sm:$0xff]
        %3927 = vrot.lane.b32.xlu0 %v3921, 127
        %v3928 = vpop.permute.xlu0 %3927
        %3929 = vrot.lane.b32.xlu0 %v3922, 127
        %v3930 = vpop.permute.xlu0 %3929
        %3931 = vrot.lane.b32.xlu0 %v3923, 127
        %v3932 = vpop.permute.xlu0 %3931
        %v3933 = vsel %vm287, %v3928, %v3930
        %v3934 = vsel %vm287, %v3930, %v3932
        %3938 = vrot.lane.b32.xlu0 %v3921, 126
        %v3939 = vpop.permute.xlu0 %3938
        %3940 = vrot.lane.b32.xlu0 %v3922, 126
        %v3941 = vpop.permute.xlu0 %3940
        %3942 = vrot.lane.b32.xlu0 %v3923, 126
        %v3943 = vpop.permute.xlu0 %3942
        %v3944 = vsel %vm299, %v3939, %v3941
        %v3945 = vsel %vm299, %v3941, %v3943
        %3949 = vrot.lane.b32.xlu0 %v3921, 110
        %v3950 = vpop.permute.xlu0 %3949
        %3951 = vrot.lane.b32.xlu0 %v3922, 110
        %v3952 = vpop.permute.xlu0 %3951
        %3953 = vrot.lane.b32.xlu0 %v3923, 110
        %v3954 = vpop.permute.xlu0 %3953
        %v3955 = vsel %vm311, %v3950, %v3952
        %v3956 = vsel %vm311, %v3952, %v3954
        %3960 = vrot.lane.b32.xlu0 %v3921, 109
        %v3961 = vpop.permute.xlu0 %3960
        %3962 = vrot.lane.b32.xlu0 %v3922, 109
        %v3963 = vpop.permute.xlu0 %3962
        %3964 = vrot.lane.b32.xlu0 %v3923, 109
        %v3965 = vpop.permute.xlu0 %3964
        %v3966 = vsel %vm323, %v3961, %v3963
        %v3967 = vsel %vm323, %v3963, %v3965
        %3971 = vrot.lane.b32.xlu0 %v3921, 108
        %v3972 = vpop.permute.xlu0 %3971
        %3973 = vrot.lane.b32.xlu0 %v3922, 108
        %v3974 = vpop.permute.xlu0 %3973
        %3975 = vrot.lane.b32.xlu0 %v3923, 108
        %v3976 = vpop.permute.xlu0 %3975
        %v3977 = vsel %vm335, %v3972, %v3974
        %v3978 = vsel %vm335, %v3974, %v3976
        %3982 = vrot.lane.b32.xlu0 %v3921, 92
        %v3983 = vpop.permute.xlu0 %3982
        %3984 = vrot.lane.b32.xlu0 %v3922, 92
        %v3985 = vpop.permute.xlu0 %3984
        %3986 = vrot.lane.b32.xlu0 %v3923, 92
        %v3987 = vpop.permute.xlu0 %3986
        %v3988 = vsel %vm347, %v3983, %v3985
        %v3989 = vsel %vm347, %v3985, %v3987
        %3993 = vrot.lane.b32.xlu0 %v3921, 91
        %v3994 = vpop.permute.xlu0 %3993
        %3995 = vrot.lane.b32.xlu0 %v3922, 91
        %v3996 = vpop.permute.xlu0 %3995
        %3997 = vrot.lane.b32.xlu0 %v3923, 91
        %v3998 = vpop.permute.xlu0 %3997
        %v3999 = vsel %vm359, %v3994, %v3996
        %v4000 = vsel %vm359, %v3996, %v3998
        %4004 = vrot.lane.b32.xlu0 %v3921, 90
        %v4005 = vpop.permute.xlu0 %4004
        %4006 = vrot.lane.b32.xlu0 %v3922, 90
        %v4007 = vpop.permute.xlu0 %4006
        %4008 = vrot.lane.b32.xlu0 %v3923, 90
        %v4009 = vpop.permute.xlu0 %4008
        %v4010 = vsel %vm371, %v4005, %v4007
        %v4011 = vsel %vm371, %v4007, %v4009
        %v4016 = vsel %vm383, %v3920, 0
        %4018 = vmatprep.subr.mxu0 %v3922
        %4019 = vmatpush1.msra.mxu0 %v3921
        %4020 = vmatprep.subr.mxu0 %v3934
        %4021 = vmatpush1.msra.mxu0 %v3933
        %4022 = vmatprep.subr.mxu0 %v3945
        %4023 = vmatpush1.msra.mxu0 %v3944
        %4024 = vmatprep.subr.mxu0 %v3956
        %4025 = vmatpush1.msra.mxu0 %v3955
        %4026 = vmatprep.subr.mxu0 %v3967
        %4027 = vmatpush1.msra.mxu0 %v3966
        %4028 = vmatprep.subr.mxu0 %v3978
        %4029 = vmatpush1.msra.mxu0 %v3977
        %4030 = vmatprep.subr.mxu0 %v3989
        %4031 = vmatpush1.msra.mxu0 %v3988
        %4032 = vmatprep.subr.mxu0 %v4000
        %4033 = vmatpush1.msra.mxu0 %v3999
        %4034 = vmatprep.subr.mxu0 %v4011
        %4035 = vmatpush1.msra.mxu0 %v4010
        %4036 = vmatprep.subr.mxu0 0.0
        %4037 = vmatpush1.msra.mxu0 0.0
        %4038 = vmatprep.subr.mxu0 0.0
        %4039 = vmatpush1.msra.mxu0 0.0
        %4040 = vmatprep.subr.mxu0 0.0
        %4041 = vmatpush1.msra.mxu0 0.0
        %4042 = vmatprep.subr.mxu0 0.0
        %4043 = vmatpush1.msra.mxu0 0.0
        %4044 = vmatprep.subr.mxu0 0.0
        %4045 = vmatpush1.msra.mxu0 0.0
        %4046 = vmatprep.subr.mxu0 0.0
        %4047 = vmatpush1.msra.mxu0 0.0
        %4048 = vmatprep.subr.mxu0 0.0
        %4049 = vmatpush1.msra.mxu0 0.0
        %4050 = vmatprep.subr.mxu0 0.0
        %4051 = vmatpush1.msra.mxu0 0.0
        %4052 = vmatprep.subr.mxu0 0.0
        %4053 = vmatpush1.msra.mxu0 0.0
        %4054 = vmatprep.subr.mxu0 0.0
        %4055 = vmatpush1.msra.mxu0 0.0
        %4056 = vmatprep.subr.mxu0 0.0
        %4057 = vmatpush1.msra.mxu0 0.0
        %4058 = vmatprep.subr.mxu0 0.0
        %4059 = vmatpush1.msra.mxu0 0.0
        %4060 = vmatprep.subr.mxu0 0.0
        %4061 = vmatpush1.msra.mxu0 0.0
        %4062 = vmatprep.subr.mxu0 0.0
        %4063 = vmatpush1.msra.mxu0 0.0
        %4064 = vmatprep.subr.mxu0 0.0
        %4065 = vmatpush1.msra.mxu0 0.0
        %4066 = vmatprep.subr.mxu0 0.0
        %4067 = vmatpush1.msra.mxu0 0.0
        %4068 = vmatprep.subr.mxu0 0.0
        %4069 = vmatpush1.msra.mxu0 0.0
        %4070 = vmatprep.subr.mxu0 0.0
        %4071 = vmatpush1.msra.mxu0 0.0
        %4072 = vmatprep.subr.mxu0 0.0
        %4073 = vmatpush1.msra.mxu0 0.0
        %4074 = vmatprep.subr.mxu0 0.0
        %4075 = vmatpush1.msra.mxu0 0.0
        %4076 = vmatprep.subr.mxu0 0.0
        %4077 = vmatpush1.msra.mxu0 0.0
        %4078 = vmatprep.subr.mxu0 0.0
        %4079 = vmatpush1.msra.mxu0 0.0
        %4080 = vmatprep.subr.mxu0 0.0
        %4081 = vmatpush1.msra.mxu0 0.0
        %4082 = vmatprep.mubr.f32.mxu0 0.0
        %4083 = vmatmul.mubr.f32.gmra.mrb[0].mxu0 %v4016
        %v4084 = vpop.f32.mrb[0].mxu0
        %v4085 = vadd.f32 0.0, %v4084
        %v4086 = vpop.f32.mrb[0].mxu0
        %v4087 = vadd.f32 0.0, %v4086
        %4088 = vdwg.mxu0
        %4089 = vmatprep.subr.mxu0 0.0
        %4090 = vmatpush1.msra.mxu0 %v3923
        %4091 = vmatprep.subr.mxu0 0.0
        %4092 = vmatpush1.msra.mxu0 %v3932
        %4093 = vmatprep.subr.mxu0 0.0
        %4094 = vmatpush1.msra.mxu0 %v3943
        %4095 = vmatprep.subr.mxu0 0.0
        %4096 = vmatpush1.msra.mxu0 %v3954
        %4097 = vmatprep.subr.mxu0 0.0
        %4098 = vmatpush1.msra.mxu0 %v3965
        %4099 = vmatprep.subr.mxu0 0.0
        %4100 = vmatpush1.msra.mxu0 %v3976
        %4101 = vmatprep.subr.mxu0 0.0
        %4102 = vmatpush1.msra.mxu0 %v3987
        %4103 = vmatprep.subr.mxu0 0.0
        %4104 = vmatpush1.msra.mxu0 %v3998
        %4105 = vmatprep.subr.mxu0 0.0
        %4106 = vmatpush1.msra.mxu0 %v4009
        %4107 = vmatprep.subr.mxu0 0.0
        %4108 = vmatpush1.msra.mxu0 0.0
        %4109 = vmatprep.subr.mxu0 0.0
        %4110 = vmatpush1.msra.mxu0 0.0
        %4111 = vmatprep.subr.mxu0 0.0
        %4112 = vmatpush1.msra.mxu0 0.0
        %4113 = vmatprep.subr.mxu0 0.0
        %4114 = vmatpush1.msra.mxu0 0.0
        %4115 = vmatprep.subr.mxu0 0.0
        %4116 = vmatpush1.msra.mxu0 0.0
        %4117 = vmatprep.subr.mxu0 0.0
        %4118 = vmatpush1.msra.mxu0 0.0
        %4119 = vmatprep.subr.mxu0 0.0
        %4120 = vmatpush1.msra.mxu0 0.0
        %4121 = vmatprep.subr.mxu0 0.0
        %4122 = vmatpush1.msra.mxu0 0.0
        %4123 = vmatprep.subr.mxu0 0.0
        %4124 = vmatpush1.msra.mxu0 0.0
        %4125 = vmatprep.subr.mxu0 0.0
        %4126 = vmatpush1.msra.mxu0 0.0
        %4127 = vmatprep.subr.mxu0 0.0
        %4128 = vmatpush1.msra.mxu0 0.0
        %4129 = vmatprep.subr.mxu0 0.0
        %4130 = vmatpush1.msra.mxu0 0.0
        %4131 = vmatprep.subr.mxu0 0.0
        %4132 = vmatpush1.msra.mxu0 0.0
        %4133 = vmatprep.subr.mxu0 0.0
        %4134 = vmatpush1.msra.mxu0 0.0
        %4135 = vmatprep.subr.mxu0 0.0
        %4136 = vmatpush1.msra.mxu0 0.0
        %4137 = vmatprep.subr.mxu0 0.0
        %4138 = vmatpush1.msra.mxu0 0.0
        %4139 = vmatprep.subr.mxu0 0.0
        %4140 = vmatpush1.msra.mxu0 0.0
        %4141 = vmatprep.subr.mxu0 0.0
        %4142 = vmatpush1.msra.mxu0 0.0
        %4143 = vmatprep.subr.mxu0 0.0
        %4144 = vmatpush1.msra.mxu0 0.0
        %4145 = vmatprep.subr.mxu0 0.0
        %4146 = vmatpush1.msra.mxu0 0.0
        %4147 = vmatprep.subr.mxu0 0.0
        %4148 = vmatpush1.msra.mxu0 0.0
        %4149 = vmatprep.subr.mxu0 0.0
        %4150 = vmatpush1.msra.mxu0 0.0
        %4151 = vmatprep.subr.mxu0 0.0
        %4152 = vmatpush1.msra.mxu0 0.0
        %4153 = vmatprep.mubr.f32.mxu0 0.0
        %4154 = vmatmul.mubr.f32.gmra.mrb[0].mxu0 %v4016
        %v4155 = vpop.f32.mrb[0].mxu0
        %v4156 = vadd.f32 0.0, %v4155
        %v4157 = vpop.f32.mrb[0].mxu0
        %4158 = vdwg.mxu0
        %s4159 = sld [smem:[#allocation3 + $0x7]]
        %vm4160 = vcmp.gt.f32.partialorder %v4085, 0.0
        %vm4161 = vcmp.gt.f32.partialorder %v4087, 0.0
        %vm4162 = vcmp.gt.f32.partialorder %v4156, 0.0
        %v4163 = vstv %s4159
        %v4164 = vmul.f32 %v4163, %v4085
        %v4165 = vmul.f32 %v4163, %v4087
        %v4166 = vmul.f32 %v4163, %v4156
        %v4167 = vsel %vm4160, %v4085, %v4164
        %v4168 = vsel %vm4161, %v4087, %v4165
        %v4169 = vsel %vm4162, %v4156, %v4166
        %v4170 = vxor.u32 %v4167, 2147483648
        %v4171 = vxor.u32 %v4168, 2147483648
        %v4172 = vxor.u32 %v4169, 2147483648
        %v4173 = vmul.f32 %v4170, 1.442695
        %v4174 = vpow.pop %v4173
        %v4175 = vmul.f32 %v4171, 1.442695
        %v4176 = vpow.pop %v4175
        %v4177 = vmul.f32 %v4172, 1.442695
        %v4178 = vpow.pop %v4177
        %v4179 = vadd.f32 %v4174, 1.0
        %v4180 = vadd.f32 %v4176, 1.0
        %v4181 = vadd.f32 %v4178, 1.0
        %v4182 = vrcp.pop %v4179
        %v4183 = vmul.f32 1.0, %v4182
        %v4184 = vrcp.pop %v4180
        %v4185 = vmul.f32 1.0, %v4184
        %v4186 = vrcp.pop %v4181
        %v4187 = vmul.f32 1.0, %v4186
        %v4190 = vcombine.low %v4183, %v4185
        %4192 = vst [vmem:[%s265] sm:$0xff] %v4190
        %vm4193 = vcmask 551936
        %4194 = vst.msk [vmem:[%s265 + $0x8] sm:$0xf] %vm4193, %v4187
        %p4195 = scmp.lt.s32.totalorder %s18, 1
        %s4196 = scalar_select %p4195, %s18, 1
        %s4197 = smul.addr %s4196, 3
        %s4198 = smul.addr %s4197, 4
        %s4199 = scalar_lea.vmem %s6, %s4198
        // Predicated region
        $region49: #{att_spatial_forward.1} parent=43 // pred_check
          %p4200 = pneg %p167
        $region50: #{att_spatial_forward.1} parent=43 // pred_check_branch
          %4202 = sbr.rel (%p4200) target = $region52
        $region51: #{att_spatial_forward.1} parent=43 // pred_region
          _
        $region52: #{att_spatial_forward.1} parent=43 // pred_fallthru
          _
      $region44: #{att_spatial_forward.1} parent=5 // pred_fallthru
        _
      %p4203 = scmp.le.s32.totalorder 2, %s13
      // Predicated region
      $region53: #{att_spatial_forward.1} parent=5 // pred_check
        %p4204 = pneg %p4203
      $region54: #{att_spatial_forward.1} parent=5 // pred_check_branch
        %4206 = sbr.rel (%p4204) target = $region56
      $region55: #{att_spatial_forward.1} parent=5 // pred_region
        %s4207 = ssub.s32 %s13, 2
        // Predicated region
        $region57: #{att_spatial_forward.1} parent=55 // pred_check
          %p4208 = pneg %p173
        $region58: #{att_spatial_forward.1} parent=55 // pred_check_branch
          %4210 = sbr.rel (%p4208) target = $region60
        $region59: #{att_spatial_forward.1} parent=55 // pred_region
          %p4211 = scmp.lt.s32.totalorder %s19, 1
          %s4212 = scalar_select %p4211, %s19, 1
          %s4213 = smul.addr %s4212, 3
          %s4214 = smul.addr %s4213, 4
          %s4215 = scalar_lea.vmem %s6, %s4214
        $region60: #{att_spatial_forward.1} parent=55 // pred_fallthru
          _
      $region56: #{att_spatial_forward.1} parent=5 // pred_fallthru
        _
    $region6: #{att_spatial_forward.1} parent=1 // loop_footer
      %s17 = sadd.s32 1, %s13
    $region7: #{att_spatial_forward.1} parent=1 // loop_footer_branch
      %12 = sbr.rel target = $region3
    $region8: #{att_spatial_forward.1} parent=1 // loop_exit
      _
    %4216 = vsyncpa [#allocation4], 1
    %s4217 = scalar_lea.sflag [#allocation4], 1
    %4218 = vsyncpa %s4217, 1

</llo_original>
